<compile_context>
chip_gen: v7x
topology: tpu7x:2x2x1
jax: 0.10.0
libtpu: 0.0.40
codegen_flags: <defaults>
</compile_context>

<pallas_src>
import jax
import jax.numpy as jnp
from jax.experimental import pallas as pl
from jax.experimental.pallas import tpu as pltpu

# ---- small, TPU-friendly shapes consistent with the module ------------------
NX, NH, NZ, NCLASSES = 256, 256, 128, 16        # (module defaults: 784/3024/200/10)
B = 256                                         # demo batch: 2 grid tiles of 128

LRELU_SLOPE = 0.01        # nn.LeakyReLU() default negative slope
BN_EPS = 1e-5             # nn.BatchNorm1d default eps
EPS_QY = 1e-6
LOG_2PI = 1.8378770664093453

LAYER_SIZES = (
    ("Qz", [NX, NH, NH, NZ]),
    ("Px", [NZ, NH, NH, NX]),
    ("Qy", [NX, NH, NH, NCLASSES]),
    ("Ez", [NCLASSES, NH, NZ]),
)


# ------------------------------- kernel --------------------------------------
def ae_type02_kernel(
    x_ref, ivar_ref,
    w0_ref, b0_ref,                                 # fused Qz[0] | Qy[0]
    wqz1_ref, bqz1_ref, wqz2_ref, bqz2_ref,
    wpx0_ref, bpx0_ref, wpx1_ref, bpx1_ref, wpx2_ref, bpx2_ref,
    wqy1_ref, bqy1_ref, wqy2_ref, bqy2_ref,
    wez0_ref, bez0_ref, wez1_ref, bez1_ref,
    z_ref, rec_ref, qy_ref, cz_ref, ps_ref, pqy_ref,
):
    def layer(h, w_ref, b_ref):
        # Linear -> Dropout(identity at eval) -> BatchNorm1d(folded) -> LeakyReLU
        acc = jnp.dot(h.astype(jnp.bfloat16), w_ref[...],
                      preferred_element_type=jnp.float32) + b_ref[...]
        return jnp.where(acc > 0, acc, LRELU_SLOPE * acc)

    x = x_ref[...]                                             # (tb, nx) f32

    # fused first layer of Qz and Qy (both consume x)
    h0 = layer(x, w0_ref, b0_ref)                              # (tb, 2*nh)
    h_qz = h0[:, :NH]
    h_qy = h0[:, NH:]

    # Qz tail -> z
    z = layer(layer(h_qz, wqz1_ref, bqz1_ref), wqz2_ref, bqz2_ref)   # (tb, nz)

    # Px -> rec
    h = layer(z, wpx0_ref, bpx0_ref)
    h = layer(h, wpx1_ref, bpx1_ref)
    rec = layer(h, wpx2_ref, bpx2_ref)                         # (tb, nx)

    # Qy tail -> q_y (softmax + eps smoothing, f32)
    qy_logits = layer(layer(h_qy, wqy1_ref, bqy1_ref), wqy2_ref, bqy2_ref)
    m = jnp.max(qy_logits, axis=-1, keepdims=True)
    e = jnp.exp(qy_logits - m)
    q_y = e / jnp.sum(e, axis=-1, keepdims=True)
    q_y = EPS_QY / NCLASSES + (1.0 - EPS_QY) * q_y             # (tb, nclasses)

    # Ez -> cz
    cz = layer(layer(q_y, wez0_ref, bez0_ref), wez1_ref, bez1_ref)   # (tb, nz)

    z_ref[...] = z
    rec_ref[...] = rec
    qy_ref[...] = q_y
    cz_ref[...] = cz

    # --- per-tile partial loss sums (divided by B / finalized in wrapper) ----
    diff = x - rec
    rec_sum = jnp.sum(jnp.sum(0.5 * diff * diff * ivar_ref[...],
                              axis=-1, keepdims=True), axis=0, keepdims=True)
    cat_sum = jnp.sum(jnp.max(q_y, axis=-1, keepdims=True),
                      axis=0, keepdims=True)
    zd = cz - z
    clu_sum = jnp.sum(jnp.sum(zd * zd, axis=-1, keepdims=True),
                      axis=0, keepdims=True)

    sub = jax.lax.broadcasted_iota(jnp.int32, (8, 128), 0)
    lane = jax.lax.broadcasted_iota(jnp.int32, (8, 128), 1)
    row0 = sub == 0
    ps_ref[...] = (jnp.where(row0 & (lane == 0), rec_sum, 0.0)
                   + jnp.where(row0 & (lane == 1), cat_sum, 0.0)
                   + jnp.where(row0 & (lane == 2), clu_sum, 0.0))

    sub_q = jax.lax.broadcasted_iota(jnp.int32, (8, NCLASSES), 0)
    qy_colsum = jnp.sum(q_y, axis=0, keepdims=True)            # (1, nclasses)
    pqy_ref[...] = jnp.where(sub_q == 0, qy_colsum, 0.0)       # (8, nclasses)


# ------------------------------- params --------------------------------------
def _folded_linear(key, fan_in, fan_out):
    key, kw, kb = jax.random.split(key, 3)
    w = jax.random.normal(kw, (fan_in, fan_out), jnp.float32) * 0.05
    b = jax.random.normal(kb, (fan_out,), jnp.float32) * 0.01
    # fold eval-mode BatchNorm1d (gamma=1, beta=0, running mean=0, var=1)
    scale = 1.0 / jnp.sqrt(jnp.float32(1.0 + BN_EPS))
    w_f = (w * scale).astype(jnp.bfloat16)                     # bf16 MXU weights
    b_f = (b * scale).reshape(1, fan_out)                      # f32 bias
    return key, w_f, b_f


def init_params(key):
    nets = {}
    for name, sizes in LAYER_SIZES:
        layers = []
        for i in range(len(sizes) - 1):
            key, w, b = _folded_linear(key, sizes[i], sizes[i + 1])
            layers.append((w, b))
        nets[name] = layers

    # fuse the first Linear of Qz and Qy (both (nx, nh), both consume x)
    w0 = jnp.concatenate([nets["Qz"][0][0], nets["Qy"][0][0]], axis=1)  # (nx, 2nh)
    b0 = jnp.concatenate([nets["Qz"][0][1], nets["Qy"][0][1]], axis=1)  # (1, 2nh)

    params = [w0, b0]
    for w, bb in nets["Qz"][1:]:
        params += [w, bb]
    for w, bb in nets["Px"]:
        params += [w, bb]
    for w, bb in nets["Qy"][1:]:
        params += [w, bb]
    for w, bb in nets["Ez"]:
        params += [w, bb]

    logsigma_x = jnp.zeros((1, NX), jnp.float32)   # torch.zeros(nx) Parameter
    return tuple(params), logsigma_x


# ------------------------------- wrapper --------------------------------------
def _softclip(t, lo, hi):
    # ut.softclip(tensor, min, max): two-sided soft clipping
    return lo + jax.nn.softplus(t - lo) - jax.nn.softplus(t - hi)


@jax.jit
def ae_type02_forward(x_img, params_flat, logsigma_x):
    x = x_img.reshape(x_img.shape[0], -1)          # nn.Flatten()
    b = x.shape[0]
    tile_b = 128 if b % 128 == 0 else b
    nt = b // tile_b

    # parameter-only math hoisted out of the kernel
    logsig = _softclip(logsigma_x, -7.0, 7.0)      # (1, nx)
    inv_var = jnp.exp(-2.0 * logsig)               # (1, nx)
    rec_const = jnp.sum(logsig) + 0.5 * NX * LOG_2PI   # per-row additive constant

    in_specs = [
        pl.BlockSpec((tile_b, NX), lambda i: (i, 0)),          # x (batch-tiled)
        pl.BlockSpec((1, NX), lambda i: (0, 0)),               # inv_var (resident)
    ] + [pl.BlockSpec(p.shape, lambda i: (0, 0)) for p in params_flat]  # weights resident

    out_specs = (
        pl.BlockSpec((tile_b, NZ), lambda i: (i, 0)),          # z
        pl.BlockSpec((tile_b, NX), lambda i: (i, 0)),          # rec
        pl.BlockSpec((tile_b, NCLASSES), lambda i: (i, 0)),    # q_y
        pl.BlockSpec((tile_b, NZ), lambda i: (i, 0)),          # cz
        pl.BlockSpec((8, 128), lambda i: (i, 0)),              # packed scalar partials
        pl.BlockSpec((8, NCLASSES), lambda i: (i, 0)),         # q_y column partials
    )
    out_shape = (
        jax.ShapeDtypeStruct((b, NZ), jnp.float32),
        jax.ShapeDtypeStruct((b, NX), jnp.float32),
        jax.ShapeDtypeStruct((b, NCLASSES), jnp.float32),
        jax.ShapeDtypeStruct((b, NZ), jnp.float32),
        jax.ShapeDtypeStruct((nt * 8, 128), jnp.float32),
        jax.ShapeDtypeStruct((nt * 8, NCLASSES), jnp.float32),
    )

    z, rec, q_y, cz, ps, pqy = pl.pallas_call(
        ae_type02_kernel,
        out_shape=out_shape,
        grid_spec=pltpu.PrefetchScalarGridSpec(
            num_scalar_prefetch=0,
            grid=(nt,),
            in_specs=in_specs,
            out_specs=out_specs,
        ),
        compiler_params=pltpu.CompilerParams(
            dimension_semantics=("parallel",)),
    )(x, inv_var, *params_flat)

    # tiny final reductions over the per-tile partial sums
    loss_rec = jnp.sum(ps[:, 0]) / b + rec_const
    loss_cat = -10.0 * jnp.sum(ps[:, 1]) / b
    loss_cluster = jnp.sum(ps[:, 2]) / b
    qym = jnp.sum(pqy, axis=0) / b                 # (nclasses,)
    loss_l = 10.0 * jnp.sum(qym * (jnp.log(qym) - jnp.log(1.0 / NCLASSES)))
    total = loss_rec + 0.0 + loss_cat + loss_l * 100.0 + loss_cluster

    losses = {"rec": loss_rec, "cat": loss_cat, "l": loss_l,
              "cluster": loss_cluster, "total_loss": total}
    return {"z": z, "rec": rec, "q_y": q_y, "cz": cz, "losses": losses}


if __name__ == "__main__":
    key = jax.random.PRNGKey(0)
    kx, kp = jax.random.split(key)

    # NCHW input, like the PyTorch module: (B, C, H, W) with C*H*W == nx
    x_img = jax.random.normal(kx, (B, 4, 8, 8), jnp.float32)
    params_flat, logsigma_x = init_params(kp)

    out = ae_type02_forward(x_img, params_flat, logsigma_x)
    out = jax.block_until_ready(out)

    total = float(out["losses"]["total_loss"])
    assert jnp.isfinite(total), "total loss is not finite"
    assert out["z"].shape == (B, NZ)
    assert out["rec"].shape == (B, NX)
    assert out["q_y"].shape == (B, NCLASSES)
    assert out["cz"].shape == (B, NZ)
    assert bool(jnp.all(jnp.isfinite(out["rec"]))), "rec has non-finite values"

    print("KERNEL_OK")
</pallas_src>

<mosaic_0001>
module attributes {stable_mosaic.version = 11 : i64} {
  func.func @ae_type02_kernel(%arg0: i32, %arg1: memref<128x256xf32, #tpu.memory_space<vmem>>, %arg2: memref<1x256xf32, #tpu.memory_space<vmem>>, %arg3: memref<256x512xbf16, #tpu.memory_space<vmem>>, %arg4: memref<1x512xf32, #tpu.memory_space<vmem>>, %arg5: memref<256x256xbf16, #tpu.memory_space<vmem>>, %arg6: memref<1x256xf32, #tpu.memory_space<vmem>>, %arg7: memref<256x128xbf16, #tpu.memory_space<vmem>>, %arg8: memref<1x128xf32, #tpu.memory_space<vmem>>, %arg9: memref<128x256xbf16, #tpu.memory_space<vmem>>, %arg10: memref<1x256xf32, #tpu.memory_space<vmem>>, %arg11: memref<256x256xbf16, #tpu.memory_space<vmem>>, %arg12: memref<1x256xf32, #tpu.memory_space<vmem>>, %arg13: memref<256x256xbf16, #tpu.memory_space<vmem>>, %arg14: memref<1x256xf32, #tpu.memory_space<vmem>>, %arg15: memref<256x256xbf16, #tpu.memory_space<vmem>>, %arg16: memref<1x256xf32, #tpu.memory_space<vmem>>, %arg17: memref<256x16xbf16, #tpu.memory_space<vmem>>, %arg18: memref<1x16xf32, #tpu.memory_space<vmem>>, %arg19: memref<16x256xbf16, #tpu.memory_space<vmem>>, %arg20: memref<1x256xf32, #tpu.memory_space<vmem>>, %arg21: memref<256x128xbf16, #tpu.memory_space<vmem>>, %arg22: memref<1x128xf32, #tpu.memory_space<vmem>>, %arg23: memref<128x128xf32, #tpu.memory_space<vmem>>, %arg24: memref<128x256xf32, #tpu.memory_space<vmem>>, %arg25: memref<128x16xf32, #tpu.memory_space<vmem>>, %arg26: memref<128x128xf32, #tpu.memory_space<vmem>>, %arg27: memref<8x128xf32, #tpu.memory_space<vmem>>, %arg28: memref<8x16xf32, #tpu.memory_space<vmem>>) attributes {dimension_semantics = [#tpu.dimension_semantics<parallel>], iteration_bounds = array<i64: 2>, scalar_prefetch = 0 : i64, scratch_operands = 0 : i64, tpu.core_type = #tpu.core_type<tc>, window_params = [{transform_indices = @transform_0, window_bounds = array<i64: 128, 256>}, {pipeline_mode = #tpu.pipeline_mode<synchronous>, transform_indices = @transform_1, window_bounds = array<i64: 1, 256>}, {pipeline_mode = #tpu.pipeline_mode<synchronous>, transform_indices = @transform_2, window_bounds = array<i64: 256, 512>}, {pipeline_mode = #tpu.pipeline_mode<synchronous>, transform_indices = @transform_3, window_bounds = array<i64: 1, 512>}, {pipeline_mode = #tpu.pipeline_mode<synchronous>, transform_indices = @transform_4, window_bounds = array<i64: 256, 256>}, {pipeline_mode = #tpu.pipeline_mode<synchronous>, transform_indices = @transform_5, window_bounds = array<i64: 1, 256>}, {pipeline_mode = #tpu.pipeline_mode<synchronous>, transform_indices = @transform_6, window_bounds = array<i64: 256, 128>}, {pipeline_mode = #tpu.pipeline_mode<synchronous>, transform_indices = @transform_7, window_bounds = array<i64: 1, 128>}, {pipeline_mode = #tpu.pipeline_mode<synchronous>, transform_indices = @transform_8, window_bounds = array<i64: 128, 256>}, {pipeline_mode = #tpu.pipeline_mode<synchronous>, transform_indices = @transform_9, window_bounds = array<i64: 1, 256>}, {pipeline_mode = #tpu.pipeline_mode<synchronous>, transform_indices = @transform_10, window_bounds = array<i64: 256, 256>}, {pipeline_mode = #tpu.pipeline_mode<synchronous>, transform_indices = @transform_11, window_bounds = array<i64: 1, 256>}, {pipeline_mode = #tpu.pipeline_mode<synchronous>, transform_indices = @transform_12, window_bounds = array<i64: 256, 256>}, {pipeline_mode = #tpu.pipeline_mode<synchronous>, transform_indices = @transform_13, window_bounds = array<i64: 1, 256>}, {pipeline_mode = #tpu.pipeline_mode<synchronous>, transform_indices = @transform_14, window_bounds = array<i64: 256, 256>}, {pipeline_mode = #tpu.pipeline_mode<synchronous>, transform_indices = @transform_15, window_bounds = array<i64: 1, 256>}, {pipeline_mode = #tpu.pipeline_mode<synchronous>, transform_indices = @transform_16, window_bounds = array<i64: 256, 16>}, {pipeline_mode = #tpu.pipeline_mode<synchronous>, transform_indices = @transform_17, window_bounds = array<i64: 1, 16>}, {pipeline_mode = #tpu.pipeline_mode<synchronous>, transform_indices = @transform_18, window_bounds = array<i64: 16, 256>}, {pipeline_mode = #tpu.pipeline_mode<synchronous>, transform_indices = @transform_19, window_bounds = array<i64: 1, 256>}, {pipeline_mode = #tpu.pipeline_mode<synchronous>, transform_indices = @transform_20, window_bounds = array<i64: 256, 128>}, {pipeline_mode = #tpu.pipeline_mode<synchronous>, transform_indices = @transform_21, window_bounds = array<i64: 1, 128>}, {transform_indices = @transform_22, window_bounds = array<i64: 128, 128>}, {transform_indices = @transform_23, window_bounds = array<i64: 128, 256>}, {transform_indices = @transform_24, window_bounds = array<i64: 128, 16>}, {transform_indices = @transform_25, window_bounds = array<i64: 128, 128>}, {transform_indices = @transform_26, window_bounds = array<i64: 8, 128>}, {transform_indices = @transform_27, window_bounds = array<i64: 8, 16>}]} {
    %c0 = arith.constant 0 : index
    %c0_0 = arith.constant 0 : index
    %0 = vector.load %arg1[%c0, %c0_0] : memref<128x256xf32, #tpu.memory_space<vmem>>, vector<128x256xf32>
    %1 = arith.truncf %0 : vector<128x256xf32> to vector<128x256xbf16>
    %c0_1 = arith.constant 0 : index
    %c0_2 = arith.constant 0 : index
    %2 = vector.load %arg3[%c0_1, %c0_2] : memref<256x512xbf16, #tpu.memory_space<vmem>>, vector<256x512xbf16>
    %cst = arith.constant dense<0.000000e+00> : vector<128x512xf32>
    %3 = tpu.matmul %1, %2, %cst {dimension_numbers = #tpu.dot_dimension_numbers<[1], [0], [0], [1], [0, 0, 1, 1], [], []>} : vector<128x256xbf16>, vector<256x512xbf16>, vector<128x512xf32> -> vector<128x512xf32>
    %c0_3 = arith.constant 0 : index
    %c0_4 = arith.constant 0 : index
    %4 = vector.load %arg4[%c0_3, %c0_4] : memref<1x512xf32, #tpu.memory_space<vmem>>, vector<1x512xf32>
    %5 = vector.broadcast %4 : vector<1x512xf32> to vector<128x512xf32>
    %6 = arith.addf %3, %5 : vector<128x512xf32>
    %cst_5 = arith.constant 0.000000e+00 : f32
    %7 = vector.broadcast %cst_5 : f32 to vector<128x512xf32>
    %8 = arith.cmpf ogt, %6, %7 : vector<128x512xf32>
    %cst_6 = arith.constant 0.00999999977 : f32
    %9 = vector.broadcast %cst_6 : f32 to vector<128x512xf32>
    %10 = arith.mulf %9, %6 : vector<128x512xf32>
    %11 = arith.select %8, %6, %10 : vector<128x512xi1>, vector<128x512xf32>
    %12 = vector.extract_strided_slice %11 {offsets = [0, 0], sizes = [128, 256], strides = [1, 1]} : vector<128x512xf32> to vector<128x256xf32>
    %13 = vector.extract_strided_slice %11 {offsets = [0, 256], sizes = [128, 256], strides = [1, 1]} : vector<128x512xf32> to vector<128x256xf32>
    %14 = arith.truncf %12 : vector<128x256xf32> to vector<128x256xbf16>
    %c0_7 = arith.constant 0 : index
    %c0_8 = arith.constant 0 : index
    %15 = vector.load %arg5[%c0_7, %c0_8] : memref<256x256xbf16, #tpu.memory_space<vmem>>, vector<256x256xbf16>
    %cst_9 = arith.constant dense<0.000000e+00> : vector<128x256xf32>
    %16 = tpu.matmul %14, %15, %cst_9 {dimension_numbers = #tpu.dot_dimension_numbers<[1], [0], [0], [1], [0, 0, 1, 1], [], []>} : vector<128x256xbf16>, vector<256x256xbf16>, vector<128x256xf32> -> vector<128x256xf32>
    %c0_10 = arith.constant 0 : index
    %c0_11 = arith.constant 0 : index
    %17 = vector.load %arg6[%c0_10, %c0_11] : memref<1x256xf32, #tpu.memory_space<vmem>>, vector<1x256xf32>
    %18 = vector.broadcast %17 : vector<1x256xf32> to vector<128x256xf32>
    %19 = arith.addf %16, %18 : vector<128x256xf32>
    %cst_12 = arith.constant 0.000000e+00 : f32
    %20 = vector.broadcast %cst_12 : f32 to vector<128x256xf32>
    %21 = arith.cmpf ogt, %19, %20 : vector<128x256xf32>
    %cst_13 = arith.constant 0.00999999977 : f32
    %22 = vector.broadcast %cst_13 : f32 to vector<128x256xf32>
    %23 = arith.mulf %22, %19 : vector<128x256xf32>
    %24 = arith.select %21, %19, %23 : vector<128x256xi1>, vector<128x256xf32>
    %25 = arith.truncf %24 : vector<128x256xf32> to vector<128x256xbf16>
    %c0_14 = arith.constant 0 : index
    %c0_15 = arith.constant 0 : index
    %26 = vector.load %arg7[%c0_14, %c0_15] : memref<256x128xbf16, #tpu.memory_space<vmem>>, vector<256x128xbf16>
    %cst_16 = arith.constant dense<0.000000e+00> : vector<128x128xf32>
    %27 = tpu.matmul %25, %26, %cst_16 {dimension_numbers = #tpu.dot_dimension_numbers<[1], [0], [0], [1], [0, 0, 1, 1], [], []>} : vector<128x256xbf16>, vector<256x128xbf16>, vector<128x128xf32> -> vector<128x128xf32>
    %c0_17 = arith.constant 0 : index
    %c0_18 = arith.constant 0 : index
    %28 = vector.load %arg8[%c0_17, %c0_18] : memref<1x128xf32, #tpu.memory_space<vmem>>, vector<1x128xf32>
    %29 = vector.broadcast %28 : vector<1x128xf32> to vector<128x128xf32>
    %30 = arith.addf %27, %29 : vector<128x128xf32>
    %cst_19 = arith.constant 0.000000e+00 : f32
    %31 = vector.broadcast %cst_19 : f32 to vector<128x128xf32>
    %32 = arith.cmpf ogt, %30, %31 : vector<128x128xf32>
    %cst_20 = arith.constant 0.00999999977 : f32
    %33 = vector.broadcast %cst_20 : f32 to vector<128x128xf32>
    %34 = arith.mulf %33, %30 : vector<128x128xf32>
    %35 = arith.select %32, %30, %34 : vector<128x128xi1>, vector<128x128xf32>
    %36 = arith.truncf %35 : vector<128x128xf32> to vector<128x128xbf16>
    %c0_21 = arith.constant 0 : index
    %c0_22 = arith.constant 0 : index
    %37 = vector.load %arg9[%c0_21, %c0_22] : memref<128x256xbf16, #tpu.memory_space<vmem>>, vector<128x256xbf16>
    %cst_23 = arith.constant dense<0.000000e+00> : vector<128x256xf32>
    %38 = tpu.matmul %36, %37, %cst_23 {dimension_numbers = #tpu.dot_dimension_numbers<[1], [0], [0], [1], [0, 0, 1, 1], [], []>} : vector<128x128xbf16>, vector<128x256xbf16>, vector<128x256xf32> -> vector<128x256xf32>
    %c0_24 = arith.constant 0 : index
    %c0_25 = arith.constant 0 : index
    %39 = vector.load %arg10[%c0_24, %c0_25] : memref<1x256xf32, #tpu.memory_space<vmem>>, vector<1x256xf32>
    %40 = vector.broadcast %39 : vector<1x256xf32> to vector<128x256xf32>
    %41 = arith.addf %38, %40 : vector<128x256xf32>
    %cst_26 = arith.constant 0.000000e+00 : f32
    %42 = vector.broadcast %cst_26 : f32 to vector<128x256xf32>
    %43 = arith.cmpf ogt, %41, %42 : vector<128x256xf32>
    %cst_27 = arith.constant 0.00999999977 : f32
    %44 = vector.broadcast %cst_27 : f32 to vector<128x256xf32>
    %45 = arith.mulf %44, %41 : vector<128x256xf32>
    %46 = arith.select %43, %41, %45 : vector<128x256xi1>, vector<128x256xf32>
    %47 = arith.truncf %46 : vector<128x256xf32> to vector<128x256xbf16>
    %c0_28 = arith.constant 0 : index
    %c0_29 = arith.constant 0 : index
    %48 = vector.load %arg11[%c0_28, %c0_29] : memref<256x256xbf16, #tpu.memory_space<vmem>>, vector<256x256xbf16>
    %cst_30 = arith.constant dense<0.000000e+00> : vector<128x256xf32>
    %49 = tpu.matmul %47, %48, %cst_30 {dimension_numbers = #tpu.dot_dimension_numbers<[1], [0], [0], [1], [0, 0, 1, 1], [], []>} : vector<128x256xbf16>, vector<256x256xbf16>, vector<128x256xf32> -> vector<128x256xf32>
    %c0_31 = arith.constant 0 : index
    %c0_32 = arith.constant 0 : index
    %50 = vector.load %arg12[%c0_31, %c0_32] : memref<1x256xf32, #tpu.memory_space<vmem>>, vector<1x256xf32>
    %51 = vector.broadcast %50 : vector<1x256xf32> to vector<128x256xf32>
    %52 = arith.addf %49, %51 : vector<128x256xf32>
    %cst_33 = arith.constant 0.000000e+00 : f32
    %53 = vector.broadcast %cst_33 : f32 to vector<128x256xf32>
    %54 = arith.cmpf ogt, %52, %53 : vector<128x256xf32>
    %cst_34 = arith.constant 0.00999999977 : f32
    %55 = vector.broadcast %cst_34 : f32 to vector<128x256xf32>
    %56 = arith.mulf %55, %52 : vector<128x256xf32>
    %57 = arith.select %54, %52, %56 : vector<128x256xi1>, vector<128x256xf32>
    %58 = arith.truncf %57 : vector<128x256xf32> to vector<128x256xbf16>
    %c0_35 = arith.constant 0 : index
    %c0_36 = arith.constant 0 : index
    %59 = vector.load %arg13[%c0_35, %c0_36] : memref<256x256xbf16, #tpu.memory_space<vmem>>, vector<256x256xbf16>
    %cst_37 = arith.constant dense<0.000000e+00> : vector<128x256xf32>
    %60 = tpu.matmul %58, %59, %cst_37 {dimension_numbers = #tpu.dot_dimension_numbers<[1], [0], [0], [1], [0, 0, 1, 1], [], []>} : vector<128x256xbf16>, vector<256x256xbf16>, vector<128x256xf32> -> vector<128x256xf32>
    %c0_38 = arith.constant 0 : index
    %c0_39 = arith.constant 0 : index
    %61 = vector.load %arg14[%c0_38, %c0_39] : memref<1x256xf32, #tpu.memory_space<vmem>>, vector<1x256xf32>
    %62 = vector.broadcast %61 : vector<1x256xf32> to vector<128x256xf32>
    %63 = arith.addf %60, %62 : vector<128x256xf32>
    %cst_40 = arith.constant 0.000000e+00 : f32
    %64 = vector.broadcast %cst_40 : f32 to vector<128x256xf32>
    %65 = arith.cmpf ogt, %63, %64 : vector<128x256xf32>
    %cst_41 = arith.constant 0.00999999977 : f32
    %66 = vector.broadcast %cst_41 : f32 to vector<128x256xf32>
    %67 = arith.mulf %66, %63 : vector<128x256xf32>
    %68 = arith.select %65, %63, %67 : vector<128x256xi1>, vector<128x256xf32>
    %69 = arith.truncf %13 : vector<128x256xf32> to vector<128x256xbf16>
    %c0_42 = arith.constant 0 : index
    %c0_43 = arith.constant 0 : index
    %70 = vector.load %arg15[%c0_42, %c0_43] : memref<256x256xbf16, #tpu.memory_space<vmem>>, vector<256x256xbf16>
    %cst_44 = arith.constant dense<0.000000e+00> : vector<128x256xf32>
    %71 = tpu.matmul %69, %70, %cst_44 {dimension_numbers = #tpu.dot_dimension_numbers<[1], [0], [0], [1], [0, 0, 1, 1], [], []>} : vector<128x256xbf16>, vector<256x256xbf16>, vector<128x256xf32> -> vector<128x256xf32>
    %c0_45 = arith.constant 0 : index
    %c0_46 = arith.constant 0 : index
    %72 = vector.load %arg16[%c0_45, %c0_46] : memref<1x256xf32, #tpu.memory_space<vmem>>, vector<1x256xf32>
    %73 = vector.broadcast %72 : vector<1x256xf32> to vector<128x256xf32>
    %74 = arith.addf %71, %73 : vector<128x256xf32>
    %cst_47 = arith.constant 0.000000e+00 : f32
    %75 = vector.broadcast %cst_47 : f32 to vector<128x256xf32>
    %76 = arith.cmpf ogt, %74, %75 : vector<128x256xf32>
    %cst_48 = arith.constant 0.00999999977 : f32
    %77 = vector.broadcast %cst_48 : f32 to vector<128x256xf32>
    %78 = arith.mulf %77, %74 : vector<128x256xf32>
    %79 = arith.select %76, %74, %78 : vector<128x256xi1>, vector<128x256xf32>
    %80 = arith.truncf %79 : vector<128x256xf32> to vector<128x256xbf16>
    %c0_49 = arith.constant 0 : index
    %c0_50 = arith.constant 0 : index
    %81 = vector.load %arg17[%c0_49, %c0_50] : memref<256x16xbf16, #tpu.memory_space<vmem>>, vector<256x16xbf16>
    %cst_51 = arith.constant dense<0.000000e+00> : vector<128x16xf32>
    %82 = tpu.matmul %80, %81, %cst_51 {dimension_numbers = #tpu.dot_dimension_numbers<[1], [0], [0], [1], [0, 0, 1, 1], [], []>} : vector<128x256xbf16>, vector<256x16xbf16>, vector<128x16xf32> -> vector<128x16xf32>
    %c0_52 = arith.constant 0 : index
    %c0_53 = arith.constant 0 : index
    %83 = vector.load %arg18[%c0_52, %c0_53] : memref<1x16xf32, #tpu.memory_space<vmem>>, vector<1x16xf32>
    %84 = vector.broadcast %83 : vector<1x16xf32> to vector<128x16xf32>
    %85 = arith.addf %82, %84 : vector<128x16xf32>
    %cst_54 = arith.constant 0.000000e+00 : f32
    %86 = vector.broadcast %cst_54 : f32 to vector<128x16xf32>
    %87 = arith.cmpf ogt, %85, %86 : vector<128x16xf32>
    %cst_55 = arith.constant 0.00999999977 : f32
    %88 = vector.broadcast %cst_55 : f32 to vector<128x16xf32>
    %89 = arith.mulf %88, %85 : vector<128x16xf32>
    %90 = arith.select %87, %85, %89 : vector<128x16xi1>, vector<128x16xf32>
    %cst_56 = arith.constant dense<0xFF800000> : vector<128xf32>
    %91 = vector.multi_reduction <maximumf>, %90, %cst_56 [1] : vector<128x16xf32> to vector<128xf32>
    %92 = vector.shape_cast %91 : vector<128xf32> to vector<128x1xf32>
    %93 = vector.broadcast %92 : vector<128x1xf32> to vector<128x16xf32>
    %94 = arith.subf %90, %93 : vector<128x16xf32>
    %95 = math.exp %94 : vector<128x16xf32>
    %cst_57 = arith.constant dense<0.000000e+00> : vector<128xf32>
    %96 = vector.multi_reduction <add>, %95, %cst_57 [1] : vector<128x16xf32> to vector<128xf32>
    %97 = vector.shape_cast %96 : vector<128xf32> to vector<128x1xf32>
    %98 = vector.broadcast %97 : vector<128x1xf32> to vector<128x16xf32>
    %99 = arith.divf %95, %98 : vector<128x16xf32>
    %cst_58 = arith.constant 0.999998986 : f32
    %100 = vector.broadcast %cst_58 : f32 to vector<128x16xf32>
    %101 = arith.mulf %100, %99 : vector<128x16xf32>
    %cst_59 = arith.constant 6.24999998E-8 : f32
    %102 = vector.broadcast %cst_59 : f32 to vector<128x16xf32>
    %103 = arith.addf %102, %101 : vector<128x16xf32>
    %104 = arith.truncf %103 : vector<128x16xf32> to vector<128x16xbf16>
    %c0_60 = arith.constant 0 : index
    %c0_61 = arith.constant 0 : index
    %105 = vector.load %arg19[%c0_60, %c0_61] : memref<16x256xbf16, #tpu.memory_space<vmem>>, vector<16x256xbf16>
    %cst_62 = arith.constant dense<0.000000e+00> : vector<128x256xf32>
    %106 = tpu.matmul %104, %105, %cst_62 {dimension_numbers = #tpu.dot_dimension_numbers<[1], [0], [0], [1], [0, 0, 1, 1], [], []>} : vector<128x16xbf16>, vector<16x256xbf16>, vector<128x256xf32> -> vector<128x256xf32>
    %c0_63 = arith.constant 0 : index
    %c0_64 = arith.constant 0 : index
    %107 = vector.load %arg20[%c0_63, %c0_64] : memref<1x256xf32, #tpu.memory_space<vmem>>, vector<1x256xf32>
    %108 = vector.broadcast %107 : vector<1x256xf32> to vector<128x256xf32>
    %109 = arith.addf %106, %108 : vector<128x256xf32>
    %cst_65 = arith.constant 0.000000e+00 : f32
    %110 = vector.broadcast %cst_65 : f32 to vector<128x256xf32>
    %111 = arith.cmpf ogt, %109, %110 : vector<128x256xf32>
    %cst_66 = arith.constant 0.00999999977 : f32
    %112 = vector.broadcast %cst_66 : f32 to vector<128x256xf32>
    %113 = arith.mulf %112, %109 : vector<128x256xf32>
    %114 = arith.select %111, %109, %113 : vector<128x256xi1>, vector<128x256xf32>
    %115 = arith.truncf %114 : vector<128x256xf32> to vector<128x256xbf16>
    %c0_67 = arith.constant 0 : index
    %c0_68 = arith.constant 0 : index
    %116 = vector.load %arg21[%c0_67, %c0_68] : memref<256x128xbf16, #tpu.memory_space<vmem>>, vector<256x128xbf16>
    %cst_69 = arith.constant dense<0.000000e+00> : vector<128x128xf32>
    %117 = tpu.matmul %115, %116, %cst_69 {dimension_numbers = #tpu.dot_dimension_numbers<[1], [0], [0], [1], [0, 0, 1, 1], [], []>} : vector<128x256xbf16>, vector<256x128xbf16>, vector<128x128xf32> -> vector<128x128xf32>
    %c0_70 = arith.constant 0 : index
    %c0_71 = arith.constant 0 : index
    %118 = vector.load %arg22[%c0_70, %c0_71] : memref<1x128xf32, #tpu.memory_space<vmem>>, vector<1x128xf32>
    %119 = vector.broadcast %118 : vector<1x128xf32> to vector<128x128xf32>
    %120 = arith.addf %117, %119 : vector<128x128xf32>
    %cst_72 = arith.constant 0.000000e+00 : f32
    %121 = vector.broadcast %cst_72 : f32 to vector<128x128xf32>
    %122 = arith.cmpf ogt, %120, %121 : vector<128x128xf32>
    %cst_73 = arith.constant 0.00999999977 : f32
    %123 = vector.broadcast %cst_73 : f32 to vector<128x128xf32>
    %124 = arith.mulf %123, %120 : vector<128x128xf32>
    %125 = arith.select %122, %120, %124 : vector<128x128xi1>, vector<128x128xf32>
    %c0_74 = arith.constant 0 : index
    %c0_75 = arith.constant 0 : index
    %126 = vector.load %arg23[%c0_74, %c0_75] : memref<128x128xf32, #tpu.memory_space<vmem>>, vector<128x128xf32>
    tpu.vector_store %arg23[%c0_74, %c0_75], %35 {strides = array<i32>} : memref<128x128xf32, #tpu.memory_space<vmem>>, vector<128x128xf32>,
    %c0_76 = arith.constant 0 : index
    %c0_77 = arith.constant 0 : index
    %127 = vector.load %arg24[%c0_76, %c0_77] : memref<128x256xf32, #tpu.memory_space<vmem>>, vector<128x256xf32>
    tpu.vector_store %arg24[%c0_76, %c0_77], %68 {strides = array<i32>} : memref<128x256xf32, #tpu.memory_space<vmem>>, vector<128x256xf32>,
    %c0_78 = arith.constant 0 : index
    %c0_79 = arith.constant 0 : index
    %128 = vector.load %arg25[%c0_78, %c0_79] : memref<128x16xf32, #tpu.memory_space<vmem>>, vector<128x16xf32>
    tpu.vector_store %arg25[%c0_78, %c0_79], %103 {strides = array<i32>} : memref<128x16xf32, #tpu.memory_space<vmem>>, vector<128x16xf32>,
    %c0_80 = arith.constant 0 : index
    %c0_81 = arith.constant 0 : index
    %129 = vector.load %arg26[%c0_80, %c0_81] : memref<128x128xf32, #tpu.memory_space<vmem>>, vector<128x128xf32>
    tpu.vector_store %arg26[%c0_80, %c0_81], %125 {strides = array<i32>} : memref<128x128xf32, #tpu.memory_space<vmem>>, vector<128x128xf32>,
    %130 = arith.subf %0, %68 : vector<128x256xf32>
    %cst_82 = arith.constant 5.000000e-01 : f32
    %131 = vector.broadcast %cst_82 : f32 to vector<128x256xf32>
    %132 = arith.mulf %131, %130 : vector<128x256xf32>
    %133 = arith.mulf %132, %130 : vector<128x256xf32>
    %c0_83 = arith.constant 0 : index
    %c0_84 = arith.constant 0 : index
    %134 = vector.load %arg2[%c0_83, %c0_84] : memref<1x256xf32, #tpu.memory_space<vmem>>, vector<1x256xf32>
    %135 = vector.broadcast %134 : vector<1x256xf32> to vector<128x256xf32>
    %136 = arith.mulf %133, %135 : vector<128x256xf32>
    %cst_85 = arith.constant dense<0.000000e+00> : vector<128xf32>
    %137 = vector.multi_reduction <add>, %136, %cst_85 [1] : vector<128x256xf32> to vector<128xf32>
    %138 = vector.shape_cast %137 : vector<128xf32> to vector<128x1xf32>
    %cst_86 = arith.constant dense<0.000000e+00> : vector<1xf32>
    %139 = vector.multi_reduction <add>, %138, %cst_86 [0] : vector<128x1xf32> to vector<1xf32>
    %140 = vector.shape_cast %139 : vector<1xf32> to vector<1x1xf32>
    %cst_87 = arith.constant dense<0xFF800000> : vector<128xf32>
    %141 = vector.multi_reduction <maximumf>, %103, %cst_87 [1] : vector<128x16xf32> to vector<128xf32>
    %142 = vector.shape_cast %141 : vector<128xf32> to vector<128x1xf32>
    %cst_88 = arith.constant dense<0.000000e+00> : vector<1xf32>
    %143 = vector.multi_reduction <add>, %142, %cst_88 [0] : vector<128x1xf32> to vector<1xf32>
    %144 = vector.shape_cast %143 : vector<1xf32> to vector<1x1xf32>
    %145 = arith.subf %125, %35 : vector<128x128xf32>
    %146 = arith.mulf %145, %145 : vector<128x128xf32>
    %cst_89 = arith.constant dense<0.000000e+00> : vector<128xf32>
    %147 = vector.multi_reduction <add>, %146, %cst_89 [1] : vector<128x128xf32> to vector<128xf32>
    %148 = vector.shape_cast %147 : vector<128xf32> to vector<128x1xf32>
    %cst_90 = arith.constant dense<0.000000e+00> : vector<1xf32>
    %149 = vector.multi_reduction <add>, %148, %cst_90 [0] : vector<128x1xf32> to vector<1xf32>
    %150 = vector.shape_cast %149 : vector<1xf32> to vector<1x1xf32>
    %151 = tpu.iota {dimensions = array<i32: 0>} : vector<8x128xi32>
    %152 = tpu.iota {dimensions = array<i32: 1>} : vector<8x128xi32>
    %c0_i32 = arith.constant 0 : i32
    %153 = vector.broadcast %c0_i32 : i32 to vector<8x128xi32>
    %154 = arith.cmpi eq, %151, %153 : vector<8x128xi32>
    %c0_i32_91 = arith.constant 0 : i32
    %155 = vector.broadcast %c0_i32_91 : i32 to vector<8x128xi32>
    %156 = arith.cmpi eq, %152, %155 : vector<8x128xi32>
    %157 = arith.andi %154, %156 : vector<8x128xi1>
    %cst_92 = arith.constant 0.000000e+00 : f32
    %158 = vector.shape_cast %140 : vector<1x1xf32> to vector<1x1xf32>
    %159 = vector.broadcast %158 : vector<1x1xf32> to vector<8x128xf32>
    %160 = vector.broadcast %cst_92 : f32 to vector<8x128xf32>
    %161 = arith.select %157, %159, %160 : vector<8x128xi1>, vector<8x128xf32>
    %c1_i32 = arith.constant 1 : i32
    %162 = vector.broadcast %c1_i32 : i32 to vector<8x128xi32>
    %163 = arith.cmpi eq, %152, %162 : vector<8x128xi32>
    %164 = arith.andi %154, %163 : vector<8x128xi1>
    %cst_93 = arith.constant 0.000000e+00 : f32
    %165 = vector.shape_cast %144 : vector<1x1xf32> to vector<1x1xf32>
    %166 = vector.broadcast %165 : vector<1x1xf32> to vector<8x128xf32>
    %167 = vector.broadcast %cst_93 : f32 to vector<8x128xf32>
    %168 = arith.select %164, %166, %167 : vector<8x128xi1>, vector<8x128xf32>
    %169 = arith.addf %161, %168 : vector<8x128xf32>
    %c2_i32 = arith.constant 2 : i32
    %170 = vector.broadcast %c2_i32 : i32 to vector<8x128xi32>
    %171 = arith.cmpi eq, %152, %170 : vector<8x128xi32>
    %172 = arith.andi %154, %171 : vector<8x128xi1>
    %cst_94 = arith.constant 0.000000e+00 : f32
    %173 = vector.shape_cast %150 : vector<1x1xf32> to vector<1x1xf32>
    %174 = vector.broadcast %173 : vector<1x1xf32> to vector<8x128xf32>
    %175 = vector.broadcast %cst_94 : f32 to vector<8x128xf32>
    %176 = arith.select %172, %174, %175 : vector<8x128xi1>, vector<8x128xf32>
    %177 = arith.addf %169, %176 : vector<8x128xf32>
    %c0_95 = arith.constant 0 : index
    %c0_96 = arith.constant 0 : index
    %178 = vector.load %arg27[%c0_95, %c0_96] : memref<8x128xf32, #tpu.memory_space<vmem>>, vector<8x128xf32>
    tpu.vector_store %arg27[%c0_95, %c0_96], %177 {strides = array<i32>} : memref<8x128xf32, #tpu.memory_space<vmem>>, vector<8x128xf32>,
    %179 = tpu.iota {dimensions = array<i32: 0>} : vector<8x16xi32>
    %cst_97 = arith.constant dense<0.000000e+00> : vector<16xf32>
    %180 = vector.multi_reduction <add>, %103, %cst_97 [0] : vector<128x16xf32> to vector<16xf32>
    %181 = vector.shape_cast %180 : vector<16xf32> to vector<1x16xf32>
    %c0_i32_98 = arith.constant 0 : i32
    %182 = vector.broadcast %c0_i32_98 : i32 to vector<8x16xi32>
    %183 = arith.cmpi eq, %179, %182 : vector<8x16xi32>
    %cst_99 = arith.constant 0.000000e+00 : f32
    %184 = vector.shape_cast %181 : vector<1x16xf32> to vector<1x16xf32>
    %185 = vector.broadcast %184 : vector<1x16xf32> to vector<8x16xf32>
    %186 = vector.broadcast %cst_99 : f32 to vector<8x16xf32>
    %187 = arith.select %183, %185, %186 : vector<8x16xi1>, vector<8x16xf32>
    %c0_100 = arith.constant 0 : index
    %c0_101 = arith.constant 0 : index
    %188 = vector.load %arg28[%c0_100, %c0_101] : memref<8x16xf32, #tpu.memory_space<vmem>>, vector<8x16xf32>
    tpu.vector_store %arg28[%c0_100, %c0_101], %187 {strides = array<i32>} : memref<8x16xf32, #tpu.memory_space<vmem>>, vector<8x16xf32>,
    return
  }
  func.func @transform_0(%arg0: i32) -> (i32, i32) {
    %c0_i32 = arith.constant 0 : i32
    %c0_i32_0 = arith.constant 0 : i32
    return %arg0, %c0_i32 : i32, i32
  }
  func.func @transform_1(%arg0: i32) -> (i32, i32) {
    %c0_i32 = arith.constant 0 : i32
    %c0_i32_0 = arith.constant 0 : i32
    %c0_i32_1 = arith.constant 0 : i32
    return %c0_i32, %c0_i32_0 : i32, i32
  }
  func.func @transform_2(%arg0: i32) -> (i32, i32) {
    %c0_i32 = arith.constant 0 : i32
    %c0_i32_0 = arith.constant 0 : i32
    %c0_i32_1 = arith.constant 0 : i32
    return %c0_i32, %c0_i32_0 : i32, i32
  }
  func.func @transform_3(%arg0: i32) -> (i32, i32) {
    %c0_i32 = arith.constant 0 : i32
    %c0_i32_0 = arith.constant 0 : i32
    %c0_i32_1 = arith.constant 0 : i32
    return %c0_i32, %c0_i32_0 : i32, i32
  }
  func.func @transform_4(%arg0: i32) -> (i32, i32) {
    %c0_i32 = arith.constant 0 : i32
    %c0_i32_0 = arith.constant 0 : i32
    %c0_i32_1 = arith.constant 0 : i32
    return %c0_i32, %c0_i32_0 : i32, i32
  }
  func.func @transform_5(%arg0: i32) -> (i32, i32) {
    %c0_i32 = arith.constant 0 : i32
    %c0_i32_0 = arith.constant 0 : i32
    %c0_i32_1 = arith.constant 0 : i32
    return %c0_i32, %c0_i32_0 : i32, i32
  }
  func.func @transform_6(%arg0: i32) -> (i32, i32) {
    %c0_i32 = arith.constant 0 : i32
    %c0_i32_0 = arith.constant 0 : i32
    %c0_i32_1 = arith.constant 0 : i32
    return %c0_i32, %c0_i32_0 : i32, i32
  }
  func.func @transform_7(%arg0: i32) -> (i32, i32) {
    %c0_i32 = arith.constant 0 : i32
    %c0_i32_0 = arith.constant 0 : i32
    %c0_i32_1 = arith.constant 0 : i32
    return %c0_i32, %c0_i32_0 : i32, i32
  }
  func.func @transform_8(%arg0: i32) -> (i32, i32) {
    %c0_i32 = arith.constant 0 : i32
    %c0_i32_0 = arith.constant 0 : i32
    %c0_i32_1 = arith.constant 0 : i32
    return %c0_i32, %c0_i32_0 : i32, i32
  }
  func.func @transform_9(%arg0: i32) -> (i32, i32) {
    %c0_i32 = arith.constant 0 : i32
    %c0_i32_0 = arith.constant 0 : i32
    %c0_i32_1 = arith.constant 0 : i32
    return %c0_i32, %c0_i32_0 : i32, i32
  }
  func.func @transform_10(%arg0: i32) -> (i32, i32) {
    %c0_i32 = arith.constant 0 : i32
    %c0_i32_0 = arith.constant 0 : i32
    %c0_i32_1 = arith.constant 0 : i32
    return %c0_i32, %c0_i32_0 : i32, i32
  }
  func.func @transform_11(%arg0: i32) -> (i32, i32) {
    %c0_i32 = arith.constant 0 : i32
    %c0_i32_0 = arith.constant 0 : i32
    %c0_i32_1 = arith.constant 0 : i32
    return %c0_i32, %c0_i32_0 : i32, i32
  }
  func.func @transform_12(%arg0: i32) -> (i32, i32) {
    %c0_i32 = arith.constant 0 : i32
    %c0_i32_0 = arith.constant 0 : i32
    %c0_i32_1 = arith.constant 0 : i32
    return %c0_i32, %c0_i32_0 : i32, i32
  }
  func.func @transform_13(%arg0: i32) -> (i32, i32) {
    %c0_i32 = arith.constant 0 : i32
    %c0_i32_0 = arith.constant 0 : i32
    %c0_i32_1 = arith.constant 0 : i32
    return %c0_i32, %c0_i32_0 : i32, i32
  }
  func.func @transform_14(%arg0: i32) -> (i32, i32) {
    %c0_i32 = arith.constant 0 : i32
    %c0_i32_0 = arith.constant 0 : i32
    %c0_i32_1 = arith.constant 0 : i32
    return %c0_i32, %c0_i32_0 : i32, i32
  }
  func.func @transform_15(%arg0: i32) -> (i32, i32) {
    %c0_i32 = arith.constant 0 : i32
    %c0_i32_0 = arith.constant 0 : i32
    %c0_i32_1 = arith.constant 0 : i32
    return %c0_i32, %c0_i32_0 : i32, i32
  }
  func.func @transform_16(%arg0: i32) -> (i32, i32) {
    %c0_i32 = arith.constant 0 : i32
    %c0_i32_0 = arith.constant 0 : i32
    %c0_i32_1 = arith.constant 0 : i32
    return %c0_i32, %c0_i32_0 : i32, i32
  }
  func.func @transform_17(%arg0: i32) -> (i32, i32) {
    %c0_i32 = arith.constant 0 : i32
    %c0_i32_0 = arith.constant 0 : i32
    %c0_i32_1 = arith.constant 0 : i32
    return %c0_i32, %c0_i32_0 : i32, i32
  }
  func.func @transform_18(%arg0: i32) -> (i32, i32) {
    %c0_i32 = arith.constant 0 : i32
    %c0_i32_0 = arith.constant 0 : i32
    %c0_i32_1 = arith.constant 0 : i32
    return %c0_i32, %c0_i32_0 : i32, i32
  }
  func.func @transform_19(%arg0: i32) -> (i32, i32) {
    %c0_i32 = arith.constant 0 : i32
    %c0_i32_0 = arith.constant 0 : i32
    %c0_i32_1 = arith.constant 0 : i32
    return %c0_i32, %c0_i32_0 : i32, i32
  }
  func.func @transform_20(%arg0: i32) -> (i32, i32) {
    %c0_i32 = arith.constant 0 : i32
    %c0_i32_0 = arith.constant 0 : i32
    %c0_i32_1 = arith.constant 0 : i32
    return %c0_i32, %c0_i32_0 : i32, i32
  }
  func.func @transform_21(%arg0: i32) -> (i32, i32) {
    %c0_i32 = arith.constant 0 : i32
    %c0_i32_0 = arith.constant 0 : i32
    %c0_i32_1 = arith.constant 0 : i32
    return %c0_i32, %c0_i32_0 : i32, i32
  }
  func.func @transform_22(%arg0: i32) -> (i32, i32) {
    %c0_i32 = arith.constant 0 : i32
    %c0_i32_0 = arith.constant 0 : i32
    return %arg0, %c0_i32 : i32, i32
  }
  func.func @transform_23(%arg0: i32) -> (i32, i32) {
    %c0_i32 = arith.constant 0 : i32
    %c0_i32_0 = arith.constant 0 : i32
    return %arg0, %c0_i32 : i32, i32
  }
  func.func @transform_24(%arg0: i32) -> (i32, i32) {
    %c0_i32 = arith.constant 0 : i32
    %c0_i32_0 = arith.constant 0 : i32
    return %arg0, %c0_i32 : i32, i32
  }
  func.func @transform_25(%arg0: i32) -> (i32, i32) {
    %c0_i32 = arith.constant 0 : i32
    %c0_i32_0 = arith.constant 0 : i32
    return %arg0, %c0_i32 : i32, i32
  }
  func.func @transform_26(%arg0: i32) -> (i32, i32) {
    %c0_i32 = arith.constant 0 : i32
    %c0_i32_0 = arith.constant 0 : i32
    return %arg0, %c0_i32 : i32, i32
  }
  func.func @transform_27(%arg0: i32) -> (i32, i32) {
    %c0_i32 = arith.constant 0 : i32
    %c0_i32_0 = arith.constant 0 : i32
    return %arg0, %c0_i32 : i32, i32
  }
}

</mosaic_0001>

<llo_original>
// kernel: ae_type02_forward.1
$region0: #{ae_type02_forward.1}
  #allocation0 [shape = 'u32[]', space=smem, size = 0x4, offset = 0x4, fixed_abs, tag = 'smem constant byte address 0x4 - core index']
  #allocation1 [shape = 'u32[144,128]{1,0:T(1,128)}', space=vmem, size = 0x12000, scoped, tag = 'internal scratch']
  %s0 = inlined_call_operand.vmem [shape: f32[256,256], index: 0, kind: input, shape index: {}]
  %s1 = inlined_call_operand.vmem [shape: f32[1,256], index: 1, kind: input, shape index: {}]
  %s2 = inlined_call_operand.vmem [shape: bf16[256,512], index: 2, kind: input, shape index: {}]
  %s3 = inlined_call_operand.vmem [shape: f32[1,512], index: 3, kind: input, shape index: {}]
  %s4 = inlined_call_operand.vmem [shape: bf16[256,256], index: 4, kind: input, shape index: {}]
  %s5 = inlined_call_operand.vmem [shape: f32[1,256], index: 5, kind: input, shape index: {}]
  %s6 = inlined_call_operand.vmem [shape: bf16[256,128], index: 6, kind: input, shape index: {}]
  %s7 = inlined_call_operand.vmem [shape: f32[1,128], index: 7, kind: input, shape index: {}]
  %s8 = inlined_call_operand.hbm [shape: bf16[128,256], index: 8, kind: input, shape index: {}]
  %s9 = inlined_call_operand.vmem [shape: f32[1,256], index: 9, kind: input, shape index: {}]
  %s10 = inlined_call_operand.vmem [shape: bf16[256,256], index: 10, kind: input, shape index: {}]
  %s11 = inlined_call_operand.vmem [shape: f32[1,256], index: 11, kind: input, shape index: {}]
  %s12 = inlined_call_operand.hbm [shape: bf16[256,256], index: 12, kind: input, shape index: {}]
  %s13 = inlined_call_operand.vmem [shape: f32[1,256], index: 13, kind: input, shape index: {}]
  %s14 = inlined_call_operand.hbm [shape: bf16[256,256], index: 14, kind: input, shape index: {}]
  %s15 = inlined_call_operand.vmem [shape: f32[1,256], index: 15, kind: input, shape index: {}]
  %s16 = inlined_call_operand.vmem [shape: bf16[256,16], index: 16, kind: input, shape index: {}]
  %s17 = inlined_call_operand.vmem [shape: f32[1,16], index: 17, kind: input, shape index: {}]
  %s18 = inlined_call_operand.vmem [shape: bf16[16,256], index: 18, kind: input, shape index: {}]
  %s19 = inlined_call_operand.vmem [shape: f32[1,256], index: 19, kind: input, shape index: {}]
  %s20 = inlined_call_operand.hbm [shape: bf16[256,128], index: 20, kind: input, shape index: {}]
  %s21 = inlined_call_operand.vmem [shape: f32[1,128], index: 21, kind: input, shape index: {}]
  %s22 = inlined_call_operand.hbm [shape: f32[256,128], index: 22, kind: output, shape index: {0}]
  %s23 = inlined_call_operand.hbm [shape: f32[256,256], index: 23, kind: output, shape index: {1}]
  %s24 = inlined_call_operand.vmem [shape: f32[256,16], index: 24, kind: output, shape index: {2}]
  %s25 = inlined_call_operand.hbm [shape: f32[256,128], index: 25, kind: output, shape index: {3}]
  %s26 = inlined_call_operand.vmem [shape: f32[16,128], index: 26, kind: output, shape index: {4}]
  %s27 = inlined_call_operand.vmem [shape: f32[16,16], index: 27, kind: output, shape index: {5}]
  %28 = xla_tuple %s22, %s23, %s24, %s25, %s26, %s27
  %s29 = sld [smem:[#allocation0]]
  $region177: #{ae_type02_forward.1} parent=0
    _
  %s31 = ssub.s32 1, %s29
  %s32 = scalar_select 0, %s31, %s29
  $region1: #{ae_type02_forward.1} parent=0
    #allocation2 [shape = 'u8[65536]{0}', space=vmem, size = 0x10000, scoped, tag = 'input window, operand 8, single buffered']
    #allocation3 [shape = 's32[2]{0}', space=sflag, size = 0x8, scoped, tag = 'scoped memory for ae_type02_forward.1']
    #allocation4 [shape = 's32[2]{0}', space=sflag, size = 0x8, scoped, tag = 'scoped memory for ae_type02_forward.1']
    #allocation5 [shape = 'u8[131072]{0}', space=vmem, size = 0x20000, scoped, tag = 'input window, operand 12, single buffered']
    #allocation6 [shape = 's32[1]{0}', space=sflag, size = 0x4, scoped, tag = 'scoped memory for ae_type02_forward.1']
    #allocation7 [shape = 'u8[131072]{0}', space=vmem, size = 0x20000, scoped, tag = 'input window, operand 14, single buffered']
    #allocation8 [shape = 'u8[65536]{0}', space=vmem, size = 0x10000, scoped, tag = 'input window, operand 20, single buffered']
    #allocation9 [shape = 's32[1]{0}', space=sflag, size = 0x4, scoped, tag = 'scoped memory for ae_type02_forward.1']
    #allocation10 [shape = 'u8[131072]{0}', space=vmem, size = 0x20000, scoped, tag = 'output window, operand 0']
    #allocation11 [shape = 'u8[262144]{0}', space=vmem, size = 0x40000, scoped, tag = 'output window, operand 1']
    #allocation12 [shape = 's32[2]{0}', space=sflag, size = 0x8, scoped, tag = 'scoped memory for ae_type02_forward.1']
    #allocation13 [shape = 'u8[131072]{0}', space=vmem, size = 0x20000, scoped, tag = 'output window, operand 3']
    %33 = vsyncpa [#allocation3], 0
    %34 = vsyncpa [#allocation6], 0
    %35 = vsyncpa [#allocation9], 0
    %36 = vsyncpa [#allocation4], 0
    %s37 = scalar_lea.sflag [#allocation4], 1
    %38 = vsyncpa %s37, 0
    %39 = vsyncpa [#allocation12], 0
    %s40 = scalar_lea.sflag [#allocation12], 1
    %41 = vsyncpa %s40, 0
    loop: start=0, step=1, limit=4
    $region2: #{ae_type02_forward.1} parent=1 // loop_pre_header
      _
    $region3: #{ae_type02_forward.1} parent=1 // loop_header
      %s43 = sphi 0, %s47
      %p44 = scmp.ge.s32.totalorder %s43, 4
      %s53 = sphi 0, %s55
      %s56 = sphi 0, %s53
      %s57 = sphi 0, %s56
      %s73 = sphi 0, %s57
      %s77 = sphi 0, %s77
      %s79 = sphi 0, %s77
      %s80 = sphi 0, %s79
      %s94 = sphi 0, %s80
      %s98 = sphi 0, %s98
      %s100 = sphi 0, %s98
      %s101 = sphi 0, %s100
      %s115 = sphi 0, %s101
      %s119 = sphi 0, %s119
      %s121 = sphi 0, %s119
      %s122 = sphi 0, %s121
      %s136 = sphi 0, %s122
      %s140 = sphi 0, %s140
      %s142 = sphi 0, %s140
      %s143 = sphi 0, %s142
      %s157 = sphi 0, %s143
      %s161 = sphi 0, %s161
      %s163 = sphi 0, %s161
      %s164 = sphi 0, %s163
      %s178 = sphi 0, %s164
      %s182 = sphi 0, %s182
      %s184 = sphi 0, %s182
      %s185 = sphi 0, %s184
      %s199 = sphi 0, %s185
      %s203 = sphi 0, %s203
      %s205 = sphi 0, %s203
      %s206 = sphi 0, %s205
      %s220 = sphi 0, %s206
      %s224 = sphi 0, %s224
      %s226 = sphi 0, %s224
      %s227 = sphi 0, %s226
      %s241 = sphi 0, %s227
      %s245 = sphi 0, %s245
      %s247 = sphi 0, %s245
      %s248 = sphi 0, %s247
      %s262 = sphi 0, %s248
      %s266 = sphi 0, %s266
      %s268 = sphi 0, %s266
      %s269 = sphi 0, %s268
      %s283 = sphi 0, %s269
      %s287 = sphi 0, %s287
      %s289 = sphi 0, %s287
      %s290 = sphi 0, %s289
      %s304 = sphi 0, %s290
      %s308 = sphi 0, %s308
      %s310 = sphi 0, %s308
      %s311 = sphi 0, %s310
      %s325 = sphi 0, %s311
      %s329 = sphi 0, %s329
      %s331 = sphi 0, %s329
      %s332 = sphi 0, %s331
      %s346 = sphi 0, %s332
      %s350 = sphi 0, %s350
      %s352 = sphi 0, %s350
      %s353 = sphi 0, %s352
      %s367 = sphi 0, %s353
      %s371 = sphi 0, %s371
      %s373 = sphi 0, %s371
      %s374 = sphi 0, %s373
      %s388 = sphi 0, %s374
      %s392 = sphi 0, %s392
      %s394 = sphi 0, %s392
      %s395 = sphi 0, %s394
      %s409 = sphi 0, %s395
      %s413 = sphi 0, %s413
      %s415 = sphi 0, %s413
      %s416 = sphi 0, %s415
      %s430 = sphi 0, %s416
      %s434 = sphi 0, %s434
      %s436 = sphi 0, %s434
      %s437 = sphi 0, %s436
      %s451 = sphi 0, %s437
      %s455 = sphi 0, %s455
      %s457 = sphi 0, %s455
      %s458 = sphi 0, %s457
      %s472 = sphi 0, %s458
      %s476 = sphi 0, %s476
      %s478 = sphi 0, %s476
      %s479 = sphi 0, %s478
      %s493 = sphi 0, %s479
      %s497 = sphi 0, %s497
      %s499 = sphi 0, %s497
      %s500 = sphi 0, %s499
      %s514 = sphi 0, %s500
      %s520 = sphi 0, %s522
      %s523 = sphi 0, %s520
      %s524 = sphi 0, %s523
      %s540 = sphi 0, %s524
      %s546 = sphi 0, %s548
      %s549 = sphi 0, %s546
      %s550 = sphi 0, %s549
      %s566 = sphi 0, %s550
      %s572 = sphi 0, %s574
      %s575 = sphi 0, %s572
      %s576 = sphi 0, %s575
      %s592 = sphi 0, %s576
      %s598 = sphi 0, %s600
      %s601 = sphi 0, %s598
      %s602 = sphi 0, %s601
      %s618 = sphi 0, %s602
      %s624 = sphi 0, %s626
      %s627 = sphi 0, %s624
      %s628 = sphi 0, %s627
      %s644 = sphi 0, %s628
      %s650 = sphi 0, %s652
      %s653 = sphi 0, %s650
      %s654 = sphi 0, %s653
      %s670 = sphi 0, %s654
    $region4: #{ae_type02_forward.1} parent=1 // loop_header_branch
      %46 = sbr.rel (%p44) target = $region8
    $region5: #{ae_type02_forward.1} parent=1 // loop_body
      %s48 = ssub.s32 %s43, 1
      %s49 = ssub.s32 %s43, 2
      %s50 = sadd.s32 %s43, 1
      %s51 = ssub.s32 %s43, %s50
      %p52 = scmp.eq.s32.totalorder %s51, 0
      %s54 = sadd.s32 %s53, 1
      %s55 = scalar_select %p52, %s53, %s54
      %p58 = pneg %p52
      %p59 = scmp.eq.s32.totalorder %s43, 1
      %p60 = por %p58, %p59
      %p61 = scmp.ne.s32.totalorder %s53, %s56
      %p62 = scmp.eq.s32.totalorder %s43, 0
      %p63 = por %p61, %p62
      %p64 = scmp.ne.s32.totalorder %s53, %s56
      %p65 = scmp.eq.s32.totalorder %s48, 1
      %p66 = por %p64, %p65
      %p67 = scmp.ne.s32.totalorder %s56, %s57
      %p68 = scmp.eq.s32.totalorder %s48, 0
      %p69 = por %p67, %p68
      %p70 = scmp.ne.s32.totalorder %s56, %s57
      %p71 = scmp.eq.s32.totalorder %s49, 1
      %p72 = por %p70, %p71
      %p74 = scmp.ne.s32.totalorder %s57, %s73
      %p75 = scmp.eq.s32.totalorder %s49, 0
      %p76 = por %p74, %p75
      %s78 = sadd.s32 %s77, 1
      %p81 = scmp.eq.s32.totalorder %s43, 1
      %p82 = scmp.ne.s32.totalorder %s77, %s79
      %p83 = scmp.eq.s32.totalorder %s43, 0
      %p84 = por %p82, %p83
      %p85 = scmp.ne.s32.totalorder %s77, %s79
      %p86 = scmp.eq.s32.totalorder %s48, 1
      %p87 = por %p85, %p86
      %p88 = scmp.ne.s32.totalorder %s79, %s80
      %p89 = scmp.eq.s32.totalorder %s48, 0
      %p90 = por %p88, %p89
      %p91 = scmp.ne.s32.totalorder %s79, %s80
      %p92 = scmp.eq.s32.totalorder %s49, 1
      %p93 = por %p91, %p92
      %p95 = scmp.ne.s32.totalorder %s80, %s94
      %p96 = scmp.eq.s32.totalorder %s49, 0
      %p97 = por %p95, %p96
      %s99 = sadd.s32 %s98, 1
      %p102 = scmp.eq.s32.totalorder %s43, 1
      %p103 = scmp.ne.s32.totalorder %s98, %s100
      %p104 = scmp.eq.s32.totalorder %s43, 0
      %p105 = por %p103, %p104
      %p106 = scmp.ne.s32.totalorder %s98, %s100
      %p107 = scmp.eq.s32.totalorder %s48, 1
      %p108 = por %p106, %p107
      %p109 = scmp.ne.s32.totalorder %s100, %s101
      %p110 = scmp.eq.s32.totalorder %s48, 0
      %p111 = por %p109, %p110
      %p112 = scmp.ne.s32.totalorder %s100, %s101
      %p113 = scmp.eq.s32.totalorder %s49, 1
      %p114 = por %p112, %p113
      %p116 = scmp.ne.s32.totalorder %s101, %s115
      %p117 = scmp.eq.s32.totalorder %s49, 0
      %p118 = por %p116, %p117
      %s120 = sadd.s32 %s119, 1
      %p123 = scmp.eq.s32.totalorder %s43, 1
      %p124 = scmp.ne.s32.totalorder %s119, %s121
      %p125 = scmp.eq.s32.totalorder %s43, 0
      %p126 = por %p124, %p125
      %p127 = scmp.ne.s32.totalorder %s119, %s121
      %p128 = scmp.eq.s32.totalorder %s48, 1
      %p129 = por %p127, %p128
      %p130 = scmp.ne.s32.totalorder %s121, %s122
      %p131 = scmp.eq.s32.totalorder %s48, 0
      %p132 = por %p130, %p131
      %p133 = scmp.ne.s32.totalorder %s121, %s122
      %p134 = scmp.eq.s32.totalorder %s49, 1
      %p135 = por %p133, %p134
      %p137 = scmp.ne.s32.totalorder %s122, %s136
      %p138 = scmp.eq.s32.totalorder %s49, 0
      %p139 = por %p137, %p138
      %s141 = sadd.s32 %s140, 1
      %p144 = scmp.eq.s32.totalorder %s43, 1
      %p145 = scmp.ne.s32.totalorder %s140, %s142
      %p146 = scmp.eq.s32.totalorder %s43, 0
      %p147 = por %p145, %p146
      %p148 = scmp.ne.s32.totalorder %s140, %s142
      %p149 = scmp.eq.s32.totalorder %s48, 1
      %p150 = por %p148, %p149
      %p151 = scmp.ne.s32.totalorder %s142, %s143
      %p152 = scmp.eq.s32.totalorder %s48, 0
      %p153 = por %p151, %p152
      %p154 = scmp.ne.s32.totalorder %s142, %s143
      %p155 = scmp.eq.s32.totalorder %s49, 1
      %p156 = por %p154, %p155
      %p158 = scmp.ne.s32.totalorder %s143, %s157
      %p159 = scmp.eq.s32.totalorder %s49, 0
      %p160 = por %p158, %p159
      %s162 = sadd.s32 %s161, 1
      %p165 = scmp.eq.s32.totalorder %s43, 1
      %p166 = scmp.ne.s32.totalorder %s161, %s163
      %p167 = scmp.eq.s32.totalorder %s43, 0
      %p168 = por %p166, %p167
      %p169 = scmp.ne.s32.totalorder %s161, %s163
      %p170 = scmp.eq.s32.totalorder %s48, 1
      %p171 = por %p169, %p170
      %p172 = scmp.ne.s32.totalorder %s163, %s164
      %p173 = scmp.eq.s32.totalorder %s48, 0
      %p174 = por %p172, %p173
      %p175 = scmp.ne.s32.totalorder %s163, %s164
      %p176 = scmp.eq.s32.totalorder %s49, 1
      %p177 = por %p175, %p176
      %p179 = scmp.ne.s32.totalorder %s164, %s178
      %p180 = scmp.eq.s32.totalorder %s49, 0
      %p181 = por %p179, %p180
      %s183 = sadd.s32 %s182, 1
      %p186 = scmp.eq.s32.totalorder %s43, 1
      %p187 = scmp.ne.s32.totalorder %s182, %s184
      %p188 = scmp.eq.s32.totalorder %s43, 0
      %p189 = por %p187, %p188
      %p190 = scmp.ne.s32.totalorder %s182, %s184
      %p191 = scmp.eq.s32.totalorder %s48, 1
      %p192 = por %p190, %p191
      %p193 = scmp.ne.s32.totalorder %s184, %s185
      %p194 = scmp.eq.s32.totalorder %s48, 0
      %p195 = por %p193, %p194
      %p196 = scmp.ne.s32.totalorder %s184, %s185
      %p197 = scmp.eq.s32.totalorder %s49, 1
      %p198 = por %p196, %p197
      %p200 = scmp.ne.s32.totalorder %s185, %s199
      %p201 = scmp.eq.s32.totalorder %s49, 0
      %p202 = por %p200, %p201
      %s204 = sadd.s32 %s203, 1
      %p207 = scmp.eq.s32.totalorder %s43, 1
      %p208 = scmp.ne.s32.totalorder %s203, %s205
      %p209 = scmp.eq.s32.totalorder %s43, 0
      %p210 = por %p208, %p209
      %p211 = scmp.ne.s32.totalorder %s203, %s205
      %p212 = scmp.eq.s32.totalorder %s48, 1
      %p213 = por %p211, %p212
      %p214 = scmp.ne.s32.totalorder %s205, %s206
      %p215 = scmp.eq.s32.totalorder %s48, 0
      %p216 = por %p214, %p215
      %p217 = scmp.ne.s32.totalorder %s205, %s206
      %p218 = scmp.eq.s32.totalorder %s49, 1
      %p219 = por %p217, %p218
      %p221 = scmp.ne.s32.totalorder %s206, %s220
      %p222 = scmp.eq.s32.totalorder %s49, 0
      %p223 = por %p221, %p222
      %s225 = sadd.s32 %s224, 1
      %p228 = scmp.eq.s32.totalorder %s43, 1
      %p229 = scmp.ne.s32.totalorder %s224, %s226
      %p230 = scmp.eq.s32.totalorder %s43, 0
      %p231 = por %p229, %p230
      %p232 = scmp.ne.s32.totalorder %s224, %s226
      %p233 = scmp.eq.s32.totalorder %s48, 1
      %p234 = por %p232, %p233
      %p235 = scmp.ne.s32.totalorder %s226, %s227
      %p236 = scmp.eq.s32.totalorder %s48, 0
      %p237 = por %p235, %p236
      %p238 = scmp.ne.s32.totalorder %s226, %s227
      %p239 = scmp.eq.s32.totalorder %s49, 1
      %p240 = por %p238, %p239
      %p242 = scmp.ne.s32.totalorder %s227, %s241
      %p243 = scmp.eq.s32.totalorder %s49, 0
      %p244 = por %p242, %p243
      %s246 = sadd.s32 %s245, 1
      %p249 = scmp.eq.s32.totalorder %s43, 1
      %p250 = scmp.ne.s32.totalorder %s245, %s247
      %p251 = scmp.eq.s32.totalorder %s43, 0
      %p252 = por %p250, %p251
      %p253 = scmp.ne.s32.totalorder %s245, %s247
      %p254 = scmp.eq.s32.totalorder %s48, 1
      %p255 = por %p253, %p254
      %p256 = scmp.ne.s32.totalorder %s247, %s248
      %p257 = scmp.eq.s32.totalorder %s48, 0
      %p258 = por %p256, %p257
      %p259 = scmp.ne.s32.totalorder %s247, %s248
      %p260 = scmp.eq.s32.totalorder %s49, 1
      %p261 = por %p259, %p260
      %p263 = scmp.ne.s32.totalorder %s248, %s262
      %p264 = scmp.eq.s32.totalorder %s49, 0
      %p265 = por %p263, %p264
      %s267 = sadd.s32 %s266, 1
      %p270 = scmp.eq.s32.totalorder %s43, 1
      %p271 = scmp.ne.s32.totalorder %s266, %s268
      %p272 = scmp.eq.s32.totalorder %s43, 0
      %p273 = por %p271, %p272
      %p274 = scmp.ne.s32.totalorder %s266, %s268
      %p275 = scmp.eq.s32.totalorder %s48, 1
      %p276 = por %p274, %p275
      %p277 = scmp.ne.s32.totalorder %s268, %s269
      %p278 = scmp.eq.s32.totalorder %s48, 0
      %p279 = por %p277, %p278
      %p280 = scmp.ne.s32.totalorder %s268, %s269
      %p281 = scmp.eq.s32.totalorder %s49, 1
      %p282 = por %p280, %p281
      %p284 = scmp.ne.s32.totalorder %s269, %s283
      %p285 = scmp.eq.s32.totalorder %s49, 0
      %p286 = por %p284, %p285
      %s288 = sadd.s32 %s287, 1
      %p291 = scmp.eq.s32.totalorder %s43, 1
      %p292 = scmp.ne.s32.totalorder %s287, %s289
      %p293 = scmp.eq.s32.totalorder %s43, 0
      %p294 = por %p292, %p293
      %p295 = scmp.ne.s32.totalorder %s287, %s289
      %p296 = scmp.eq.s32.totalorder %s48, 1
      %p297 = por %p295, %p296
      %p298 = scmp.ne.s32.totalorder %s289, %s290
      %p299 = scmp.eq.s32.totalorder %s48, 0
      %p300 = por %p298, %p299
      %p301 = scmp.ne.s32.totalorder %s289, %s290
      %p302 = scmp.eq.s32.totalorder %s49, 1
      %p303 = por %p301, %p302
      %p305 = scmp.ne.s32.totalorder %s290, %s304
      %p306 = scmp.eq.s32.totalorder %s49, 0
      %p307 = por %p305, %p306
      %s309 = sadd.s32 %s308, 1
      %p312 = scmp.eq.s32.totalorder %s43, 1
      %p313 = scmp.ne.s32.totalorder %s308, %s310
      %p314 = scmp.eq.s32.totalorder %s43, 0
      %p315 = por %p313, %p314
      %p316 = scmp.ne.s32.totalorder %s308, %s310
      %p317 = scmp.eq.s32.totalorder %s48, 1
      %p318 = por %p316, %p317
      %p319 = scmp.ne.s32.totalorder %s310, %s311
      %p320 = scmp.eq.s32.totalorder %s48, 0
      %p321 = por %p319, %p320
      %p322 = scmp.ne.s32.totalorder %s310, %s311
      %p323 = scmp.eq.s32.totalorder %s49, 1
      %p324 = por %p322, %p323
      %p326 = scmp.ne.s32.totalorder %s311, %s325
      %p327 = scmp.eq.s32.totalorder %s49, 0
      %p328 = por %p326, %p327
      %s330 = sadd.s32 %s329, 1
      %p333 = scmp.eq.s32.totalorder %s43, 1
      %p334 = scmp.ne.s32.totalorder %s329, %s331
      %p335 = scmp.eq.s32.totalorder %s43, 0
      %p336 = por %p334, %p335
      %p337 = scmp.ne.s32.totalorder %s329, %s331
      %p338 = scmp.eq.s32.totalorder %s48, 1
      %p339 = por %p337, %p338
      %p340 = scmp.ne.s32.totalorder %s331, %s332
      %p341 = scmp.eq.s32.totalorder %s48, 0
      %p342 = por %p340, %p341
      %p343 = scmp.ne.s32.totalorder %s331, %s332
      %p344 = scmp.eq.s32.totalorder %s49, 1
      %p345 = por %p343, %p344
      %p347 = scmp.ne.s32.totalorder %s332, %s346
      %p348 = scmp.eq.s32.totalorder %s49, 0
      %p349 = por %p347, %p348
      %s351 = sadd.s32 %s350, 1
      %p354 = scmp.eq.s32.totalorder %s43, 1
      %p355 = scmp.ne.s32.totalorder %s350, %s352
      %p356 = scmp.eq.s32.totalorder %s43, 0
      %p357 = por %p355, %p356
      %p358 = scmp.ne.s32.totalorder %s350, %s352
      %p359 = scmp.eq.s32.totalorder %s48, 1
      %p360 = por %p358, %p359
      %p361 = scmp.ne.s32.totalorder %s352, %s353
      %p362 = scmp.eq.s32.totalorder %s48, 0
      %p363 = por %p361, %p362
      %p364 = scmp.ne.s32.totalorder %s352, %s353
      %p365 = scmp.eq.s32.totalorder %s49, 1
      %p366 = por %p364, %p365
      %p368 = scmp.ne.s32.totalorder %s353, %s367
      %p369 = scmp.eq.s32.totalorder %s49, 0
      %p370 = por %p368, %p369
      %s372 = sadd.s32 %s371, 1
      %p375 = scmp.eq.s32.totalorder %s43, 1
      %p376 = scmp.ne.s32.totalorder %s371, %s373
      %p377 = scmp.eq.s32.totalorder %s43, 0
      %p378 = por %p376, %p377
      %p379 = scmp.ne.s32.totalorder %s371, %s373
      %p380 = scmp.eq.s32.totalorder %s48, 1
      %p381 = por %p379, %p380
      %p382 = scmp.ne.s32.totalorder %s373, %s374
      %p383 = scmp.eq.s32.totalorder %s48, 0
      %p384 = por %p382, %p383
      %p385 = scmp.ne.s32.totalorder %s373, %s374
      %p386 = scmp.eq.s32.totalorder %s49, 1
      %p387 = por %p385, %p386
      %p389 = scmp.ne.s32.totalorder %s374, %s388
      %p390 = scmp.eq.s32.totalorder %s49, 0
      %p391 = por %p389, %p390
      %s393 = sadd.s32 %s392, 1
      %p396 = scmp.eq.s32.totalorder %s43, 1
      %p397 = scmp.ne.s32.totalorder %s392, %s394
      %p398 = scmp.eq.s32.totalorder %s43, 0
      %p399 = por %p397, %p398
      %p400 = scmp.ne.s32.totalorder %s392, %s394
      %p401 = scmp.eq.s32.totalorder %s48, 1
      %p402 = por %p400, %p401
      %p403 = scmp.ne.s32.totalorder %s394, %s395
      %p404 = scmp.eq.s32.totalorder %s48, 0
      %p405 = por %p403, %p404
      %p406 = scmp.ne.s32.totalorder %s394, %s395
      %p407 = scmp.eq.s32.totalorder %s49, 1
      %p408 = por %p406, %p407
      %p410 = scmp.ne.s32.totalorder %s395, %s409
      %p411 = scmp.eq.s32.totalorder %s49, 0
      %p412 = por %p410, %p411
      %s414 = sadd.s32 %s413, 1
      %p417 = scmp.eq.s32.totalorder %s43, 1
      %p418 = scmp.ne.s32.totalorder %s413, %s415
      %p419 = scmp.eq.s32.totalorder %s43, 0
      %p420 = por %p418, %p419
      %p421 = scmp.ne.s32.totalorder %s413, %s415
      %p422 = scmp.eq.s32.totalorder %s48, 1
      %p423 = por %p421, %p422
      %p424 = scmp.ne.s32.totalorder %s415, %s416
      %p425 = scmp.eq.s32.totalorder %s48, 0
      %p426 = por %p424, %p425
      %p427 = scmp.ne.s32.totalorder %s415, %s416
      %p428 = scmp.eq.s32.totalorder %s49, 1
      %p429 = por %p427, %p428
      %p431 = scmp.ne.s32.totalorder %s416, %s430
      %p432 = scmp.eq.s32.totalorder %s49, 0
      %p433 = por %p431, %p432
      %s435 = sadd.s32 %s434, 1
      %p438 = scmp.eq.s32.totalorder %s43, 1
      %p439 = scmp.ne.s32.totalorder %s434, %s436
      %p440 = scmp.eq.s32.totalorder %s43, 0
      %p441 = por %p439, %p440
      %p442 = scmp.ne.s32.totalorder %s434, %s436
      %p443 = scmp.eq.s32.totalorder %s48, 1
      %p444 = por %p442, %p443
      %p445 = scmp.ne.s32.totalorder %s436, %s437
      %p446 = scmp.eq.s32.totalorder %s48, 0
      %p447 = por %p445, %p446
      %p448 = scmp.ne.s32.totalorder %s436, %s437
      %p449 = scmp.eq.s32.totalorder %s49, 1
      %p450 = por %p448, %p449
      %p452 = scmp.ne.s32.totalorder %s437, %s451
      %p453 = scmp.eq.s32.totalorder %s49, 0
      %p454 = por %p452, %p453
      %s456 = sadd.s32 %s455, 1
      %p459 = scmp.eq.s32.totalorder %s43, 1
      %p460 = scmp.ne.s32.totalorder %s455, %s457
      %p461 = scmp.eq.s32.totalorder %s43, 0
      %p462 = por %p460, %p461
      %p463 = scmp.ne.s32.totalorder %s455, %s457
      %p464 = scmp.eq.s32.totalorder %s48, 1
      %p465 = por %p463, %p464
      %p466 = scmp.ne.s32.totalorder %s457, %s458
      %p467 = scmp.eq.s32.totalorder %s48, 0
      %p468 = por %p466, %p467
      %p469 = scmp.ne.s32.totalorder %s457, %s458
      %p470 = scmp.eq.s32.totalorder %s49, 1
      %p471 = por %p469, %p470
      %p473 = scmp.ne.s32.totalorder %s458, %s472
      %p474 = scmp.eq.s32.totalorder %s49, 0
      %p475 = por %p473, %p474
      %s477 = sadd.s32 %s476, 1
      %p480 = scmp.eq.s32.totalorder %s43, 1
      %p481 = scmp.ne.s32.totalorder %s476, %s478
      %p482 = scmp.eq.s32.totalorder %s43, 0
      %p483 = por %p481, %p482
      %p484 = scmp.ne.s32.totalorder %s476, %s478
      %p485 = scmp.eq.s32.totalorder %s48, 1
      %p486 = por %p484, %p485
      %p487 = scmp.ne.s32.totalorder %s478, %s479
      %p488 = scmp.eq.s32.totalorder %s48, 0
      %p489 = por %p487, %p488
      %p490 = scmp.ne.s32.totalorder %s478, %s479
      %p491 = scmp.eq.s32.totalorder %s49, 1
      %p492 = por %p490, %p491
      %p494 = scmp.ne.s32.totalorder %s479, %s493
      %p495 = scmp.eq.s32.totalorder %s49, 0
      %p496 = por %p494, %p495
      %s498 = sadd.s32 %s497, 1
      %p501 = scmp.eq.s32.totalorder %s43, 1
      %p502 = scmp.ne.s32.totalorder %s497, %s499
      %p503 = scmp.eq.s32.totalorder %s43, 0
      %p504 = por %p502, %p503
      %p505 = scmp.ne.s32.totalorder %s497, %s499
      %p506 = scmp.eq.s32.totalorder %s48, 1
      %p507 = por %p505, %p506
      %p508 = scmp.ne.s32.totalorder %s499, %s500
      %p509 = scmp.eq.s32.totalorder %s48, 0
      %p510 = por %p508, %p509
      %p511 = scmp.ne.s32.totalorder %s499, %s500
      %p512 = scmp.eq.s32.totalorder %s49, 1
      %p513 = por %p511, %p512
      %p515 = scmp.ne.s32.totalorder %s500, %s514
      %p516 = scmp.eq.s32.totalorder %s49, 0
      %p517 = por %p515, %p516
      %s518 = ssub.s32 %s43, %s50
      %p519 = scmp.eq.s32.totalorder %s518, 0
      %s521 = sadd.s32 %s520, 1
      %s522 = scalar_select %p519, %s520, %s521
      %p525 = pneg %p519
      %p526 = scmp.eq.s32.totalorder %s43, 1
      %p527 = por %p525, %p526
      %p528 = scmp.ne.s32.totalorder %s520, %s523
      %p529 = scmp.eq.s32.totalorder %s43, 0
      %p530 = por %p528, %p529
      %p531 = scmp.ne.s32.totalorder %s520, %s523
      %p532 = scmp.eq.s32.totalorder %s48, 1
      %p533 = por %p531, %p532
      %p534 = scmp.ne.s32.totalorder %s523, %s524
      %p535 = scmp.eq.s32.totalorder %s48, 0
      %p536 = por %p534, %p535
      %p537 = scmp.ne.s32.totalorder %s523, %s524
      %p538 = scmp.eq.s32.totalorder %s49, 1
      %p539 = por %p537, %p538
      %p541 = scmp.ne.s32.totalorder %s524, %s540
      %p542 = scmp.eq.s32.totalorder %s49, 0
      %p543 = por %p541, %p542
      %s544 = ssub.s32 %s43, %s50
      %p545 = scmp.eq.s32.totalorder %s544, 0
      %s547 = sadd.s32 %s546, 1
      %s548 = scalar_select %p545, %s546, %s547
      %p551 = pneg %p545
      %p552 = scmp.eq.s32.totalorder %s43, 1
      %p553 = por %p551, %p552
      %p554 = scmp.ne.s32.totalorder %s546, %s549
      %p555 = scmp.eq.s32.totalorder %s43, 0
      %p556 = por %p554, %p555
      %p557 = scmp.ne.s32.totalorder %s546, %s549
      %p558 = scmp.eq.s32.totalorder %s48, 1
      %p559 = por %p557, %p558
      %p560 = scmp.ne.s32.totalorder %s549, %s550
      %p561 = scmp.eq.s32.totalorder %s48, 0
      %p562 = por %p560, %p561
      %p563 = scmp.ne.s32.totalorder %s549, %s550
      %p564 = scmp.eq.s32.totalorder %s49, 1
      %p565 = por %p563, %p564
      %p567 = scmp.ne.s32.totalorder %s550, %s566
      %p568 = scmp.eq.s32.totalorder %s49, 0
      %p569 = por %p567, %p568
      %s570 = ssub.s32 %s43, %s50
      %p571 = scmp.eq.s32.totalorder %s570, 0
      %s573 = sadd.s32 %s572, 1
      %s574 = scalar_select %p571, %s572, %s573
      %p577 = pneg %p571
      %p578 = scmp.eq.s32.totalorder %s43, 1
      %p579 = por %p577, %p578
      %p580 = scmp.ne.s32.totalorder %s572, %s575
      %p581 = scmp.eq.s32.totalorder %s43, 0
      %p582 = por %p580, %p581
      %p583 = scmp.ne.s32.totalorder %s572, %s575
      %p584 = scmp.eq.s32.totalorder %s48, 1
      %p585 = por %p583, %p584
      %p586 = scmp.ne.s32.totalorder %s575, %s576
      %p587 = scmp.eq.s32.totalorder %s48, 0
      %p588 = por %p586, %p587
      %p589 = scmp.ne.s32.totalorder %s575, %s576
      %p590 = scmp.eq.s32.totalorder %s49, 1
      %p591 = por %p589, %p590
      %p593 = scmp.ne.s32.totalorder %s576, %s592
      %p594 = scmp.eq.s32.totalorder %s49, 0
      %p595 = por %p593, %p594
      %s596 = ssub.s32 %s43, %s50
      %p597 = scmp.eq.s32.totalorder %s596, 0
      %s599 = sadd.s32 %s598, 1
      %s600 = scalar_select %p597, %s598, %s599
      %p603 = pneg %p597
      %p604 = scmp.eq.s32.totalorder %s43, 1
      %p605 = por %p603, %p604
      %p606 = scmp.ne.s32.totalorder %s598, %s601
      %p607 = scmp.eq.s32.totalorder %s43, 0
      %p608 = por %p606, %p607
      %p609 = scmp.ne.s32.totalorder %s598, %s601
      %p610 = scmp.eq.s32.totalorder %s48, 1
      %p611 = por %p609, %p610
      %p612 = scmp.ne.s32.totalorder %s601, %s602
      %p613 = scmp.eq.s32.totalorder %s48, 0
      %p614 = por %p612, %p613
      %p615 = scmp.ne.s32.totalorder %s601, %s602
      %p616 = scmp.eq.s32.totalorder %s49, 1
      %p617 = por %p615, %p616
      %p619 = scmp.ne.s32.totalorder %s602, %s618
      %p620 = scmp.eq.s32.totalorder %s49, 0
      %p621 = por %p619, %p620
      %s622 = ssub.s32 %s43, %s50
      %p623 = scmp.eq.s32.totalorder %s622, 0
      %s625 = sadd.s32 %s624, 1
      %s626 = scalar_select %p623, %s624, %s625
      %p629 = pneg %p623
      %p630 = scmp.eq.s32.totalorder %s43, 1
      %p631 = por %p629, %p630
      %p632 = scmp.ne.s32.totalorder %s624, %s627
      %p633 = scmp.eq.s32.totalorder %s43, 0
      %p634 = por %p632, %p633
      %p635 = scmp.ne.s32.totalorder %s624, %s627
      %p636 = scmp.eq.s32.totalorder %s48, 1
      %p637 = por %p635, %p636
      %p638 = scmp.ne.s32.totalorder %s627, %s628
      %p639 = scmp.eq.s32.totalorder %s48, 0
      %p640 = por %p638, %p639
      %p641 = scmp.ne.s32.totalorder %s627, %s628
      %p642 = scmp.eq.s32.totalorder %s49, 1
      %p643 = por %p641, %p642
      %p645 = scmp.ne.s32.totalorder %s628, %s644
      %p646 = scmp.eq.s32.totalorder %s49, 0
      %p647 = por %p645, %p646
      %s648 = ssub.s32 %s43, %s50
      %p649 = scmp.eq.s32.totalorder %s648, 0
      %s651 = sadd.s32 %s650, 1
      %s652 = scalar_select %p649, %s650, %s651
      %p655 = pneg %p649
      %p656 = scmp.eq.s32.totalorder %s43, 1
      %p657 = por %p655, %p656
      %p658 = scmp.ne.s32.totalorder %s650, %s653
      %p659 = scmp.eq.s32.totalorder %s43, 0
      %p660 = por %p658, %p659
      %p661 = scmp.ne.s32.totalorder %s650, %s653
      %p662 = scmp.eq.s32.totalorder %s48, 1
      %p663 = por %p661, %p662
      %p664 = scmp.ne.s32.totalorder %s653, %s654
      %p665 = scmp.eq.s32.totalorder %s48, 0
      %p666 = por %p664, %p665
      %p667 = scmp.ne.s32.totalorder %s653, %s654
      %p668 = scmp.eq.s32.totalorder %s49, 1
      %p669 = por %p667, %p668
      %p671 = scmp.ne.s32.totalorder %s654, %s670
      %p672 = scmp.eq.s32.totalorder %s49, 0
      %p673 = por %p671, %p672
      %p674 = scmp.le.s32.totalorder 1, %s43
      %p675 = scmp.lt.s32.totalorder %s43, 3
      %p676 = pnand %p674, %p675
      %p677 = pneg %p676
      // Predicated region
      $region9: #{ae_type02_forward.1} parent=5 // pred_check
        _
      $region10: #{ae_type02_forward.1} parent=5 // pred_check_branch
        %679 = sbr.rel (%p676) target = $region12
      $region11: #{ae_type02_forward.1} parent=5 // pred_region
        %s680 = ssub.s32 %s43, 1
        // Predicated region
        $region13: #{ae_type02_forward.1} parent=11 // pred_check
          %p681 = pneg %p90
        $region14: #{ae_type02_forward.1} parent=11 // pred_check_branch
          %683 = sbr.rel (%p681) target = $region16
        $region15: #{ae_type02_forward.1} parent=11 // pred_region
          _
        $region16: #{ae_type02_forward.1} parent=11 // pred_fallthru
          _
        // Predicated region
        $region17: #{ae_type02_forward.1} parent=11 // pred_check
          %p684 = pneg %p111
        $region18: #{ae_type02_forward.1} parent=11 // pred_check_branch
          %686 = sbr.rel (%p684) target = $region20
        $region19: #{ae_type02_forward.1} parent=11 // pred_region
          _
        $region20: #{ae_type02_forward.1} parent=11 // pred_fallthru
          _
        // Predicated region
        $region21: #{ae_type02_forward.1} parent=11 // pred_check
          %p687 = pneg %p132
        $region22: #{ae_type02_forward.1} parent=11 // pred_check_branch
          %689 = sbr.rel (%p687) target = $region24
        $region23: #{ae_type02_forward.1} parent=11 // pred_region
          _
        $region24: #{ae_type02_forward.1} parent=11 // pred_fallthru
          _
        // Predicated region
        $region25: #{ae_type02_forward.1} parent=11 // pred_check
          %p690 = pneg %p153
        $region26: #{ae_type02_forward.1} parent=11 // pred_check_branch
          %692 = sbr.rel (%p690) target = $region28
        $region27: #{ae_type02_forward.1} parent=11 // pred_region
          _
        $region28: #{ae_type02_forward.1} parent=11 // pred_fallthru
          _
        // Predicated region
        $region29: #{ae_type02_forward.1} parent=11 // pred_check
          %p693 = pneg %p174
        $region30: #{ae_type02_forward.1} parent=11 // pred_check_branch
          %695 = sbr.rel (%p693) target = $region32
        $region31: #{ae_type02_forward.1} parent=11 // pred_region
          _
        $region32: #{ae_type02_forward.1} parent=11 // pred_fallthru
          _
        // Predicated region
        $region33: #{ae_type02_forward.1} parent=11 // pred_check
          %p696 = pneg %p195
        $region34: #{ae_type02_forward.1} parent=11 // pred_check_branch
          %698 = sbr.rel (%p696) target = $region36
        $region35: #{ae_type02_forward.1} parent=11 // pred_region
          _
        $region36: #{ae_type02_forward.1} parent=11 // pred_fallthru
          _
        // Predicated region
        $region37: #{ae_type02_forward.1} parent=11 // pred_check
          %p699 = pneg %p216
        $region38: #{ae_type02_forward.1} parent=11 // pred_check_branch
          %701 = sbr.rel (%p699) target = $region40
        $region39: #{ae_type02_forward.1} parent=11 // pred_region
          _
        $region40: #{ae_type02_forward.1} parent=11 // pred_fallthru
          _
        // Predicated region
        $region41: #{ae_type02_forward.1} parent=11 // pred_check
          %p702 = pneg %p237
        $region42: #{ae_type02_forward.1} parent=11 // pred_check_branch
          %704 = sbr.rel (%p702) target = $region44
        $region43: #{ae_type02_forward.1} parent=11 // pred_region
          %s706 = ssub.s32 2048, 2048
          %707 = vsyncadd [#allocation3], %s706
          %s708 = sshll.u32 [#allocation2], 4
          %s709 = int_to_ptr.vmem [resolvable:$true] %s708
          %714 = dma.hbm_to_vmem [thread:$0]  %s8, 2048, %s709, [#allocation3], 128, 128, 8
        $region44: #{ae_type02_forward.1} parent=11 // pred_fallthru
          _
        // Predicated region
        $region45: #{ae_type02_forward.1} parent=11 // pred_check
          %p715 = pneg %p258
        $region46: #{ae_type02_forward.1} parent=11 // pred_check_branch
          %717 = sbr.rel (%p715) target = $region48
        $region47: #{ae_type02_forward.1} parent=11 // pred_region
          _
        $region48: #{ae_type02_forward.1} parent=11 // pred_fallthru
          _
        // Predicated region
        $region49: #{ae_type02_forward.1} parent=11 // pred_check
          %p718 = pneg %p279
        $region50: #{ae_type02_forward.1} parent=11 // pred_check_branch
          %720 = sbr.rel (%p718) target = $region52
        $region51: #{ae_type02_forward.1} parent=11 // pred_region
          _
        $region52: #{ae_type02_forward.1} parent=11 // pred_fallthru
          _
        // Predicated region
        $region53: #{ae_type02_forward.1} parent=11 // pred_check
          %p721 = pneg %p300
        $region54: #{ae_type02_forward.1} parent=11 // pred_check_branch
          %723 = sbr.rel (%p721) target = $region56
        $region55: #{ae_type02_forward.1} parent=11 // pred_region
          _
        $region56: #{ae_type02_forward.1} parent=11 // pred_fallthru
          _
        // Predicated region
        $region57: #{ae_type02_forward.1} parent=11 // pred_check
          %p724 = pneg %p321
        $region58: #{ae_type02_forward.1} parent=11 // pred_check_branch
          %726 = sbr.rel (%p724) target = $region60
        $region59: #{ae_type02_forward.1} parent=11 // pred_region
          %s728 = ssub.s32 4096, 4096
          %729 = vsyncadd [#allocation6], %s728
          %s730 = sshll.u32 [#allocation5], 4
          %s731 = int_to_ptr.vmem [resolvable:$true] %s730
          %736 = dma.hbm_to_vmem [thread:$0]  %s12, 4096, %s731, [#allocation6], 128, 128, 8
        $region60: #{ae_type02_forward.1} parent=11 // pred_fallthru
          _
        // Predicated region
        $region61: #{ae_type02_forward.1} parent=11 // pred_check
          %p737 = pneg %p342
        $region62: #{ae_type02_forward.1} parent=11 // pred_check_branch
          %739 = sbr.rel (%p737) target = $region64
        $region63: #{ae_type02_forward.1} parent=11 // pred_region
          _
        $region64: #{ae_type02_forward.1} parent=11 // pred_fallthru
          _
        // Predicated region
        $region65: #{ae_type02_forward.1} parent=11 // pred_check
          %p740 = pneg %p363
        $region66: #{ae_type02_forward.1} parent=11 // pred_check_branch
          %742 = sbr.rel (%p740) target = $region68
        $region67: #{ae_type02_forward.1} parent=11 // pred_region
          %s744 = ssub.s32 4096, 4096
          %745 = vsyncadd [#allocation6], %s744
          %s746 = sshll.u32 [#allocation7], 4
          %s747 = int_to_ptr.vmem [resolvable:$true] %s746
          %752 = dma.hbm_to_vmem [thread:$0]  %s14, 4096, %s747, [#allocation6], 128, 128, 8
        $region68: #{ae_type02_forward.1} parent=11 // pred_fallthru
          _
        // Predicated region
        $region69: #{ae_type02_forward.1} parent=11 // pred_check
          %p753 = pneg %p384
        $region70: #{ae_type02_forward.1} parent=11 // pred_check_branch
          %755 = sbr.rel (%p753) target = $region72
        $region71: #{ae_type02_forward.1} parent=11 // pred_region
          _
        $region72: #{ae_type02_forward.1} parent=11 // pred_fallthru
          _
        // Predicated region
        $region73: #{ae_type02_forward.1} parent=11 // pred_check
          %p756 = pneg %p405
        $region74: #{ae_type02_forward.1} parent=11 // pred_check_branch
          %758 = sbr.rel (%p756) target = $region76
        $region75: #{ae_type02_forward.1} parent=11 // pred_region
          _
        $region76: #{ae_type02_forward.1} parent=11 // pred_fallthru
          _
        // Predicated region
        $region77: #{ae_type02_forward.1} parent=11 // pred_check
          %p759 = pneg %p426
        $region78: #{ae_type02_forward.1} parent=11 // pred_check_branch
          %761 = sbr.rel (%p759) target = $region80
        $region79: #{ae_type02_forward.1} parent=11 // pred_region
          _
        $region80: #{ae_type02_forward.1} parent=11 // pred_fallthru
          _
        // Predicated region
        $region81: #{ae_type02_forward.1} parent=11 // pred_check
          %p762 = pneg %p447
        $region82: #{ae_type02_forward.1} parent=11 // pred_check_branch
          %764 = sbr.rel (%p762) target = $region84
        $region83: #{ae_type02_forward.1} parent=11 // pred_region
          _
        $region84: #{ae_type02_forward.1} parent=11 // pred_fallthru
          _
        // Predicated region
        $region85: #{ae_type02_forward.1} parent=11 // pred_check
          %p765 = pneg %p468
        $region86: #{ae_type02_forward.1} parent=11 // pred_check_branch
          %767 = sbr.rel (%p765) target = $region88
        $region87: #{ae_type02_forward.1} parent=11 // pred_region
          _
        $region88: #{ae_type02_forward.1} parent=11 // pred_fallthru
          _
        // Predicated region
        $region89: #{ae_type02_forward.1} parent=11 // pred_check
          %p768 = pneg %p489
        $region90: #{ae_type02_forward.1} parent=11 // pred_check_branch
          %770 = sbr.rel (%p768) target = $region92
        $region91: #{ae_type02_forward.1} parent=11 // pred_region
          %s772 = ssub.s32 2048, 2048
          %773 = vsyncadd [#allocation9], %s772
          %s774 = sshll.u32 [#allocation8], 4
          %s775 = int_to_ptr.vmem [resolvable:$true] %s774
          %780 = dma.hbm_to_vmem [thread:$0]  %s20, 2048, %s775, [#allocation9], 64, 64, 4
        $region92: #{ae_type02_forward.1} parent=11 // pred_fallthru
          _
        // Predicated region
        $region93: #{ae_type02_forward.1} parent=11 // pred_check
          %p781 = pneg %p510
        $region94: #{ae_type02_forward.1} parent=11 // pred_check_branch
          %783 = sbr.rel (%p781) target = $region96
        $region95: #{ae_type02_forward.1} parent=11 // pred_region
          _
        $region96: #{ae_type02_forward.1} parent=11 // pred_fallthru
          _
      $region12: #{ae_type02_forward.1} parent=5 // pred_fallthru
        _
      %p784 = scmp.lt.s32.totalorder %s43, 2
      // Predicated region
      $region97: #{ae_type02_forward.1} parent=5 // pred_check
        %p785 = pneg %p784
      $region98: #{ae_type02_forward.1} parent=5 // pred_check_branch
        %787 = sbr.rel (%p785) target = $region100
      $region99: #{ae_type02_forward.1} parent=5 // pred_region
        // Predicated region
        $region101: #{ae_type02_forward.1} parent=99 // pred_check
          %p788 = pneg %p63
        $region102: #{ae_type02_forward.1} parent=99 // pred_check_branch
          %790 = sbr.rel (%p788) target = $region104
        $region103: #{ae_type02_forward.1} parent=99 // pred_region
          %s791 = smul.u32 16, %s43
          %p792 = scmp.lt.s32.totalorder %s791, 31
          %s793 = scalar_select %p792, %s791, 31
          %s794 = smul.addr %s793, 2
          %s795 = smul.addr %s794, 8
          %s796 = scalar_lea.vmem %s0, %s795
          %s797 = smul.u32 16, %s43
        $region104: #{ae_type02_forward.1} parent=99 // pred_fallthru
          _
      $region100: #{ae_type02_forward.1} parent=5 // pred_fallthru
        _
      %p798 = scmp.le.s32.totalorder 1, %s43
      %p799 = scmp.lt.s32.totalorder %s43, 3
      %p800 = pnand %p798, %p799
      %p801 = pneg %p800
      // Predicated region
      $region105: #{ae_type02_forward.1} parent=5 // pred_check
        _
      $region106: #{ae_type02_forward.1} parent=5 // pred_check_branch
        %803 = sbr.rel (%p800) target = $region108
      $region107: #{ae_type02_forward.1} parent=5 // pred_region
        %s804 = ssub.s32 %s43, 1
        // Predicated region
        $region109: #{ae_type02_forward.1} parent=107 // pred_check
          %p805 = pneg %p237
        $region110: #{ae_type02_forward.1} parent=107 // pred_check_branch
          %807 = sbr.rel (%p805) target = $region112
        $region111: #{ae_type02_forward.1} parent=107 // pred_region
          %808 = dma.done [#allocation3], 2048
        $region112: #{ae_type02_forward.1} parent=107 // pred_fallthru
          _
        // Predicated region
        $region113: #{ae_type02_forward.1} parent=107 // pred_check
          %p809 = pneg %p321
        $region114: #{ae_type02_forward.1} parent=107 // pred_check_branch
          %811 = sbr.rel (%p809) target = $region116
        $region115: #{ae_type02_forward.1} parent=107 // pred_region
          %812 = dma.done [#allocation6], 4096
        $region116: #{ae_type02_forward.1} parent=107 // pred_fallthru
          _
        // Predicated region
        $region117: #{ae_type02_forward.1} parent=107 // pred_check
          %p813 = pneg %p363
        $region118: #{ae_type02_forward.1} parent=107 // pred_check_branch
          %815 = sbr.rel (%p813) target = $region120
        $region119: #{ae_type02_forward.1} parent=107 // pred_region
          %816 = dma.done [#allocation6], 4096
        $region120: #{ae_type02_forward.1} parent=107 // pred_fallthru
          _
        // Predicated region
        $region121: #{ae_type02_forward.1} parent=107 // pred_check
          %p817 = pneg %p489
        $region122: #{ae_type02_forward.1} parent=107 // pred_check_branch
          %819 = sbr.rel (%p817) target = $region124
        $region123: #{ae_type02_forward.1} parent=107 // pred_region
          %820 = dma.done [#allocation9], 2048
        $region124: #{ae_type02_forward.1} parent=107 // pred_fallthru
          _
        %s821 = smul.u32 16, %s48
        %p822 = scmp.lt.s32.totalorder %s821, 31
        %s823 = scalar_select %p822, %s821, 31
        %s824 = smul.addr %s823, 2
        %s825 = smul.addr %s824, 8
        %s826 = scalar_lea.vmem %s0, %s825
        %p827 = pneg %p69
        %p828 = pneg %p66
        %p829 = pneg %p90
        %p830 = pneg %p87
        %p831 = pneg %p111
        %p832 = pneg %p108
        %p833 = pneg %p132
        %p834 = pneg %p129
        %p835 = pneg %p153
        %p836 = pneg %p150
        %p837 = pneg %p174
        %p838 = pneg %p171
        %p839 = pneg %p195
        %p840 = pneg %p192
        %p841 = pneg %p216
        %p842 = pneg %p213
        %p843 = pneg %p237
        %p844 = pneg %p234
        %p845 = pneg %p258
        %p846 = pneg %p255
        %p847 = pneg %p279
        %p848 = pneg %p276
        %p849 = pneg %p300
        %p850 = pneg %p297
        %p851 = pneg %p321
        %p852 = pneg %p318
        %p853 = pneg %p342
        %p854 = pneg %p339
        %p855 = pneg %p363
        %p856 = pneg %p360
        %p857 = pneg %p384
        %p858 = pneg %p381
        %p859 = pneg %p405
        %p860 = pneg %p402
        %p861 = pneg %p426
        %p862 = pneg %p423
        %p863 = pneg %p447
        %p864 = pneg %p444
        %p865 = pneg %p468
        %p866 = pneg %p465
        %p867 = pneg %p489
        %p868 = pneg %p486
        %p869 = pneg %p510
        %p870 = pneg %p507
        %p871 = pneg %p536
        %p872 = pneg %p533
        %s873 = sand.u32 %s523, 1
        %s874 = scalar_lea.sflag [#allocation4], %s873
        %s875 = sand.u32 %s523, 1
        %s876 = smul.addr %s875, 128
        %s877 = scalar_lea.vmem [#allocation10], %s876
        %p878 = pneg %p562
        %p879 = pneg %p559
        %s880 = sand.u32 %s48, 1
        %s881 = scalar_lea.sflag [#allocation12], %s880
        %s882 = sand.u32 %s549, 1
        %s883 = smul.addr %s882, 256
        %s884 = scalar_lea.vmem [#allocation11], %s883
        %p885 = pneg %p588
        %p886 = pneg %p585
        %s887 = smul.u32 16, %s48
        %p888 = scmp.lt.s32.totalorder %s887, 31
        %s889 = scalar_select %p888, %s887, 31
        %s890 = smul.addr %s889, 8
        %s891 = scalar_lea.vmem %s24, %s890
        %p892 = pneg %p614
        %p893 = pneg %p611
        %s894 = sand.u32 %s48, 1
        %s895 = scalar_lea.sflag [#allocation12], %s894
        %s896 = sand.u32 %s601, 1
        %s897 = smul.addr %s896, 128
        %s898 = scalar_lea.vmem [#allocation13], %s897
        %p899 = pneg %p640
        %p900 = pneg %p637
        %p901 = scmp.lt.s32.totalorder %s48, 1
        %s902 = scalar_select %p901, %s48, 1
        %s903 = smul.addr %s902, 8
        %s904 = scalar_lea.vmem %s26, %s903
        %p905 = pneg %p666
        %p906 = pneg %p663
        %p907 = scmp.lt.s32.totalorder %s48, 1
        %s908 = scalar_select %p907, %s48, 1
        %s909 = smul.addr %s908, 8
        %s910 = scalar_lea.vmem %s27, %s909
        %s911 = smul.u32 16, %s48
        %p912 = scmp.lt.s32.totalorder %s911, 31
        %s913 = scalar_select %p912, %s911, 31
        %s914 = smul.addr %s913, 2
        %s915 = smul.addr %s914, 8
        %s916 = scalar_lea.vmem %s0, %s915
        %s917 = smul.u32 16, %s48
        %s918 = smul.u32 16, %s48
        %s919 = smul.u32 16, %s48
        %s920 = smul.u32 16, %s48
        %p921 = scmp.lt.s32.totalorder %s920, 31
        %s922 = scalar_select %p921, %s920, 31
        %s923 = smul.addr %s922, 8
        %s924 = scalar_lea.vmem %s24, %s923
        %s925 = smul.u32 16, %s48
        %s926 = smul.u32 16, %s48
        %p927 = scmp.lt.s32.totalorder %s48, 1
        %s928 = scalar_select %p927, %s48, 1
        %s929 = smul.addr %s928, 8
        %s930 = scalar_lea.vmem %s26, %s929
        %p931 = scmp.lt.s32.totalorder %s48, 1
        %s932 = scalar_select %p931, %s48, 1
        %s933 = smul.addr %s932, 8
        %s934 = scalar_lea.vmem %s27, %s933
        %v936 = vld [vmem:[%s916] sm:$0xff]
        %v937 = vld [vmem:[%s916 + $0x8] sm:$0xff]
        %v938 = vld [vmem:[%s916 + $0x10] sm:$0xff]
        %v939 = vld [vmem:[%s916 + $0x18] sm:$0xff]
        %v940 = vld [vmem:[%s916 + $0x20] sm:$0xff]
        %v941 = vld [vmem:[%s916 + $0x28] sm:$0xff]
        %v942 = vld [vmem:[%s916 + $0x30] sm:$0xff]
        %v943 = vld [vmem:[%s916 + $0x38] sm:$0xff]
        %v944 = vld [vmem:[%s916 + $0x40] sm:$0xff]
        %v945 = vld [vmem:[%s916 + $0x48] sm:$0xff]
        %v946 = vld [vmem:[%s916 + $0x50] sm:$0xff]
        %v947 = vld [vmem:[%s916 + $0x58] sm:$0xff]
        %v948 = vld [vmem:[%s916 + $0x60] sm:$0xff]
        %v949 = vld [vmem:[%s916 + $0x68] sm:$0xff]
        %v950 = vld [vmem:[%s916 + $0x70] sm:$0xff]
        %v951 = vld [vmem:[%s916 + $0x78] sm:$0xff]
        %v952 = vld [vmem:[%s916 + $0x80] sm:$0xff]
        %v953 = vld [vmem:[%s916 + $0x88] sm:$0xff]
        %v954 = vld [vmem:[%s916 + $0x90] sm:$0xff]
        %v955 = vld [vmem:[%s916 + $0x98] sm:$0xff]
        %v956 = vld [vmem:[%s916 + $0xa0] sm:$0xff]
        %v957 = vld [vmem:[%s916 + $0xa8] sm:$0xff]
        %v958 = vld [vmem:[%s916 + $0xb0] sm:$0xff]
        %v959 = vld [vmem:[%s916 + $0xb8] sm:$0xff]
        %v960 = vld [vmem:[%s916 + $0xc0] sm:$0xff]
        %v961 = vld [vmem:[%s916 + $0xc8] sm:$0xff]
        %v962 = vld [vmem:[%s916 + $0xd0] sm:$0xff]
        %v963 = vld [vmem:[%s916 + $0xd8] sm:$0xff]
        %v964 = vld [vmem:[%s916 + $0xe0] sm:$0xff]
        %v965 = vld [vmem:[%s916 + $0xe8] sm:$0xff]
        %v966 = vld [vmem:[%s916 + $0xf0] sm:$0xff]
        %v967 = vld [vmem:[%s916 + $0xf8] sm:$0xff]
        %v968 = vpack.c.bf16 %v938, %v936
        %v969 = vpack.c.bf16 %v939, %v937
        %v970 = vpack.c.bf16 %v942, %v940
        %v971 = vpack.c.bf16 %v943, %v941
        %v972 = vpack.c.bf16 %v946, %v944
        %v973 = vpack.c.bf16 %v947, %v945
        %v974 = vpack.c.bf16 %v950, %v948
        %v975 = vpack.c.bf16 %v951, %v949
        %v976 = vpack.c.bf16 %v954, %v952
        %v977 = vpack.c.bf16 %v955, %v953
        %v978 = vpack.c.bf16 %v958, %v956
        %v979 = vpack.c.bf16 %v959, %v957
        %v980 = vpack.c.bf16 %v962, %v960
        %v981 = vpack.c.bf16 %v963, %v961
        %v982 = vpack.c.bf16 %v966, %v964
        %v983 = vpack.c.bf16 %v967, %v965
        %v984 = vld [vmem:[%s2] sm:$0xff]
        %v985 = vld [vmem:[%s2 + $0x8] sm:$0xff]
        %v986 = vld [vmem:[%s2 + $0x10] sm:$0xff]
        %v987 = vld [vmem:[%s2 + $0x18] sm:$0xff]
        %v988 = vld [vmem:[%s2 + $0x20] sm:$0xff]
        %v989 = vld [vmem:[%s2 + $0x28] sm:$0xff]
        %v990 = vld [vmem:[%s2 + $0x30] sm:$0xff]
        %v991 = vld [vmem:[%s2 + $0x38] sm:$0xff]
        %v992 = vld [vmem:[%s2 + $0x40] sm:$0xff]
        %v993 = vld [vmem:[%s2 + $0x48] sm:$0xff]
        %v994 = vld [vmem:[%s2 + $0x50] sm:$0xff]
        %v995 = vld [vmem:[%s2 + $0x58] sm:$0xff]
        %v996 = vld [vmem:[%s2 + $0x60] sm:$0xff]
        %v997 = vld [vmem:[%s2 + $0x68] sm:$0xff]
        %v998 = vld [vmem:[%s2 + $0x70] sm:$0xff]
        %v999 = vld [vmem:[%s2 + $0x78] sm:$0xff]
        %v1000 = vld [vmem:[%s2 + $0x80] sm:$0xff]
        %v1001 = vld [vmem:[%s2 + $0x88] sm:$0xff]
        %v1002 = vld [vmem:[%s2 + $0x90] sm:$0xff]
        %v1003 = vld [vmem:[%s2 + $0x98] sm:$0xff]
        %v1004 = vld [vmem:[%s2 + $0xa0] sm:$0xff]
        %v1005 = vld [vmem:[%s2 + $0xa8] sm:$0xff]
        %v1006 = vld [vmem:[%s2 + $0xb0] sm:$0xff]
        %v1007 = vld [vmem:[%s2 + $0xb8] sm:$0xff]
        %v1008 = vld [vmem:[%s2 + $0xc0] sm:$0xff]
        %v1009 = vld [vmem:[%s2 + $0xc8] sm:$0xff]
        %v1010 = vld [vmem:[%s2 + $0xd0] sm:$0xff]
        %v1011 = vld [vmem:[%s2 + $0xd8] sm:$0xff]
        %v1012 = vld [vmem:[%s2 + $0xe0] sm:$0xff]
        %v1013 = vld [vmem:[%s2 + $0xe8] sm:$0xff]
        %v1014 = vld [vmem:[%s2 + $0xf0] sm:$0xff]
        %v1015 = vld [vmem:[%s2 + $0xf8] sm:$0xff]
        %v1016 = vld [vmem:[%s2 + $0x100] sm:$0xff]
        %v1017 = vld [vmem:[%s2 + $0x108] sm:$0xff]
        %v1018 = vld [vmem:[%s2 + $0x110] sm:$0xff]
        %v1019 = vld [vmem:[%s2 + $0x118] sm:$0xff]
        %v1020 = vld [vmem:[%s2 + $0x120] sm:$0xff]
        %v1021 = vld [vmem:[%s2 + $0x128] sm:$0xff]
        %v1022 = vld [vmem:[%s2 + $0x130] sm:$0xff]
        %v1023 = vld [vmem:[%s2 + $0x138] sm:$0xff]
        %v1024 = vld [vmem:[%s2 + $0x140] sm:$0xff]
        %v1025 = vld [vmem:[%s2 + $0x148] sm:$0xff]
        %v1026 = vld [vmem:[%s2 + $0x150] sm:$0xff]
        %v1027 = vld [vmem:[%s2 + $0x158] sm:$0xff]
        %v1028 = vld [vmem:[%s2 + $0x160] sm:$0xff]
        %v1029 = vld [vmem:[%s2 + $0x168] sm:$0xff]
        %v1030 = vld [vmem:[%s2 + $0x170] sm:$0xff]
        %v1031 = vld [vmem:[%s2 + $0x178] sm:$0xff]
        %v1032 = vld [vmem:[%s2 + $0x180] sm:$0xff]
        %v1033 = vld [vmem:[%s2 + $0x188] sm:$0xff]
        %v1034 = vld [vmem:[%s2 + $0x190] sm:$0xff]
        %v1035 = vld [vmem:[%s2 + $0x198] sm:$0xff]
        %v1036 = vld [vmem:[%s2 + $0x1a0] sm:$0xff]
        %v1037 = vld [vmem:[%s2 + $0x1a8] sm:$0xff]
        %v1038 = vld [vmem:[%s2 + $0x1b0] sm:$0xff]
        %v1039 = vld [vmem:[%s2 + $0x1b8] sm:$0xff]
        %v1040 = vld [vmem:[%s2 + $0x1c0] sm:$0xff]
        %v1041 = vld [vmem:[%s2 + $0x1c8] sm:$0xff]
        %v1042 = vld [vmem:[%s2 + $0x1d0] sm:$0xff]
        %v1043 = vld [vmem:[%s2 + $0x1d8] sm:$0xff]
        %v1044 = vld [vmem:[%s2 + $0x1e0] sm:$0xff]
        %v1045 = vld [vmem:[%s2 + $0x1e8] sm:$0xff]
        %v1046 = vld [vmem:[%s2 + $0x1f0] sm:$0xff]
        %v1047 = vld [vmem:[%s2 + $0x1f8] sm:$0xff]
        %v1048 = vld [vmem:[%s3] sm:$0xf]
        %v1050 = vlaneseq
        %v1051 = vshrl.u32 %v1050, 7
        %v1052 = vsub.s32 0, %v1051
        %v1053 = vrot.slane %v1048, %v1052
        %v1054 = vlaneseq
        %v1055 = vshrl.u32 %v1054, 7
        %v1056 = vsub.s32 1, %v1055
        %v1057 = vrot.slane %v1048, %v1056
        %v1058 = vlaneseq
        %v1059 = vshrl.u32 %v1058, 7
        %v1060 = vsub.s32 2, %v1059
        %v1061 = vrot.slane %v1048, %v1060
        %v1062 = vlaneseq
        %v1063 = vshrl.u32 %v1062, 7
        %v1064 = vsub.s32 3, %v1063
        %v1065 = vrot.slane %v1048, %v1064
        %v1134 = vunpack.c.l.b16 %v984
        %v1135 = vunpack.c.h.b16 %v984
        %v1136 = vunpack.c.l.b16 %v985
        %v1137 = vunpack.c.h.b16 %v985
        %v1138 = vunpack.c.l.b16 %v986
        %v1139 = vunpack.c.h.b16 %v986
        %v1140 = vunpack.c.l.b16 %v987
        %v1141 = vunpack.c.h.b16 %v987
        %v1142 = vunpack.c.l.b16 %v988
        %v1143 = vunpack.c.h.b16 %v988
        %v1144 = vunpack.c.l.b16 %v989
        %v1145 = vunpack.c.h.b16 %v989
        %v1146 = vunpack.c.l.b16 %v990
        %v1147 = vunpack.c.h.b16 %v990
        %v1148 = vunpack.c.l.b16 %v991
        %v1149 = vunpack.c.h.b16 %v991
        %v1150 = vunpack.c.l.b16 %v992
        %v1151 = vunpack.c.h.b16 %v992
        %v1152 = vunpack.c.l.b16 %v993
        %v1153 = vunpack.c.h.b16 %v993
        %v1154 = vunpack.c.l.b16 %v994
        %v1155 = vunpack.c.h.b16 %v994
        %v1156 = vunpack.c.l.b16 %v995
        %v1157 = vunpack.c.h.b16 %v995
        %v1158 = vunpack.c.l.b16 %v996
        %v1159 = vunpack.c.h.b16 %v996
        %v1160 = vunpack.c.l.b16 %v997
        %v1161 = vunpack.c.h.b16 %v997
        %v1162 = vunpack.c.l.b16 %v998
        %v1163 = vunpack.c.h.b16 %v998
        %v1164 = vunpack.c.l.b16 %v999
        %v1165 = vunpack.c.h.b16 %v999
        %v1166 = vunpack.c.l.b16 %v1000
        %v1167 = vunpack.c.h.b16 %v1000
        %v1168 = vunpack.c.l.b16 %v1001
        %v1169 = vunpack.c.h.b16 %v1001
        %v1170 = vunpack.c.l.b16 %v1002
        %v1171 = vunpack.c.h.b16 %v1002
        %v1172 = vunpack.c.l.b16 %v1003
        %v1173 = vunpack.c.h.b16 %v1003
        %v1174 = vunpack.c.l.b16 %v1004
        %v1175 = vunpack.c.h.b16 %v1004
        %v1176 = vunpack.c.l.b16 %v1005
        %v1177 = vunpack.c.h.b16 %v1005
        %v1178 = vunpack.c.l.b16 %v1006
        %v1179 = vunpack.c.h.b16 %v1006
        %v1180 = vunpack.c.l.b16 %v1007
        %v1181 = vunpack.c.h.b16 %v1007
        %v1182 = vunpack.c.l.b16 %v1008
        %v1183 = vunpack.c.h.b16 %v1008
        %v1184 = vunpack.c.l.b16 %v1009
        %v1185 = vunpack.c.h.b16 %v1009
        %v1186 = vunpack.c.l.b16 %v1010
        %v1187 = vunpack.c.h.b16 %v1010
        %v1188 = vunpack.c.l.b16 %v1011
        %v1189 = vunpack.c.h.b16 %v1011
        %v1190 = vunpack.c.l.b16 %v1012
        %v1191 = vunpack.c.h.b16 %v1012
        %v1192 = vunpack.c.l.b16 %v1013
        %v1193 = vunpack.c.h.b16 %v1013
        %v1194 = vunpack.c.l.b16 %v1014
        %v1195 = vunpack.c.h.b16 %v1014
        %v1196 = vunpack.c.l.b16 %v1015
        %v1197 = vunpack.c.h.b16 %v1015
        %v1198 = vunpack.c.l.b16 %v1016
        %v1199 = vunpack.c.h.b16 %v1016
        %v1200 = vunpack.c.l.b16 %v1017
        %v1201 = vunpack.c.h.b16 %v1017
        %v1202 = vunpack.c.l.b16 %v1018
        %v1203 = vunpack.c.h.b16 %v1018
        %v1204 = vunpack.c.l.b16 %v1019
        %v1205 = vunpack.c.h.b16 %v1019
        %v1206 = vunpack.c.l.b16 %v1020
        %v1207 = vunpack.c.h.b16 %v1020
        %v1208 = vunpack.c.l.b16 %v1021
        %v1209 = vunpack.c.h.b16 %v1021
        %v1210 = vunpack.c.l.b16 %v1022
        %v1211 = vunpack.c.h.b16 %v1022
        %v1212 = vunpack.c.l.b16 %v1023
        %v1213 = vunpack.c.h.b16 %v1023
        %v1214 = vunpack.c.l.b16 %v1024
        %v1215 = vunpack.c.h.b16 %v1024
        %v1216 = vunpack.c.l.b16 %v1025
        %v1217 = vunpack.c.h.b16 %v1025
        %v1218 = vunpack.c.l.b16 %v1026
        %v1219 = vunpack.c.h.b16 %v1026
        %v1220 = vunpack.c.l.b16 %v1027
        %v1221 = vunpack.c.h.b16 %v1027
        %v1222 = vunpack.c.l.b16 %v1028
        %v1223 = vunpack.c.h.b16 %v1028
        %v1224 = vunpack.c.l.b16 %v1029
        %v1225 = vunpack.c.h.b16 %v1029
        %v1226 = vunpack.c.l.b16 %v1030
        %v1227 = vunpack.c.h.b16 %v1030
        %v1228 = vunpack.c.l.b16 %v1031
        %v1229 = vunpack.c.h.b16 %v1031
        %v1230 = vunpack.c.l.b16 %v1032
        %v1231 = vunpack.c.h.b16 %v1032
        %v1232 = vunpack.c.l.b16 %v1033
        %v1233 = vunpack.c.h.b16 %v1033
        %v1234 = vunpack.c.l.b16 %v1034
        %v1235 = vunpack.c.h.b16 %v1034
        %v1236 = vunpack.c.l.b16 %v1035
        %v1237 = vunpack.c.h.b16 %v1035
        %v1238 = vunpack.c.l.b16 %v1036
        %v1239 = vunpack.c.h.b16 %v1036
        %v1240 = vunpack.c.l.b16 %v1037
        %v1241 = vunpack.c.h.b16 %v1037
        %v1242 = vunpack.c.l.b16 %v1038
        %v1243 = vunpack.c.h.b16 %v1038
        %v1244 = vunpack.c.l.b16 %v1039
        %v1245 = vunpack.c.h.b16 %v1039
        %v1246 = vunpack.c.l.b16 %v1040
        %v1247 = vunpack.c.h.b16 %v1040
        %v1248 = vunpack.c.l.b16 %v1041
        %v1249 = vunpack.c.h.b16 %v1041
        %v1250 = vunpack.c.l.b16 %v1042
        %v1251 = vunpack.c.h.b16 %v1042
        %v1252 = vunpack.c.l.b16 %v1043
        %v1253 = vunpack.c.h.b16 %v1043
        %v1254 = vunpack.c.l.b16 %v1044
        %v1255 = vunpack.c.h.b16 %v1044
        %v1256 = vunpack.c.l.b16 %v1045
        %v1257 = vunpack.c.h.b16 %v1045
        %v1258 = vunpack.c.l.b16 %v1046
        %v1259 = vunpack.c.h.b16 %v1046
        %v1260 = vunpack.c.l.b16 %v1047
        %v1261 = vunpack.c.h.b16 %v1047
        %v1262 = vpack.c.b16 %v1138, %v1134
        %v1263 = vpack.c.b16 %v1139, %v1135
        %v1264 = vpack.c.b16 %v1140, %v1136
        %v1265 = vpack.c.b16 %v1141, %v1137
        %v1266 = vpack.c.b16 %v1146, %v1142
        %v1267 = vpack.c.b16 %v1147, %v1143
        %v1268 = vpack.c.b16 %v1148, %v1144
        %v1269 = vpack.c.b16 %v1149, %v1145
        %v1270 = vpack.c.b16 %v1154, %v1150
        %v1271 = vpack.c.b16 %v1155, %v1151
        %v1272 = vpack.c.b16 %v1156, %v1152
        %v1273 = vpack.c.b16 %v1157, %v1153
        %v1274 = vpack.c.b16 %v1162, %v1158
        %v1275 = vpack.c.b16 %v1163, %v1159
        %v1276 = vpack.c.b16 %v1164, %v1160
        %v1277 = vpack.c.b16 %v1165, %v1161
        %v1278 = vpack.c.b16 %v1170, %v1166
        %v1279 = vpack.c.b16 %v1171, %v1167
        %v1280 = vpack.c.b16 %v1172, %v1168
        %v1281 = vpack.c.b16 %v1173, %v1169
        %v1282 = vpack.c.b16 %v1178, %v1174
        %v1283 = vpack.c.b16 %v1179, %v1175
        %v1284 = vpack.c.b16 %v1180, %v1176
        %v1285 = vpack.c.b16 %v1181, %v1177
        %v1286 = vpack.c.b16 %v1186, %v1182
        %v1287 = vpack.c.b16 %v1187, %v1183
        %v1288 = vpack.c.b16 %v1188, %v1184
        %v1289 = vpack.c.b16 %v1189, %v1185
        %v1290 = vpack.c.b16 %v1194, %v1190
        %v1291 = vpack.c.b16 %v1195, %v1191
        %v1292 = vpack.c.b16 %v1196, %v1192
        %v1293 = vpack.c.b16 %v1197, %v1193
        %v1294 = vpack.c.b16 %v1202, %v1198
        %v1295 = vpack.c.b16 %v1203, %v1199
        %v1296 = vpack.c.b16 %v1204, %v1200
        %v1297 = vpack.c.b16 %v1205, %v1201
        %v1298 = vpack.c.b16 %v1210, %v1206
        %v1299 = vpack.c.b16 %v1211, %v1207
        %v1300 = vpack.c.b16 %v1212, %v1208
        %v1301 = vpack.c.b16 %v1213, %v1209
        %v1302 = vpack.c.b16 %v1218, %v1214
        %v1303 = vpack.c.b16 %v1219, %v1215
        %v1304 = vpack.c.b16 %v1220, %v1216
        %v1305 = vpack.c.b16 %v1221, %v1217
        %v1306 = vpack.c.b16 %v1226, %v1222
        %v1307 = vpack.c.b16 %v1227, %v1223
        %v1308 = vpack.c.b16 %v1228, %v1224
        %v1309 = vpack.c.b16 %v1229, %v1225
        %v1310 = vpack.c.b16 %v1234, %v1230
        %v1311 = vpack.c.b16 %v1235, %v1231
        %v1312 = vpack.c.b16 %v1236, %v1232
        %v1313 = vpack.c.b16 %v1237, %v1233
        %v1314 = vpack.c.b16 %v1242, %v1238
        %v1315 = vpack.c.b16 %v1243, %v1239
        %v1316 = vpack.c.b16 %v1244, %v1240
        %v1317 = vpack.c.b16 %v1245, %v1241
        %v1318 = vpack.c.b16 %v1250, %v1246
        %v1319 = vpack.c.b16 %v1251, %v1247
        %v1320 = vpack.c.b16 %v1252, %v1248
        %v1321 = vpack.c.b16 %v1253, %v1249
        %v1322 = vpack.c.b16 %v1258, %v1254
        %v1323 = vpack.c.b16 %v1259, %v1255
        %v1324 = vpack.c.b16 %v1260, %v1256
        %v1325 = vpack.c.b16 %v1261, %v1257
        %1390 = vmatprep.subr.bf16.mxu0 %v1263
        %1391 = vmatpush1.bf16.msra.mxu0 %v1262
        %1392 = vmatprep.subr.bf16.mxu0 %v1267
        %1393 = vmatpush1.bf16.msra.mxu0 %v1266
        %1394 = vmatprep.subr.bf16.mxu0 %v1271
        %1395 = vmatpush1.bf16.msra.mxu0 %v1270
        %1396 = vmatprep.subr.bf16.mxu0 %v1275
        %1397 = vmatpush1.bf16.msra.mxu0 %v1274
        %1398 = vmatprep.subr.bf16.mxu0 %v1279
        %1399 = vmatpush1.bf16.msra.mxu0 %v1278
        %1400 = vmatprep.subr.bf16.mxu0 %v1283
        %1401 = vmatpush1.bf16.msra.mxu0 %v1282
        %1402 = vmatprep.subr.bf16.mxu0 %v1287
        %1403 = vmatpush1.bf16.msra.mxu0 %v1286
        %1404 = vmatprep.subr.bf16.mxu0 %v1291
        %1405 = vmatpush1.bf16.msra.mxu0 %v1290
        %1406 = vmatprep.subr.bf16.mxu0 %v1295
        %1407 = vmatpush1.bf16.msra.mxu0 %v1294
        %1408 = vmatprep.subr.bf16.mxu0 %v1299
        %1409 = vmatpush1.bf16.msra.mxu0 %v1298
        %1410 = vmatprep.subr.bf16.mxu0 %v1303
        %1411 = vmatpush1.bf16.msra.mxu0 %v1302
        %1412 = vmatprep.subr.bf16.mxu0 %v1307
        %1413 = vmatpush1.bf16.msra.mxu0 %v1306
        %1414 = vmatprep.subr.bf16.mxu0 %v1311
        %1415 = vmatpush1.bf16.msra.mxu0 %v1310
        %1416 = vmatprep.subr.bf16.mxu0 %v1315
        %1417 = vmatpush1.bf16.msra.mxu0 %v1314
        %1418 = vmatprep.subr.bf16.mxu0 %v1319
        %1419 = vmatpush1.bf16.msra.mxu0 %v1318
        %1420 = vmatprep.subr.bf16.mxu0 %v1323
        %1421 = vmatpush1.bf16.msra.mxu0 %v1322
        %1422 = vmatprep.mubr.bf16.mxu0 %v969
        %1423 = vmatmul.mubr.bf16.gmra.mrb[0].mxu0 %v968
        %v1424 = vpop.f32.mrb[0].mxu0
        %v1425 = vadd.f32 %v1053, %v1424
        %v1426 = vpop.f32.mrb[0].mxu0
        %v1427 = vadd.f32 %v1057, %v1426
        %v1428 = vpop.f32.mrb[0].mxu0
        %v1429 = vadd.f32 %v1053, %v1428
        %v1430 = vpop.f32.mrb[0].mxu0
        %v1431 = vadd.f32 %v1057, %v1430
        %1432 = vmatprep.mubr.bf16.mxu0 %v971
        %1433 = vmatmul.mubr.bf16.gmra.mrb[0].mxu0 %v970
        %v1434 = vpop.f32.mrb[0].mxu0
        %v1435 = vadd.f32 %v1053, %v1434
        %v1436 = vpop.f32.mrb[0].mxu0
        %v1437 = vadd.f32 %v1057, %v1436
        %v1438 = vpop.f32.mrb[0].mxu0
        %v1439 = vadd.f32 %v1053, %v1438
        %v1440 = vpop.f32.mrb[0].mxu0
        %v1441 = vadd.f32 %v1057, %v1440
        %1442 = vmatprep.mubr.bf16.mxu0 %v973
        %1443 = vmatmul.mubr.bf16.gmra.mrb[0].mxu0 %v972
        %v1444 = vpop.f32.mrb[0].mxu0
        %v1445 = vadd.f32 %v1053, %v1444
        %v1446 = vpop.f32.mrb[0].mxu0
        %v1447 = vadd.f32 %v1057, %v1446
        %v1448 = vpop.f32.mrb[0].mxu0
        %v1449 = vadd.f32 %v1053, %v1448
        %v1450 = vpop.f32.mrb[0].mxu0
        %v1451 = vadd.f32 %v1057, %v1450
        %1452 = vmatprep.mubr.bf16.mxu0 %v975
        %1453 = vmatmul.mubr.bf16.gmra.mrb[0].mxu0 %v974
        %v1454 = vpop.f32.mrb[0].mxu0
        %v1455 = vadd.f32 %v1053, %v1454
        %v1456 = vpop.f32.mrb[0].mxu0
        %v1457 = vadd.f32 %v1057, %v1456
        %v1458 = vpop.f32.mrb[0].mxu0
        %v1459 = vadd.f32 %v1053, %v1458
        %v1460 = vpop.f32.mrb[0].mxu0
        %v1461 = vadd.f32 %v1057, %v1460
        %1462 = vmatprep.mubr.bf16.mxu0 %v977
        %1463 = vmatmul.mubr.bf16.gmra.mrb[0].mxu0 %v976
        %v1464 = vpop.f32.mrb[0].mxu0
        %v1465 = vadd.f32 %v1053, %v1464
        %v1466 = vpop.f32.mrb[0].mxu0
        %v1467 = vadd.f32 %v1057, %v1466
        %v1468 = vpop.f32.mrb[0].mxu0
        %v1469 = vadd.f32 %v1053, %v1468
        %v1470 = vpop.f32.mrb[0].mxu0
        %v1471 = vadd.f32 %v1057, %v1470
        %1472 = vmatprep.mubr.bf16.mxu0 %v979
        %1473 = vmatmul.mubr.bf16.gmra.mrb[0].mxu0 %v978
        %v1474 = vpop.f32.mrb[0].mxu0
        %v1475 = vadd.f32 %v1053, %v1474
        %v1476 = vpop.f32.mrb[0].mxu0
        %v1477 = vadd.f32 %v1057, %v1476
        %v1478 = vpop.f32.mrb[0].mxu0
        %v1479 = vadd.f32 %v1053, %v1478
        %v1480 = vpop.f32.mrb[0].mxu0
        %v1481 = vadd.f32 %v1057, %v1480
        %1482 = vmatprep.mubr.bf16.mxu0 %v981
        %1483 = vmatmul.mubr.bf16.gmra.mrb[0].mxu0 %v980
        %v1484 = vpop.f32.mrb[0].mxu0
        %v1485 = vadd.f32 %v1053, %v1484
        %v1486 = vpop.f32.mrb[0].mxu0
        %v1487 = vadd.f32 %v1057, %v1486
        %v1488 = vpop.f32.mrb[0].mxu0
        %v1489 = vadd.f32 %v1053, %v1488
        %v1490 = vpop.f32.mrb[0].mxu0
        %v1491 = vadd.f32 %v1057, %v1490
        %1492 = vmatprep.mubr.bf16.mxu0 %v983
        %1493 = vmatmul.mubr.bf16.gmra.mrb[0].mxu0 %v982
        %v1494 = vpop.f32.mrb[0].mxu0
        %v1495 = vadd.f32 %v1053, %v1494
        %v1496 = vpop.f32.mrb[0].mxu0
        %v1497 = vadd.f32 %v1057, %v1496
        %v1498 = vpop.f32.mrb[0].mxu0
        %v1499 = vadd.f32 %v1053, %v1498
        %v1500 = vpop.f32.mrb[0].mxu0
        %v1501 = vadd.f32 %v1057, %v1500
        %1502 = vdwg.mxu0
        %1503 = vmatprep.subr.bf16.mxu0 %v1265
        %1504 = vmatpush1.bf16.msra.mxu0 %v1264
        %1505 = vmatprep.subr.bf16.mxu0 %v1269
        %1506 = vmatpush1.bf16.msra.mxu0 %v1268
        %1507 = vmatprep.subr.bf16.mxu0 %v1273
        %1508 = vmatpush1.bf16.msra.mxu0 %v1272
        %1509 = vmatprep.subr.bf16.mxu0 %v1277
        %1510 = vmatpush1.bf16.msra.mxu0 %v1276
        %1511 = vmatprep.subr.bf16.mxu0 %v1281
        %1512 = vmatpush1.bf16.msra.mxu0 %v1280
        %1513 = vmatprep.subr.bf16.mxu0 %v1285
        %1514 = vmatpush1.bf16.msra.mxu0 %v1284
        %1515 = vmatprep.subr.bf16.mxu0 %v1289
        %1516 = vmatpush1.bf16.msra.mxu0 %v1288
        %1517 = vmatprep.subr.bf16.mxu0 %v1293
        %1518 = vmatpush1.bf16.msra.mxu0 %v1292
        %1519 = vmatprep.subr.bf16.mxu0 %v1297
        %1520 = vmatpush1.bf16.msra.mxu0 %v1296
        %1521 = vmatprep.subr.bf16.mxu0 %v1301
        %1522 = vmatpush1.bf16.msra.mxu0 %v1300
        %1523 = vmatprep.subr.bf16.mxu0 %v1305
        %1524 = vmatpush1.bf16.msra.mxu0 %v1304
        %1525 = vmatprep.subr.bf16.mxu0 %v1309
        %1526 = vmatpush1.bf16.msra.mxu0 %v1308
        %1527 = vmatprep.subr.bf16.mxu0 %v1313
        %1528 = vmatpush1.bf16.msra.mxu0 %v1312
        %1529 = vmatprep.subr.bf16.mxu0 %v1317
        %1530 = vmatpush1.bf16.msra.mxu0 %v1316
        %1531 = vmatprep.subr.bf16.mxu0 %v1321
        %1532 = vmatpush1.bf16.msra.mxu0 %v1320
        %1533 = vmatprep.subr.bf16.mxu0 %v1325
        %1534 = vmatpush1.bf16.msra.mxu0 %v1324
        %1535 = vmatprep.mubr.bf16.mxu0 %v969
        %1536 = vmatmul.mubr.bf16.gmra.mrb[0].mxu0 %v968
        %v1537 = vpop.f32.mrb[0].mxu0
        %v1538 = vadd.f32 %v1061, %v1537
        %v1539 = vpop.f32.mrb[0].mxu0
        %v1540 = vadd.f32 %v1065, %v1539
        %v1541 = vpop.f32.mrb[0].mxu0
        %v1542 = vadd.f32 %v1061, %v1541
        %v1543 = vpop.f32.mrb[0].mxu0
        %v1544 = vadd.f32 %v1065, %v1543
        %1545 = vmatprep.mubr.bf16.mxu0 %v971
        %1546 = vmatmul.mubr.bf16.gmra.mrb[0].mxu0 %v970
        %v1547 = vpop.f32.mrb[0].mxu0
        %v1548 = vadd.f32 %v1061, %v1547
        %v1549 = vpop.f32.mrb[0].mxu0
        %v1550 = vadd.f32 %v1065, %v1549
        %v1551 = vpop.f32.mrb[0].mxu0
        %v1552 = vadd.f32 %v1061, %v1551
        %v1553 = vpop.f32.mrb[0].mxu0
        %v1554 = vadd.f32 %v1065, %v1553
        %1555 = vmatprep.mubr.bf16.mxu0 %v973
        %1556 = vmatmul.mubr.bf16.gmra.mrb[0].mxu0 %v972
        %v1557 = vpop.f32.mrb[0].mxu0
        %v1558 = vadd.f32 %v1061, %v1557
        %v1559 = vpop.f32.mrb[0].mxu0
        %v1560 = vadd.f32 %v1065, %v1559
        %v1561 = vpop.f32.mrb[0].mxu0
        %v1562 = vadd.f32 %v1061, %v1561
        %v1563 = vpop.f32.mrb[0].mxu0
        %v1564 = vadd.f32 %v1065, %v1563
        %1565 = vmatprep.mubr.bf16.mxu0 %v975
        %1566 = vmatmul.mubr.bf16.gmra.mrb[0].mxu0 %v974
        %v1567 = vpop.f32.mrb[0].mxu0
        %v1568 = vadd.f32 %v1061, %v1567
        %v1569 = vpop.f32.mrb[0].mxu0
        %v1570 = vadd.f32 %v1065, %v1569
        %v1571 = vpop.f32.mrb[0].mxu0
        %v1572 = vadd.f32 %v1061, %v1571
        %v1573 = vpop.f32.mrb[0].mxu0
        %v1574 = vadd.f32 %v1065, %v1573
        %1575 = vmatprep.mubr.bf16.mxu0 %v977
        %1576 = vmatmul.mubr.bf16.gmra.mrb[0].mxu0 %v976
        %v1577 = vpop.f32.mrb[0].mxu0
        %v1578 = vadd.f32 %v1061, %v1577
        %v1579 = vpop.f32.mrb[0].mxu0
        %v1580 = vadd.f32 %v1065, %v1579
        %v1581 = vpop.f32.mrb[0].mxu0
        %v1582 = vadd.f32 %v1061, %v1581
        %v1583 = vpop.f32.mrb[0].mxu0
        %v1584 = vadd.f32 %v1065, %v1583
        %1585 = vmatprep.mubr.bf16.mxu0 %v979
        %1586 = vmatmul.mubr.bf16.gmra.mrb[0].mxu0 %v978
        %v1587 = vpop.f32.mrb[0].mxu0
        %v1588 = vadd.f32 %v1061, %v1587
        %v1589 = vpop.f32.mrb[0].mxu0
        %v1590 = vadd.f32 %v1065, %v1589
        %v1591 = vpop.f32.mrb[0].mxu0
        %v1592 = vadd.f32 %v1061, %v1591
        %v1593 = vpop.f32.mrb[0].mxu0
        %v1594 = vadd.f32 %v1065, %v1593
        %1595 = vmatprep.mubr.bf16.mxu0 %v981
        %1596 = vmatmul.mubr.bf16.gmra.mrb[0].mxu0 %v980
        %v1597 = vpop.f32.mrb[0].mxu0
        %v1598 = vadd.f32 %v1061, %v1597
        %v1599 = vpop.f32.mrb[0].mxu0
        %v1600 = vadd.f32 %v1065, %v1599
        %v1601 = vpop.f32.mrb[0].mxu0
        %v1602 = vadd.f32 %v1061, %v1601
        %v1603 = vpop.f32.mrb[0].mxu0
        %v1604 = vadd.f32 %v1065, %v1603
        %1605 = vmatprep.mubr.bf16.mxu0 %v983
        %1606 = vmatmul.mubr.bf16.gmra.mrb[0].mxu0 %v982
        %v1607 = vpop.f32.mrb[0].mxu0
        %v1608 = vadd.f32 %v1061, %v1607
        %v1609 = vpop.f32.mrb[0].mxu0
        %v1610 = vadd.f32 %v1065, %v1609
        %v1611 = vpop.f32.mrb[0].mxu0
        %v1612 = vadd.f32 %v1061, %v1611
        %v1613 = vpop.f32.mrb[0].mxu0
        %v1614 = vadd.f32 %v1065, %v1613
        %1615 = vdwg.mxu0
        %vm1616 = vcmp.gt.f32.partialorder %v1425, 0.0
        %vm1617 = vcmp.gt.f32.partialorder %v1427, 0.0
        %vm1618 = vcmp.gt.f32.partialorder %v1538, 0.0
        %vm1619 = vcmp.gt.f32.partialorder %v1540, 0.0
        %vm1620 = vcmp.gt.f32.partialorder %v1429, 0.0
        %vm1621 = vcmp.gt.f32.partialorder %v1431, 0.0
        %vm1622 = vcmp.gt.f32.partialorder %v1542, 0.0
        %vm1623 = vcmp.gt.f32.partialorder %v1544, 0.0
        %vm1624 = vcmp.gt.f32.partialorder %v1435, 0.0
        %vm1625 = vcmp.gt.f32.partialorder %v1437, 0.0
        %vm1626 = vcmp.gt.f32.partialorder %v1548, 0.0
        %vm1627 = vcmp.gt.f32.partialorder %v1550, 0.0
        %vm1628 = vcmp.gt.f32.partialorder %v1439, 0.0
        %vm1629 = vcmp.gt.f32.partialorder %v1441, 0.0
        %vm1630 = vcmp.gt.f32.partialorder %v1552, 0.0
        %vm1631 = vcmp.gt.f32.partialorder %v1554, 0.0
        %vm1632 = vcmp.gt.f32.partialorder %v1445, 0.0
        %vm1633 = vcmp.gt.f32.partialorder %v1447, 0.0
        %vm1634 = vcmp.gt.f32.partialorder %v1558, 0.0
        %vm1635 = vcmp.gt.f32.partialorder %v1560, 0.0
        %vm1636 = vcmp.gt.f32.partialorder %v1449, 0.0
        %vm1637 = vcmp.gt.f32.partialorder %v1451, 0.0
        %vm1638 = vcmp.gt.f32.partialorder %v1562, 0.0
        %vm1639 = vcmp.gt.f32.partialorder %v1564, 0.0
        %vm1640 = vcmp.gt.f32.partialorder %v1455, 0.0
        %vm1641 = vcmp.gt.f32.partialorder %v1457, 0.0
        %vm1642 = vcmp.gt.f32.partialorder %v1568, 0.0
        %vm1643 = vcmp.gt.f32.partialorder %v1570, 0.0
        %vm1644 = vcmp.gt.f32.partialorder %v1459, 0.0
        %vm1645 = vcmp.gt.f32.partialorder %v1461, 0.0
        %vm1646 = vcmp.gt.f32.partialorder %v1572, 0.0
        %vm1647 = vcmp.gt.f32.partialorder %v1574, 0.0
        %vm1648 = vcmp.gt.f32.partialorder %v1465, 0.0
        %vm1649 = vcmp.gt.f32.partialorder %v1467, 0.0
        %vm1650 = vcmp.gt.f32.partialorder %v1578, 0.0
        %vm1651 = vcmp.gt.f32.partialorder %v1580, 0.0
        %vm1652 = vcmp.gt.f32.partialorder %v1469, 0.0
        %vm1653 = vcmp.gt.f32.partialorder %v1471, 0.0
        %vm1654 = vcmp.gt.f32.partialorder %v1582, 0.0
        %vm1655 = vcmp.gt.f32.partialorder %v1584, 0.0
        %vm1656 = vcmp.gt.f32.partialorder %v1475, 0.0
        %vm1657 = vcmp.gt.f32.partialorder %v1477, 0.0
        %vm1658 = vcmp.gt.f32.partialorder %v1588, 0.0
        %vm1659 = vcmp.gt.f32.partialorder %v1590, 0.0
        %vm1660 = vcmp.gt.f32.partialorder %v1479, 0.0
        %vm1661 = vcmp.gt.f32.partialorder %v1481, 0.0
        %vm1662 = vcmp.gt.f32.partialorder %v1592, 0.0
        %vm1663 = vcmp.gt.f32.partialorder %v1594, 0.0
        %vm1664 = vcmp.gt.f32.partialorder %v1485, 0.0
        %vm1665 = vcmp.gt.f32.partialorder %v1487, 0.0
        %vm1666 = vcmp.gt.f32.partialorder %v1598, 0.0
        %vm1667 = vcmp.gt.f32.partialorder %v1600, 0.0
        %vm1668 = vcmp.gt.f32.partialorder %v1489, 0.0
        %vm1669 = vcmp.gt.f32.partialorder %v1491, 0.0
        %vm1670 = vcmp.gt.f32.partialorder %v1602, 0.0
        %vm1671 = vcmp.gt.f32.partialorder %v1604, 0.0
        %vm1672 = vcmp.gt.f32.partialorder %v1495, 0.0
        %vm1673 = vcmp.gt.f32.partialorder %v1497, 0.0
        %vm1674 = vcmp.gt.f32.partialorder %v1608, 0.0
        %vm1675 = vcmp.gt.f32.partialorder %v1610, 0.0
        %vm1676 = vcmp.gt.f32.partialorder %v1499, 0.0
        %vm1677 = vcmp.gt.f32.partialorder %v1501, 0.0
        %vm1678 = vcmp.gt.f32.partialorder %v1612, 0.0
        %vm1679 = vcmp.gt.f32.partialorder %v1614, 0.0
        %v1680 = vmul.f32 %v1425, 0.01
        %v1681 = vmul.f32 %v1427, 0.01
        %v1682 = vmul.f32 %v1538, 0.01
        %v1683 = vmul.f32 %v1540, 0.01
        %v1684 = vmul.f32 %v1429, 0.01
        %v1685 = vmul.f32 %v1431, 0.01
        %v1686 = vmul.f32 %v1542, 0.01
        %v1687 = vmul.f32 %v1544, 0.01
        %v1688 = vmul.f32 %v1435, 0.01
        %v1689 = vmul.f32 %v1437, 0.01
        %v1690 = vmul.f32 %v1548, 0.01
        %v1691 = vmul.f32 %v1550, 0.01
        %v1692 = vmul.f32 %v1439, 0.01
        %v1693 = vmul.f32 %v1441, 0.01
        %v1694 = vmul.f32 %v1552, 0.01
        %v1695 = vmul.f32 %v1554, 0.01
        %v1696 = vmul.f32 %v1445, 0.01
        %v1697 = vmul.f32 %v1447, 0.01
        %v1698 = vmul.f32 %v1558, 0.01
        %v1699 = vmul.f32 %v1560, 0.01
        %v1700 = vmul.f32 %v1449, 0.01
        %v1701 = vmul.f32 %v1451, 0.01
        %v1702 = vmul.f32 %v1562, 0.01
        %v1703 = vmul.f32 %v1564, 0.01
        %v1704 = vmul.f32 %v1455, 0.01
        %v1705 = vmul.f32 %v1457, 0.01
        %v1706 = vmul.f32 %v1568, 0.01
        %v1707 = vmul.f32 %v1570, 0.01
        %v1708 = vmul.f32 %v1459, 0.01
        %v1709 = vmul.f32 %v1461, 0.01
        %v1710 = vmul.f32 %v1572, 0.01
        %v1711 = vmul.f32 %v1574, 0.01
        %v1712 = vmul.f32 %v1465, 0.01
        %v1713 = vmul.f32 %v1467, 0.01
        %v1714 = vmul.f32 %v1578, 0.01
        %v1715 = vmul.f32 %v1580, 0.01
        %v1716 = vmul.f32 %v1469, 0.01
        %v1717 = vmul.f32 %v1471, 0.01
        %v1718 = vmul.f32 %v1582, 0.01
        %v1719 = vmul.f32 %v1584, 0.01
        %v1720 = vmul.f32 %v1475, 0.01
        %v1721 = vmul.f32 %v1477, 0.01
        %v1722 = vmul.f32 %v1588, 0.01
        %v1723 = vmul.f32 %v1590, 0.01
        %v1724 = vmul.f32 %v1479, 0.01
        %v1725 = vmul.f32 %v1481, 0.01
        %v1726 = vmul.f32 %v1592, 0.01
        %v1727 = vmul.f32 %v1594, 0.01
        %v1728 = vmul.f32 %v1485, 0.01
        %v1729 = vmul.f32 %v1487, 0.01
        %v1730 = vmul.f32 %v1598, 0.01
        %v1731 = vmul.f32 %v1600, 0.01
        %v1732 = vmul.f32 %v1489, 0.01
        %v1733 = vmul.f32 %v1491, 0.01
        %v1734 = vmul.f32 %v1602, 0.01
        %v1735 = vmul.f32 %v1604, 0.01
        %v1736 = vmul.f32 %v1495, 0.01
        %v1737 = vmul.f32 %v1497, 0.01
        %v1738 = vmul.f32 %v1608, 0.01
        %v1739 = vmul.f32 %v1610, 0.01
        %v1740 = vmul.f32 %v1499, 0.01
        %v1741 = vmul.f32 %v1501, 0.01
        %v1742 = vmul.f32 %v1612, 0.01
        %v1743 = vmul.f32 %v1614, 0.01
        %v1744 = vsel %vm1616, %v1425, %v1680
        %v1745 = vsel %vm1617, %v1427, %v1681
        %v1746 = vsel %vm1618, %v1538, %v1682
        %v1747 = vsel %vm1619, %v1540, %v1683
        %v1748 = vsel %vm1620, %v1429, %v1684
        %v1749 = vsel %vm1621, %v1431, %v1685
        %v1750 = vsel %vm1622, %v1542, %v1686
        %v1751 = vsel %vm1623, %v1544, %v1687
        %v1752 = vsel %vm1624, %v1435, %v1688
        %v1753 = vsel %vm1625, %v1437, %v1689
        %v1754 = vsel %vm1626, %v1548, %v1690
        %v1755 = vsel %vm1627, %v1550, %v1691
        %v1756 = vsel %vm1628, %v1439, %v1692
        %v1757 = vsel %vm1629, %v1441, %v1693
        %v1758 = vsel %vm1630, %v1552, %v1694
        %v1759 = vsel %vm1631, %v1554, %v1695
        %v1760 = vsel %vm1632, %v1445, %v1696
        %v1761 = vsel %vm1633, %v1447, %v1697
        %v1762 = vsel %vm1634, %v1558, %v1698
        %v1763 = vsel %vm1635, %v1560, %v1699
        %v1764 = vsel %vm1636, %v1449, %v1700
        %v1765 = vsel %vm1637, %v1451, %v1701
        %v1766 = vsel %vm1638, %v1562, %v1702
        %v1767 = vsel %vm1639, %v1564, %v1703
        %v1768 = vsel %vm1640, %v1455, %v1704
        %v1769 = vsel %vm1641, %v1457, %v1705
        %v1770 = vsel %vm1642, %v1568, %v1706
        %v1771 = vsel %vm1643, %v1570, %v1707
        %v1772 = vsel %vm1644, %v1459, %v1708
        %v1773 = vsel %vm1645, %v1461, %v1709
        %v1774 = vsel %vm1646, %v1572, %v1710
        %v1775 = vsel %vm1647, %v1574, %v1711
        %v1776 = vsel %vm1648, %v1465, %v1712
        %v1777 = vsel %vm1649, %v1467, %v1713
        %v1778 = vsel %vm1650, %v1578, %v1714
        %v1779 = vsel %vm1651, %v1580, %v1715
        %v1780 = vsel %vm1652, %v1469, %v1716
        %v1781 = vsel %vm1653, %v1471, %v1717
        %v1782 = vsel %vm1654, %v1582, %v1718
        %v1783 = vsel %vm1655, %v1584, %v1719
        %v1784 = vsel %vm1656, %v1475, %v1720
        %v1785 = vsel %vm1657, %v1477, %v1721
        %v1786 = vsel %vm1658, %v1588, %v1722
        %v1787 = vsel %vm1659, %v1590, %v1723
        %v1788 = vsel %vm1660, %v1479, %v1724
        %v1789 = vsel %vm1661, %v1481, %v1725
        %v1790 = vsel %vm1662, %v1592, %v1726
        %v1791 = vsel %vm1663, %v1594, %v1727
        %v1792 = vsel %vm1664, %v1485, %v1728
        %v1793 = vsel %vm1665, %v1487, %v1729
        %v1794 = vsel %vm1666, %v1598, %v1730
        %v1795 = vsel %vm1667, %v1600, %v1731
        %v1796 = vsel %vm1668, %v1489, %v1732
        %v1797 = vsel %vm1669, %v1491, %v1733
        %v1798 = vsel %vm1670, %v1602, %v1734
        %v1799 = vsel %vm1671, %v1604, %v1735
        %v1800 = vsel %vm1672, %v1495, %v1736
        %v1801 = vsel %vm1673, %v1497, %v1737
        %v1802 = vsel %vm1674, %v1608, %v1738
        %v1803 = vsel %vm1675, %v1610, %v1739
        %v1804 = vsel %vm1676, %v1499, %v1740
        %v1805 = vsel %vm1677, %v1501, %v1741
        %v1806 = vsel %vm1678, %v1612, %v1742
        %v1807 = vsel %vm1679, %v1614, %v1743
        %v1808 = vpack.c.bf16 %v1748, %v1744
        %v1809 = vpack.c.bf16 %v1749, %v1745
        %v1810 = vpack.c.bf16 %v1756, %v1752
        %v1811 = vpack.c.bf16 %v1757, %v1753
        %v1812 = vpack.c.bf16 %v1764, %v1760
        %v1813 = vpack.c.bf16 %v1765, %v1761
        %v1814 = vpack.c.bf16 %v1772, %v1768
        %v1815 = vpack.c.bf16 %v1773, %v1769
        %v1816 = vpack.c.bf16 %v1780, %v1776
        %v1817 = vpack.c.bf16 %v1781, %v1777
        %v1818 = vpack.c.bf16 %v1788, %v1784
        %v1819 = vpack.c.bf16 %v1789, %v1785
        %v1820 = vpack.c.bf16 %v1796, %v1792
        %v1821 = vpack.c.bf16 %v1797, %v1793
        %v1822 = vpack.c.bf16 %v1804, %v1800
        %v1823 = vpack.c.bf16 %v1805, %v1801
        %v1824 = vld [vmem:[%s4] sm:$0xff]
        %v1825 = vld [vmem:[%s4 + $0x8] sm:$0xff]
        %v1826 = vld [vmem:[%s4 + $0x10] sm:$0xff]
        %v1827 = vld [vmem:[%s4 + $0x18] sm:$0xff]
        %v1828 = vld [vmem:[%s4 + $0x20] sm:$0xff]
        %v1829 = vld [vmem:[%s4 + $0x28] sm:$0xff]
        %v1830 = vld [vmem:[%s4 + $0x30] sm:$0xff]
        %v1831 = vld [vmem:[%s4 + $0x38] sm:$0xff]
        %v1832 = vld [vmem:[%s4 + $0x40] sm:$0xff]
        %v1833 = vld [vmem:[%s4 + $0x48] sm:$0xff]
        %v1834 = vld [vmem:[%s4 + $0x50] sm:$0xff]
        %v1835 = vld [vmem:[%s4 + $0x58] sm:$0xff]
        %v1836 = vld [vmem:[%s4 + $0x60] sm:$0xff]
        %v1837 = vld [vmem:[%s4 + $0x68] sm:$0xff]
        %v1838 = vld [vmem:[%s4 + $0x70] sm:$0xff]
        %v1839 = vld [vmem:[%s4 + $0x78] sm:$0xff]
        %v1840 = vld [vmem:[%s4 + $0x80] sm:$0xff]
        %v1841 = vld [vmem:[%s4 + $0x88] sm:$0xff]
        %v1842 = vld [vmem:[%s4 + $0x90] sm:$0xff]
        %v1843 = vld [vmem:[%s4 + $0x98] sm:$0xff]
        %v1844 = vld [vmem:[%s4 + $0xa0] sm:$0xff]
        %v1845 = vld [vmem:[%s4 + $0xa8] sm:$0xff]
        %v1846 = vld [vmem:[%s4 + $0xb0] sm:$0xff]
        %v1847 = vld [vmem:[%s4 + $0xb8] sm:$0xff]
        %v1848 = vld [vmem:[%s4 + $0xc0] sm:$0xff]
        %v1849 = vld [vmem:[%s4 + $0xc8] sm:$0xff]
        %v1850 = vld [vmem:[%s4 + $0xd0] sm:$0xff]
        %v1851 = vld [vmem:[%s4 + $0xd8] sm:$0xff]
        %v1852 = vld [vmem:[%s4 + $0xe0] sm:$0xff]
        %v1853 = vld [vmem:[%s4 + $0xe8] sm:$0xff]
        %v1854 = vld [vmem:[%s4 + $0xf0] sm:$0xff]
        %v1855 = vld [vmem:[%s4 + $0xf8] sm:$0xff]
        %v1856 = vld [vmem:[%s5] sm:$0x3]
        %v1858 = vlaneseq
        %v1859 = vshrl.u32 %v1858, 7
        %v1860 = vsub.s32 0, %v1859
        %v1861 = vrot.slane %v1856, %v1860
        %v1862 = vlaneseq
        %v1863 = vshrl.u32 %v1862, 7
        %v1864 = vsub.s32 1, %v1863
        %v1865 = vrot.slane %v1856, %v1864
        %v1900 = vunpack.c.l.b16 %v1824
        %v1901 = vunpack.c.h.b16 %v1824
        %v1902 = vunpack.c.l.b16 %v1825
        %v1903 = vunpack.c.h.b16 %v1825
        %v1904 = vunpack.c.l.b16 %v1826
        %v1905 = vunpack.c.h.b16 %v1826
        %v1906 = vunpack.c.l.b16 %v1827
        %v1907 = vunpack.c.h.b16 %v1827
        %v1908 = vunpack.c.l.b16 %v1828
        %v1909 = vunpack.c.h.b16 %v1828
        %v1910 = vunpack.c.l.b16 %v1829
        %v1911 = vunpack.c.h.b16 %v1829
        %v1912 = vunpack.c.l.b16 %v1830
        %v1913 = vunpack.c.h.b16 %v1830
        %v1914 = vunpack.c.l.b16 %v1831
        %v1915 = vunpack.c.h.b16 %v1831
        %v1916 = vunpack.c.l.b16 %v1832
        %v1917 = vunpack.c.h.b16 %v1832
        %v1918 = vunpack.c.l.b16 %v1833
        %v1919 = vunpack.c.h.b16 %v1833
        %v1920 = vunpack.c.l.b16 %v1834
        %v1921 = vunpack.c.h.b16 %v1834
        %v1922 = vunpack.c.l.b16 %v1835
        %v1923 = vunpack.c.h.b16 %v1835
        %v1924 = vunpack.c.l.b16 %v1836
        %v1925 = vunpack.c.h.b16 %v1836
        %v1926 = vunpack.c.l.b16 %v1837
        %v1927 = vunpack.c.h.b16 %v1837
        %v1928 = vunpack.c.l.b16 %v1838
        %v1929 = vunpack.c.h.b16 %v1838
        %v1930 = vunpack.c.l.b16 %v1839
        %v1931 = vunpack.c.h.b16 %v1839
        %v1932 = vunpack.c.l.b16 %v1840
        %v1933 = vunpack.c.h.b16 %v1840
        %v1934 = vunpack.c.l.b16 %v1841
        %v1935 = vunpack.c.h.b16 %v1841
        %v1936 = vunpack.c.l.b16 %v1842
        %v1937 = vunpack.c.h.b16 %v1842
        %v1938 = vunpack.c.l.b16 %v1843
        %v1939 = vunpack.c.h.b16 %v1843
        %v1940 = vunpack.c.l.b16 %v1844
        %v1941 = vunpack.c.h.b16 %v1844
        %v1942 = vunpack.c.l.b16 %v1845
        %v1943 = vunpack.c.h.b16 %v1845
        %v1944 = vunpack.c.l.b16 %v1846
        %v1945 = vunpack.c.h.b16 %v1846
        %v1946 = vunpack.c.l.b16 %v1847
        %v1947 = vunpack.c.h.b16 %v1847
        %v1948 = vunpack.c.l.b16 %v1848
        %v1949 = vunpack.c.h.b16 %v1848
        %v1950 = vunpack.c.l.b16 %v1849
        %v1951 = vunpack.c.h.b16 %v1849
        %v1952 = vunpack.c.l.b16 %v1850
        %v1953 = vunpack.c.h.b16 %v1850
        %v1954 = vunpack.c.l.b16 %v1851
        %v1955 = vunpack.c.h.b16 %v1851
        %v1956 = vunpack.c.l.b16 %v1852
        %v1957 = vunpack.c.h.b16 %v1852
        %v1958 = vunpack.c.l.b16 %v1853
        %v1959 = vunpack.c.h.b16 %v1853
        %v1960 = vunpack.c.l.b16 %v1854
        %v1961 = vunpack.c.h.b16 %v1854
        %v1962 = vunpack.c.l.b16 %v1855
        %v1963 = vunpack.c.h.b16 %v1855
        %v1964 = vpack.c.b16 %v1902, %v1900
        %v1965 = vpack.c.b16 %v1903, %v1901
        %v1966 = vpack.c.b16 %v1906, %v1904
        %v1967 = vpack.c.b16 %v1907, %v1905
        %v1968 = vpack.c.b16 %v1910, %v1908
        %v1969 = vpack.c.b16 %v1911, %v1909
        %v1970 = vpack.c.b16 %v1914, %v1912
        %v1971 = vpack.c.b16 %v1915, %v1913
        %v1972 = vpack.c.b16 %v1918, %v1916
        %v1973 = vpack.c.b16 %v1919, %v1917
        %v1974 = vpack.c.b16 %v1922, %v1920
        %v1975 = vpack.c.b16 %v1923, %v1921
        %v1976 = vpack.c.b16 %v1926, %v1924
        %v1977 = vpack.c.b16 %v1927, %v1925
        %v1978 = vpack.c.b16 %v1930, %v1928
        %v1979 = vpack.c.b16 %v1931, %v1929
        %v1980 = vpack.c.b16 %v1934, %v1932
        %v1981 = vpack.c.b16 %v1935, %v1933
        %v1982 = vpack.c.b16 %v1938, %v1936
        %v1983 = vpack.c.b16 %v1939, %v1937
        %v1984 = vpack.c.b16 %v1942, %v1940
        %v1985 = vpack.c.b16 %v1943, %v1941
        %v1986 = vpack.c.b16 %v1946, %v1944
        %v1987 = vpack.c.b16 %v1947, %v1945
        %v1988 = vpack.c.b16 %v1950, %v1948
        %v1989 = vpack.c.b16 %v1951, %v1949
        %v1990 = vpack.c.b16 %v1954, %v1952
        %v1991 = vpack.c.b16 %v1955, %v1953
        %v1992 = vpack.c.b16 %v1958, %v1956
        %v1993 = vpack.c.b16 %v1959, %v1957
        %v1994 = vpack.c.b16 %v1962, %v1960
        %v1995 = vpack.c.b16 %v1963, %v1961
        %2028 = vmatprep.subr.bf16.mxu0 %v1965
        %2029 = vmatpush1.bf16.msra.mxu0 %v1964
        %2030 = vmatprep.subr.bf16.mxu0 %v1967
        %2031 = vmatpush1.bf16.msra.mxu0 %v1966
        %2032 = vmatprep.subr.bf16.mxu0 %v1969
        %2033 = vmatpush1.bf16.msra.mxu0 %v1968
        %2034 = vmatprep.subr.bf16.mxu0 %v1971
        %2035 = vmatpush1.bf16.msra.mxu0 %v1970
        %2036 = vmatprep.subr.bf16.mxu0 %v1973
        %2037 = vmatpush1.bf16.msra.mxu0 %v1972
        %2038 = vmatprep.subr.bf16.mxu0 %v1975
        %2039 = vmatpush1.bf16.msra.mxu0 %v1974
        %2040 = vmatprep.subr.bf16.mxu0 %v1977
        %2041 = vmatpush1.bf16.msra.mxu0 %v1976
        %2042 = vmatprep.subr.bf16.mxu0 %v1979
        %2043 = vmatpush1.bf16.msra.mxu0 %v1978
        %2044 = vmatprep.subr.bf16.mxu0 %v1981
        %2045 = vmatpush1.bf16.msra.mxu0 %v1980
        %2046 = vmatprep.subr.bf16.mxu0 %v1983
        %2047 = vmatpush1.bf16.msra.mxu0 %v1982
        %2048 = vmatprep.subr.bf16.mxu0 %v1985
        %2049 = vmatpush1.bf16.msra.mxu0 %v1984
        %2050 = vmatprep.subr.bf16.mxu0 %v1987
        %2051 = vmatpush1.bf16.msra.mxu0 %v1986
        %2052 = vmatprep.subr.bf16.mxu0 %v1989
        %2053 = vmatpush1.bf16.msra.mxu0 %v1988
        %2054 = vmatprep.subr.bf16.mxu0 %v1991
        %2055 = vmatpush1.bf16.msra.mxu0 %v1990
        %2056 = vmatprep.subr.bf16.mxu0 %v1993
        %2057 = vmatpush1.bf16.msra.mxu0 %v1992
        %2058 = vmatprep.subr.bf16.mxu0 %v1995
        %2059 = vmatpush1.bf16.msra.mxu0 %v1994
        %2060 = vmatprep.mubr.bf16.mxu0 %v1809
        %2061 = vmatmul.mubr.bf16.gmra.mrb[0].mxu0 %v1808
        %v2062 = vpop.f32.mrb[0].mxu0
        %v2063 = vadd.f32 %v1861, %v2062
        %v2064 = vpop.f32.mrb[0].mxu0
        %v2065 = vadd.f32 %v1865, %v2064
        %v2066 = vpop.f32.mrb[0].mxu0
        %v2067 = vadd.f32 %v1861, %v2066
        %v2068 = vpop.f32.mrb[0].mxu0
        %v2069 = vadd.f32 %v1865, %v2068
        %2070 = vmatprep.mubr.bf16.mxu0 %v1811
        %2071 = vmatmul.mubr.bf16.gmra.mrb[0].mxu0 %v1810
        %v2072 = vpop.f32.mrb[0].mxu0
        %v2073 = vadd.f32 %v1861, %v2072
        %v2074 = vpop.f32.mrb[0].mxu0
        %v2075 = vadd.f32 %v1865, %v2074
        %v2076 = vpop.f32.mrb[0].mxu0
        %v2077 = vadd.f32 %v1861, %v2076
        %v2078 = vpop.f32.mrb[0].mxu0
        %v2079 = vadd.f32 %v1865, %v2078
        %2080 = vmatprep.mubr.bf16.mxu0 %v1813
        %2081 = vmatmul.mubr.bf16.gmra.mrb[0].mxu0 %v1812
        %v2082 = vpop.f32.mrb[0].mxu0
        %v2083 = vadd.f32 %v1861, %v2082
        %v2084 = vpop.f32.mrb[0].mxu0
        %v2085 = vadd.f32 %v1865, %v2084
        %v2086 = vpop.f32.mrb[0].mxu0
        %v2087 = vadd.f32 %v1861, %v2086
        %v2088 = vpop.f32.mrb[0].mxu0
        %v2089 = vadd.f32 %v1865, %v2088
        %2090 = vmatprep.mubr.bf16.mxu0 %v1815
        %2091 = vmatmul.mubr.bf16.gmra.mrb[0].mxu0 %v1814
        %v2092 = vpop.f32.mrb[0].mxu0
        %v2093 = vadd.f32 %v1861, %v2092
        %v2094 = vpop.f32.mrb[0].mxu0
        %v2095 = vadd.f32 %v1865, %v2094
        %v2096 = vpop.f32.mrb[0].mxu0
        %v2097 = vadd.f32 %v1861, %v2096
        %v2098 = vpop.f32.mrb[0].mxu0
        %v2099 = vadd.f32 %v1865, %v2098
        %2100 = vmatprep.mubr.bf16.mxu0 %v1817
        %2101 = vmatmul.mubr.bf16.gmra.mrb[0].mxu0 %v1816
        %v2102 = vpop.f32.mrb[0].mxu0
        %v2103 = vadd.f32 %v1861, %v2102
        %v2104 = vpop.f32.mrb[0].mxu0
        %v2105 = vadd.f32 %v1865, %v2104
        %v2106 = vpop.f32.mrb[0].mxu0
        %v2107 = vadd.f32 %v1861, %v2106
        %v2108 = vpop.f32.mrb[0].mxu0
        %v2109 = vadd.f32 %v1865, %v2108
        %2110 = vmatprep.mubr.bf16.mxu0 %v1819
        %2111 = vmatmul.mubr.bf16.gmra.mrb[0].mxu0 %v1818
        %v2112 = vpop.f32.mrb[0].mxu0
        %v2113 = vadd.f32 %v1861, %v2112
        %v2114 = vpop.f32.mrb[0].mxu0
        %v2115 = vadd.f32 %v1865, %v2114
        %v2116 = vpop.f32.mrb[0].mxu0
        %v2117 = vadd.f32 %v1861, %v2116
        %v2118 = vpop.f32.mrb[0].mxu0
        %v2119 = vadd.f32 %v1865, %v2118
        %2120 = vmatprep.mubr.bf16.mxu0 %v1821
        %2121 = vmatmul.mubr.bf16.gmra.mrb[0].mxu0 %v1820
        %v2122 = vpop.f32.mrb[0].mxu0
        %v2123 = vadd.f32 %v1861, %v2122
        %v2124 = vpop.f32.mrb[0].mxu0
        %v2125 = vadd.f32 %v1865, %v2124
        %v2126 = vpop.f32.mrb[0].mxu0
        %v2127 = vadd.f32 %v1861, %v2126
        %v2128 = vpop.f32.mrb[0].mxu0
        %v2129 = vadd.f32 %v1865, %v2128
        %2130 = vmatprep.mubr.bf16.mxu0 %v1823
        %2131 = vmatmul.mubr.bf16.gmra.mrb[0].mxu0 %v1822
        %v2132 = vpop.f32.mrb[0].mxu0
        %v2133 = vadd.f32 %v1861, %v2132
        %v2134 = vpop.f32.mrb[0].mxu0
        %v2135 = vadd.f32 %v1865, %v2134
        %v2136 = vpop.f32.mrb[0].mxu0
        %v2137 = vadd.f32 %v1861, %v2136
        %v2138 = vpop.f32.mrb[0].mxu0
        %v2139 = vadd.f32 %v1865, %v2138
        %2140 = vdwg.mxu0
        %vm2141 = vcmp.gt.f32.partialorder %v2063, 0.0
        %vm2142 = vcmp.gt.f32.partialorder %v2065, 0.0
        %vm2143 = vcmp.gt.f32.partialorder %v2067, 0.0
        %vm2144 = vcmp.gt.f32.partialorder %v2069, 0.0
        %vm2145 = vcmp.gt.f32.partialorder %v2073, 0.0
        %vm2146 = vcmp.gt.f32.partialorder %v2075, 0.0
        %vm2147 = vcmp.gt.f32.partialorder %v2077, 0.0
        %vm2148 = vcmp.gt.f32.partialorder %v2079, 0.0
        %vm2149 = vcmp.gt.f32.partialorder %v2083, 0.0
        %vm2150 = vcmp.gt.f32.partialorder %v2085, 0.0
        %vm2151 = vcmp.gt.f32.partialorder %v2087, 0.0
        %vm2152 = vcmp.gt.f32.partialorder %v2089, 0.0
        %vm2153 = vcmp.gt.f32.partialorder %v2093, 0.0
        %vm2154 = vcmp.gt.f32.partialorder %v2095, 0.0
        %vm2155 = vcmp.gt.f32.partialorder %v2097, 0.0
        %vm2156 = vcmp.gt.f32.partialorder %v2099, 0.0
        %vm2157 = vcmp.gt.f32.partialorder %v2103, 0.0
        %vm2158 = vcmp.gt.f32.partialorder %v2105, 0.0
        %vm2159 = vcmp.gt.f32.partialorder %v2107, 0.0
        %vm2160 = vcmp.gt.f32.partialorder %v2109, 0.0
        %vm2161 = vcmp.gt.f32.partialorder %v2113, 0.0
        %vm2162 = vcmp.gt.f32.partialorder %v2115, 0.0
        %vm2163 = vcmp.gt.f32.partialorder %v2117, 0.0
        %vm2164 = vcmp.gt.f32.partialorder %v2119, 0.0
        %vm2165 = vcmp.gt.f32.partialorder %v2123, 0.0
        %vm2166 = vcmp.gt.f32.partialorder %v2125, 0.0
        %vm2167 = vcmp.gt.f32.partialorder %v2127, 0.0
        %vm2168 = vcmp.gt.f32.partialorder %v2129, 0.0
        %vm2169 = vcmp.gt.f32.partialorder %v2133, 0.0
        %vm2170 = vcmp.gt.f32.partialorder %v2135, 0.0
        %vm2171 = vcmp.gt.f32.partialorder %v2137, 0.0
        %vm2172 = vcmp.gt.f32.partialorder %v2139, 0.0
        %v2173 = vmul.f32 %v2063, 0.01
        %v2174 = vmul.f32 %v2065, 0.01
        %v2175 = vmul.f32 %v2067, 0.01
        %v2176 = vmul.f32 %v2069, 0.01
        %v2177 = vmul.f32 %v2073, 0.01
        %v2178 = vmul.f32 %v2075, 0.01
        %v2179 = vmul.f32 %v2077, 0.01
        %v2180 = vmul.f32 %v2079, 0.01
        %v2181 = vmul.f32 %v2083, 0.01
        %v2182 = vmul.f32 %v2085, 0.01
        %v2183 = vmul.f32 %v2087, 0.01
        %v2184 = vmul.f32 %v2089, 0.01
        %v2185 = vmul.f32 %v2093, 0.01
        %v2186 = vmul.f32 %v2095, 0.01
        %v2187 = vmul.f32 %v2097, 0.01
        %v2188 = vmul.f32 %v2099, 0.01
        %v2189 = vmul.f32 %v2103, 0.01
        %v2190 = vmul.f32 %v2105, 0.01
        %v2191 = vmul.f32 %v2107, 0.01
        %v2192 = vmul.f32 %v2109, 0.01
        %v2193 = vmul.f32 %v2113, 0.01
        %v2194 = vmul.f32 %v2115, 0.01
        %v2195 = vmul.f32 %v2117, 0.01
        %v2196 = vmul.f32 %v2119, 0.01
        %v2197 = vmul.f32 %v2123, 0.01
        %v2198 = vmul.f32 %v2125, 0.01
        %v2199 = vmul.f32 %v2127, 0.01
        %v2200 = vmul.f32 %v2129, 0.01
        %v2201 = vmul.f32 %v2133, 0.01
        %v2202 = vmul.f32 %v2135, 0.01
        %v2203 = vmul.f32 %v2137, 0.01
        %v2204 = vmul.f32 %v2139, 0.01
        %v2205 = vsel %vm2141, %v2063, %v2173
        %v2206 = vsel %vm2142, %v2065, %v2174
        %v2207 = vsel %vm2143, %v2067, %v2175
        %v2208 = vsel %vm2144, %v2069, %v2176
        %v2209 = vsel %vm2145, %v2073, %v2177
        %v2210 = vsel %vm2146, %v2075, %v2178
        %v2211 = vsel %vm2147, %v2077, %v2179
        %v2212 = vsel %vm2148, %v2079, %v2180
        %v2213 = vsel %vm2149, %v2083, %v2181
        %v2214 = vsel %vm2150, %v2085, %v2182
        %v2215 = vsel %vm2151, %v2087, %v2183
        %v2216 = vsel %vm2152, %v2089, %v2184
        %v2217 = vsel %vm2153, %v2093, %v2185
        %v2218 = vsel %vm2154, %v2095, %v2186
        %v2219 = vsel %vm2155, %v2097, %v2187
        %v2220 = vsel %vm2156, %v2099, %v2188
        %v2221 = vsel %vm2157, %v2103, %v2189
        %v2222 = vsel %vm2158, %v2105, %v2190
        %v2223 = vsel %vm2159, %v2107, %v2191
        %v2224 = vsel %vm2160, %v2109, %v2192
        %v2225 = vsel %vm2161, %v2113, %v2193
        %v2226 = vsel %vm2162, %v2115, %v2194
        %v2227 = vsel %vm2163, %v2117, %v2195
        %v2228 = vsel %vm2164, %v2119, %v2196
        %v2229 = vsel %vm2165, %v2123, %v2197
        %v2230 = vsel %vm2166, %v2125, %v2198
        %v2231 = vsel %vm2167, %v2127, %v2199
        %v2232 = vsel %vm2168, %v2129, %v2200
        %v2233 = vsel %vm2169, %v2133, %v2201
        %v2234 = vsel %vm2170, %v2135, %v2202
        %v2235 = vsel %vm2171, %v2137, %v2203
        %v2236 = vsel %vm2172, %v2139, %v2204
        %v2237 = vpack.c.bf16 %v2207, %v2205
        %v2238 = vpack.c.bf16 %v2208, %v2206
        %v2239 = vpack.c.bf16 %v2211, %v2209
        %v2240 = vpack.c.bf16 %v2212, %v2210
        %v2241 = vpack.c.bf16 %v2215, %v2213
        %v2242 = vpack.c.bf16 %v2216, %v2214
        %v2243 = vpack.c.bf16 %v2219, %v2217
        %v2244 = vpack.c.bf16 %v2220, %v2218
        %v2245 = vpack.c.bf16 %v2223, %v2221
        %v2246 = vpack.c.bf16 %v2224, %v2222
        %v2247 = vpack.c.bf16 %v2227, %v2225
        %v2248 = vpack.c.bf16 %v2228, %v2226
        %v2249 = vpack.c.bf16 %v2231, %v2229
        %v2250 = vpack.c.bf16 %v2232, %v2230
        %v2251 = vpack.c.bf16 %v2235, %v2233
        %v2252 = vpack.c.bf16 %v2236, %v2234
        %v2253 = vld [vmem:[%s6] sm:$0xf]
        %v2254 = vld [vmem:[%s6 + $0x4] sm:$0xf]
        %v2255 = vld [vmem:[%s6 + $0x8] sm:$0xf]
        %v2256 = vld [vmem:[%s6 + $0xc] sm:$0xf]
        %v2257 = vld [vmem:[%s6 + $0x10] sm:$0xf]
        %v2258 = vld [vmem:[%s6 + $0x14] sm:$0xf]
        %v2259 = vld [vmem:[%s6 + $0x18] sm:$0xf]
        %v2260 = vld [vmem:[%s6 + $0x1c] sm:$0xf]
        %v2261 = vld [vmem:[%s6 + $0x20] sm:$0xf]
        %v2262 = vld [vmem:[%s6 + $0x24] sm:$0xf]
        %v2263 = vld [vmem:[%s6 + $0x28] sm:$0xf]
        %v2264 = vld [vmem:[%s6 + $0x2c] sm:$0xf]
        %v2265 = vld [vmem:[%s6 + $0x30] sm:$0xf]
        %v2266 = vld [vmem:[%s6 + $0x34] sm:$0xf]
        %v2267 = vld [vmem:[%s6 + $0x38] sm:$0xf]
        %v2268 = vld [vmem:[%s6 + $0x3c] sm:$0xf]
        %v2269 = vld [vmem:[%s6 + $0x40] sm:$0xf]
        %v2270 = vld [vmem:[%s6 + $0x44] sm:$0xf]
        %v2271 = vld [vmem:[%s6 + $0x48] sm:$0xf]
        %v2272 = vld [vmem:[%s6 + $0x4c] sm:$0xf]
        %v2273 = vld [vmem:[%s6 + $0x50] sm:$0xf]
        %v2274 = vld [vmem:[%s6 + $0x54] sm:$0xf]
        %v2275 = vld [vmem:[%s6 + $0x58] sm:$0xf]
        %v2276 = vld [vmem:[%s6 + $0x5c] sm:$0xf]
        %v2277 = vld [vmem:[%s6 + $0x60] sm:$0xf]
        %v2278 = vld [vmem:[%s6 + $0x64] sm:$0xf]
        %v2279 = vld [vmem:[%s6 + $0x68] sm:$0xf]
        %v2280 = vld [vmem:[%s6 + $0x6c] sm:$0xf]
        %v2281 = vld [vmem:[%s6 + $0x70] sm:$0xf]
        %v2282 = vld [vmem:[%s6 + $0x74] sm:$0xf]
        %v2283 = vld [vmem:[%s6 + $0x78] sm:$0xf]
        %v2284 = vld [vmem:[%s6 + $0x7c] sm:$0xf]
        %v2285 = vld [vmem:[%s7] sm:$0x1]
        %v2287 = vlaneseq
        %v2288 = vshrl.u32 %v2287, 7
        %v2289 = vsub.s32 0, %v2288
        %v2290 = vrot.slane %v2285, %v2289
        %v2324 = vunpack.c.l.b16 %v2253
        %v2325 = vunpack.c.l.b16 %v2254
        %v2326 = vunpack.c.l.b16 %v2255
        %v2327 = vunpack.c.l.b16 %v2256
        %v2328 = vunpack.c.l.b16 %v2257
        %v2329 = vunpack.c.l.b16 %v2258
        %v2330 = vunpack.c.l.b16 %v2259
        %v2331 = vunpack.c.l.b16 %v2260
        %v2332 = vunpack.c.l.b16 %v2261
        %v2333 = vunpack.c.l.b16 %v2262
        %v2334 = vunpack.c.l.b16 %v2263
        %v2335 = vunpack.c.l.b16 %v2264
        %v2336 = vunpack.c.l.b16 %v2265
        %v2337 = vunpack.c.l.b16 %v2266
        %v2338 = vunpack.c.l.b16 %v2267
        %v2339 = vunpack.c.l.b16 %v2268
        %v2340 = vunpack.c.l.b16 %v2269
        %v2341 = vunpack.c.l.b16 %v2270
        %v2342 = vunpack.c.l.b16 %v2271
        %v2343 = vunpack.c.l.b16 %v2272
        %v2344 = vunpack.c.l.b16 %v2273
        %v2345 = vunpack.c.l.b16 %v2274
        %v2346 = vunpack.c.l.b16 %v2275
        %v2347 = vunpack.c.l.b16 %v2276
        %v2348 = vunpack.c.l.b16 %v2277
        %v2349 = vunpack.c.l.b16 %v2278
        %v2350 = vunpack.c.l.b16 %v2279
        %v2351 = vunpack.c.l.b16 %v2280
        %v2352 = vunpack.c.l.b16 %v2281
        %v2353 = vunpack.c.l.b16 %v2282
        %v2354 = vunpack.c.l.b16 %v2283
        %v2355 = vunpack.c.l.b16 %v2284
        %v2356 = vpack.c.b16 %v2325, %v2324
        %v2357 = vpack.c.b16 %v2327, %v2326
        %v2358 = vpack.c.b16 %v2329, %v2328
        %v2359 = vpack.c.b16 %v2331, %v2330
        %v2360 = vpack.c.b16 %v2333, %v2332
        %v2361 = vpack.c.b16 %v2335, %v2334
        %v2362 = vpack.c.b16 %v2337, %v2336
        %v2363 = vpack.c.b16 %v2339, %v2338
        %v2364 = vpack.c.b16 %v2341, %v2340
        %v2365 = vpack.c.b16 %v2343, %v2342
        %v2366 = vpack.c.b16 %v2345, %v2344
        %v2367 = vpack.c.b16 %v2347, %v2346
        %v2368 = vpack.c.b16 %v2349, %v2348
        %v2369 = vpack.c.b16 %v2351, %v2350
        %v2370 = vpack.c.b16 %v2353, %v2352
        %v2371 = vpack.c.b16 %v2355, %v2354
        %2388 = vmatprep.subr.bf16.mxu0 0
        %2389 = vmatpush1.bf16.msra.mxu0 %v2356
        %2390 = vmatprep.subr.bf16.mxu0 0
        %2391 = vmatpush1.bf16.msra.mxu0 %v2357
        %2392 = vmatprep.subr.bf16.mxu0 0
        %2393 = vmatpush1.bf16.msra.mxu0 %v2358
        %2394 = vmatprep.subr.bf16.mxu0 0
        %2395 = vmatpush1.bf16.msra.mxu0 %v2359
        %2396 = vmatprep.subr.bf16.mxu0 0
        %2397 = vmatpush1.bf16.msra.mxu0 %v2360
        %2398 = vmatprep.subr.bf16.mxu0 0
        %2399 = vmatpush1.bf16.msra.mxu0 %v2361
        %2400 = vmatprep.subr.bf16.mxu0 0
        %2401 = vmatpush1.bf16.msra.mxu0 %v2362
        %2402 = vmatprep.subr.bf16.mxu0 0
        %2403 = vmatpush1.bf16.msra.mxu0 %v2363
        %2404 = vmatprep.subr.bf16.mxu0 0
        %2405 = vmatpush1.bf16.msra.mxu0 %v2364
        %2406 = vmatprep.subr.bf16.mxu0 0
        %2407 = vmatpush1.bf16.msra.mxu0 %v2365
        %2408 = vmatprep.subr.bf16.mxu0 0
        %2409 = vmatpush1.bf16.msra.mxu0 %v2366
        %2410 = vmatprep.subr.bf16.mxu0 0
        %2411 = vmatpush1.bf16.msra.mxu0 %v2367
        %2412 = vmatprep.subr.bf16.mxu0 0
        %2413 = vmatpush1.bf16.msra.mxu0 %v2368
        %2414 = vmatprep.subr.bf16.mxu0 0
        %2415 = vmatpush1.bf16.msra.mxu0 %v2369
        %2416 = vmatprep.subr.bf16.mxu0 0
        %2417 = vmatpush1.bf16.msra.mxu0 %v2370
        %2418 = vmatprep.subr.bf16.mxu0 0
        %2419 = vmatpush1.bf16.msra.mxu0 %v2371
        %2420 = vmatprep.mubr.bf16.mxu0 %v2238
        %2421 = vmatmul.mubr.bf16.gmra.mrb[0].mxu0 %v2237
        %v2422 = vpop.f32.mrb[0].mxu0
        %v2423 = vadd.f32 %v2290, %v2422
        %v2424 = vpop.f32.mrb[0].mxu0
        %v2425 = vpop.f32.mrb[0].mxu0
        %v2426 = vadd.f32 %v2290, %v2425
        %v2427 = vpop.f32.mrb[0].mxu0
        %2428 = vmatprep.mubr.bf16.mxu0 %v2240
        %2429 = vmatmul.mubr.bf16.gmra.mrb[0].mxu0 %v2239
        %v2430 = vpop.f32.mrb[0].mxu0
        %v2431 = vadd.f32 %v2290, %v2430
        %v2432 = vpop.f32.mrb[0].mxu0
        %v2433 = vpop.f32.mrb[0].mxu0
        %v2434 = vadd.f32 %v2290, %v2433
        %v2435 = vpop.f32.mrb[0].mxu0
        %2436 = vmatprep.mubr.bf16.mxu0 %v2242
        %2437 = vmatmul.mubr.bf16.gmra.mrb[0].mxu0 %v2241
        %v2438 = vpop.f32.mrb[0].mxu0
        %v2439 = vadd.f32 %v2290, %v2438
        %v2440 = vpop.f32.mrb[0].mxu0
        %v2441 = vpop.f32.mrb[0].mxu0
        %v2442 = vadd.f32 %v2290, %v2441
        %v2443 = vpop.f32.mrb[0].mxu0
        %2444 = vmatprep.mubr.bf16.mxu0 %v2244
        %2445 = vmatmul.mubr.bf16.gmra.mrb[0].mxu0 %v2243
        %v2446 = vpop.f32.mrb[0].mxu0
        %v2447 = vadd.f32 %v2290, %v2446
        %v2448 = vpop.f32.mrb[0].mxu0
        %v2449 = vpop.f32.mrb[0].mxu0
        %v2450 = vadd.f32 %v2290, %v2449
        %v2451 = vpop.f32.mrb[0].mxu0
        %2452 = vmatprep.mubr.bf16.mxu0 %v2246
        %2453 = vmatmul.mubr.bf16.gmra.mrb[0].mxu0 %v2245
        %v2454 = vpop.f32.mrb[0].mxu0
        %v2455 = vadd.f32 %v2290, %v2454
        %v2456 = vpop.f32.mrb[0].mxu0
        %v2457 = vpop.f32.mrb[0].mxu0
        %v2458 = vadd.f32 %v2290, %v2457
        %v2459 = vpop.f32.mrb[0].mxu0
        %2460 = vmatprep.mubr.bf16.mxu0 %v2248
        %2461 = vmatmul.mubr.bf16.gmra.mrb[0].mxu0 %v2247
        %v2462 = vpop.f32.mrb[0].mxu0
        %v2463 = vadd.f32 %v2290, %v2462
        %v2464 = vpop.f32.mrb[0].mxu0
        %v2465 = vpop.f32.mrb[0].mxu0
        %v2466 = vadd.f32 %v2290, %v2465
        %v2467 = vpop.f32.mrb[0].mxu0
        %2468 = vmatprep.mubr.bf16.mxu0 %v2250
        %2469 = vmatmul.mubr.bf16.gmra.mrb[0].mxu0 %v2249
        %v2470 = vpop.f32.mrb[0].mxu0
        %v2471 = vadd.f32 %v2290, %v2470
        %v2472 = vpop.f32.mrb[0].mxu0
        %v2473 = vpop.f32.mrb[0].mxu0
        %v2474 = vadd.f32 %v2290, %v2473
        %v2475 = vpop.f32.mrb[0].mxu0
        %2476 = vmatprep.mubr.bf16.mxu0 %v2252
        %2477 = vmatmul.mubr.bf16.gmra.mrb[0].mxu0 %v2251
        %v2478 = vpop.f32.mrb[0].mxu0
        %v2479 = vadd.f32 %v2290, %v2478
        %v2480 = vpop.f32.mrb[0].mxu0
        %v2481 = vpop.f32.mrb[0].mxu0
        %v2482 = vadd.f32 %v2290, %v2481
        %v2483 = vpop.f32.mrb[0].mxu0
        %2484 = vdwg.mxu0
        %vm2485 = vcmp.gt.f32.partialorder %v2423, 0.0
        %vm2486 = vcmp.gt.f32.partialorder %v2426, 0.0
        %vm2487 = vcmp.gt.f32.partialorder %v2431, 0.0
        %vm2488 = vcmp.gt.f32.partialorder %v2434, 0.0
        %vm2489 = vcmp.gt.f32.partialorder %v2439, 0.0
        %vm2490 = vcmp.gt.f32.partialorder %v2442, 0.0
        %vm2491 = vcmp.gt.f32.partialorder %v2447, 0.0
        %vm2492 = vcmp.gt.f32.partialorder %v2450, 0.0
        %vm2493 = vcmp.gt.f32.partialorder %v2455, 0.0
        %vm2494 = vcmp.gt.f32.partialorder %v2458, 0.0
        %vm2495 = vcmp.gt.f32.partialorder %v2463, 0.0
        %vm2496 = vcmp.gt.f32.partialorder %v2466, 0.0
        %vm2497 = vcmp.gt.f32.partialorder %v2471, 0.0
        %vm2498 = vcmp.gt.f32.partialorder %v2474, 0.0
        %vm2499 = vcmp.gt.f32.partialorder %v2479, 0.0
        %vm2500 = vcmp.gt.f32.partialorder %v2482, 0.0
        %v2501 = vmul.f32 %v2423, 0.01
        %v2502 = vmul.f32 %v2426, 0.01
        %v2503 = vmul.f32 %v2431, 0.01
        %v2504 = vmul.f32 %v2434, 0.01
        %v2505 = vmul.f32 %v2439, 0.01
        %v2506 = vmul.f32 %v2442, 0.01
        %v2507 = vmul.f32 %v2447, 0.01
        %v2508 = vmul.f32 %v2450, 0.01
        %v2509 = vmul.f32 %v2455, 0.01
        %v2510 = vmul.f32 %v2458, 0.01
        %v2511 = vmul.f32 %v2463, 0.01
        %v2512 = vmul.f32 %v2466, 0.01
        %v2513 = vmul.f32 %v2471, 0.01
        %v2514 = vmul.f32 %v2474, 0.01
        %v2515 = vmul.f32 %v2479, 0.01
        %v2516 = vmul.f32 %v2482, 0.01
        %v2517 = vsel %vm2485, %v2423, %v2501
        %v2518 = vsel %vm2486, %v2426, %v2502
        %v2519 = vsel %vm2487, %v2431, %v2503
        %v2520 = vsel %vm2488, %v2434, %v2504
        %v2521 = vsel %vm2489, %v2439, %v2505
        %v2522 = vsel %vm2490, %v2442, %v2506
        %v2523 = vsel %vm2491, %v2447, %v2507
        %v2524 = vsel %vm2492, %v2450, %v2508
        %v2525 = vsel %vm2493, %v2455, %v2509
        %v2526 = vsel %vm2494, %v2458, %v2510
        %v2527 = vsel %vm2495, %v2463, %v2511
        %v2528 = vsel %vm2496, %v2466, %v2512
        %v2529 = vsel %vm2497, %v2471, %v2513
        %v2530 = vsel %vm2498, %v2474, %v2514
        %v2531 = vsel %vm2499, %v2479, %v2515
        %v2532 = vsel %vm2500, %v2482, %v2516
        %v2533 = vpack.c.bf16 %v2518, %v2517
        %v2534 = vpack.c.bf16 %v2520, %v2519
        %v2535 = vpack.c.bf16 %v2522, %v2521
        %v2536 = vpack.c.bf16 %v2524, %v2523
        %v2537 = vpack.c.bf16 %v2526, %v2525
        %v2538 = vpack.c.bf16 %v2528, %v2527
        %v2539 = vpack.c.bf16 %v2530, %v2529
        %v2540 = vpack.c.bf16 %v2532, %v2531
        %v2541 = vld [vmem:[#allocation2] sm:$0xff]
        %v2542 = vld [vmem:[#allocation2 + $0x8] sm:$0xff]
        %v2543 = vld [vmem:[#allocation2 + $0x10] sm:$0xff]
        %v2544 = vld [vmem:[#allocation2 + $0x18] sm:$0xff]
        %v2545 = vld [vmem:[#allocation2 + $0x20] sm:$0xff]
        %v2546 = vld [vmem:[#allocation2 + $0x28] sm:$0xff]
        %v2547 = vld [vmem:[#allocation2 + $0x30] sm:$0xff]
        %v2548 = vld [vmem:[#allocation2 + $0x38] sm:$0xff]
        %v2549 = vld [vmem:[#allocation2 + $0x40] sm:$0xff]
        %v2550 = vld [vmem:[#allocation2 + $0x48] sm:$0xff]
        %v2551 = vld [vmem:[#allocation2 + $0x50] sm:$0xff]
        %v2552 = vld [vmem:[#allocation2 + $0x58] sm:$0xff]
        %v2553 = vld [vmem:[#allocation2 + $0x60] sm:$0xff]
        %v2554 = vld [vmem:[#allocation2 + $0x68] sm:$0xff]
        %v2555 = vld [vmem:[#allocation2 + $0x70] sm:$0xff]
        %v2556 = vld [vmem:[#allocation2 + $0x78] sm:$0xff]
        %v2557 = vld [vmem:[%s9] sm:$0x3]
        %v2559 = vlaneseq
        %v2560 = vshrl.u32 %v2559, 7
        %v2561 = vsub.s32 0, %v2560
        %v2562 = vrot.slane %v2557, %v2561
        %v2563 = vlaneseq
        %v2564 = vshrl.u32 %v2563, 7
        %v2565 = vsub.s32 1, %v2564
        %v2566 = vrot.slane %v2557, %v2565
        %v2585 = vunpack.c.l.b16 %v2541
        %v2586 = vunpack.c.h.b16 %v2541
        %v2587 = vunpack.c.l.b16 %v2542
        %v2588 = vunpack.c.h.b16 %v2542
        %v2589 = vunpack.c.l.b16 %v2543
        %v2590 = vunpack.c.h.b16 %v2543
        %v2591 = vunpack.c.l.b16 %v2544
        %v2592 = vunpack.c.h.b16 %v2544
        %v2593 = vunpack.c.l.b16 %v2545
        %v2594 = vunpack.c.h.b16 %v2545
        %v2595 = vunpack.c.l.b16 %v2546
        %v2596 = vunpack.c.h.b16 %v2546
        %v2597 = vunpack.c.l.b16 %v2547
        %v2598 = vunpack.c.h.b16 %v2547
        %v2599 = vunpack.c.l.b16 %v2548
        %v2600 = vunpack.c.h.b16 %v2548
        %v2601 = vunpack.c.l.b16 %v2549
        %v2602 = vunpack.c.h.b16 %v2549
        %v2603 = vunpack.c.l.b16 %v2550
        %v2604 = vunpack.c.h.b16 %v2550
        %v2605 = vunpack.c.l.b16 %v2551
        %v2606 = vunpack.c.h.b16 %v2551
        %v2607 = vunpack.c.l.b16 %v2552
        %v2608 = vunpack.c.h.b16 %v2552
        %v2609 = vunpack.c.l.b16 %v2553
        %v2610 = vunpack.c.h.b16 %v2553
        %v2611 = vunpack.c.l.b16 %v2554
        %v2612 = vunpack.c.h.b16 %v2554
        %v2613 = vunpack.c.l.b16 %v2555
        %v2614 = vunpack.c.h.b16 %v2555
        %v2615 = vunpack.c.l.b16 %v2556
        %v2616 = vunpack.c.h.b16 %v2556
        %v2617 = vpack.c.b16 %v2587, %v2585
        %v2618 = vpack.c.b16 %v2588, %v2586
        %v2619 = vpack.c.b16 %v2591, %v2589
        %v2620 = vpack.c.b16 %v2592, %v2590
        %v2621 = vpack.c.b16 %v2595, %v2593
        %v2622 = vpack.c.b16 %v2596, %v2594
        %v2623 = vpack.c.b16 %v2599, %v2597
        %v2624 = vpack.c.b16 %v2600, %v2598
        %v2625 = vpack.c.b16 %v2603, %v2601
        %v2626 = vpack.c.b16 %v2604, %v2602
        %v2627 = vpack.c.b16 %v2607, %v2605
        %v2628 = vpack.c.b16 %v2608, %v2606
        %v2629 = vpack.c.b16 %v2611, %v2609
        %v2630 = vpack.c.b16 %v2612, %v2610
        %v2631 = vpack.c.b16 %v2615, %v2613
        %v2632 = vpack.c.b16 %v2616, %v2614
        %2649 = vmatprep.subr.bf16.mxu0 %v2618
        %2650 = vmatpush1.bf16.msra.mxu0 %v2617
        %2651 = vmatprep.subr.bf16.mxu0 %v2620
        %2652 = vmatpush1.bf16.msra.mxu0 %v2619
        %2653 = vmatprep.subr.bf16.mxu0 %v2622
        %2654 = vmatpush1.bf16.msra.mxu0 %v2621
        %2655 = vmatprep.subr.bf16.mxu0 %v2624
        %2656 = vmatpush1.bf16.msra.mxu0 %v2623
        %2657 = vmatprep.subr.bf16.mxu0 %v2626
        %2658 = vmatpush1.bf16.msra.mxu0 %v2625
        %2659 = vmatprep.subr.bf16.mxu0 %v2628
        %2660 = vmatpush1.bf16.msra.mxu0 %v2627
        %2661 = vmatprep.subr.bf16.mxu0 %v2630
        %2662 = vmatpush1.bf16.msra.mxu0 %v2629
        %2663 = vmatprep.subr.bf16.mxu0 %v2632
        %2664 = vmatpush1.bf16.msra.mxu0 %v2631
        %2665 = vmatprep.subr.bf16.mxu0 0
        %2666 = vmatpush1.bf16.msra.mxu0 0
        %2667 = vmatprep.subr.bf16.mxu0 0
        %2668 = vmatpush1.bf16.msra.mxu0 0
        %2669 = vmatprep.subr.bf16.mxu0 0
        %2670 = vmatpush1.bf16.msra.mxu0 0
        %2671 = vmatprep.subr.bf16.mxu0 0
        %2672 = vmatpush1.bf16.msra.mxu0 0
        %2673 = vmatprep.subr.bf16.mxu0 0
        %2674 = vmatpush1.bf16.msra.mxu0 0
        %2675 = vmatprep.subr.bf16.mxu0 0
        %2676 = vmatpush1.bf16.msra.mxu0 0
        %2677 = vmatprep.subr.bf16.mxu0 0
        %2678 = vmatpush1.bf16.msra.mxu0 0
        %2679 = vmatprep.subr.bf16.mxu0 0
        %2680 = vmatpush1.bf16.msra.mxu0 0
        %2681 = vmatprep.mubr.bf16.mxu0 0
        %2682 = vmatmul.mubr.bf16.gmra.mrb[0].mxu0 %v2533
        %v2683 = vpop.f32.mrb[0].mxu0
        %v2684 = vadd.f32 %v2562, %v2683
        %v2685 = vpop.f32.mrb[0].mxu0
        %v2686 = vadd.f32 %v2566, %v2685
        %v2687 = vpop.f32.mrb[0].mxu0
        %v2688 = vadd.f32 %v2562, %v2687
        %v2689 = vpop.f32.mrb[0].mxu0
        %v2690 = vadd.f32 %v2566, %v2689
        %2691 = vmatprep.mubr.bf16.mxu0 0
        %2692 = vmatmul.mubr.bf16.gmra.mrb[0].mxu0 %v2534
        %v2693 = vpop.f32.mrb[0].mxu0
        %v2694 = vadd.f32 %v2562, %v2693
        %v2695 = vpop.f32.mrb[0].mxu0
        %v2696 = vadd.f32 %v2566, %v2695
        %v2697 = vpop.f32.mrb[0].mxu0
        %v2698 = vadd.f32 %v2562, %v2697
        %v2699 = vpop.f32.mrb[0].mxu0
        %v2700 = vadd.f32 %v2566, %v2699
        %2701 = vmatprep.mubr.bf16.mxu0 0
        %2702 = vmatmul.mubr.bf16.gmra.mrb[0].mxu0 %v2535
        %v2703 = vpop.f32.mrb[0].mxu0
        %v2704 = vadd.f32 %v2562, %v2703
        %v2705 = vpop.f32.mrb[0].mxu0
        %v2706 = vadd.f32 %v2566, %v2705
        %v2707 = vpop.f32.mrb[0].mxu0
        %v2708 = vadd.f32 %v2562, %v2707
        %v2709 = vpop.f32.mrb[0].mxu0
        %v2710 = vadd.f32 %v2566, %v2709
        %2711 = vmatprep.mubr.bf16.mxu0 0
        %2712 = vmatmul.mubr.bf16.gmra.mrb[0].mxu0 %v2536
        %v2713 = vpop.f32.mrb[0].mxu0
        %v2714 = vadd.f32 %v2562, %v2713
        %v2715 = vpop.f32.mrb[0].mxu0
        %v2716 = vadd.f32 %v2566, %v2715
        %v2717 = vpop.f32.mrb[0].mxu0
        %v2718 = vadd.f32 %v2562, %v2717
        %v2719 = vpop.f32.mrb[0].mxu0
        %v2720 = vadd.f32 %v2566, %v2719
        %2721 = vmatprep.mubr.bf16.mxu0 0
        %2722 = vmatmul.mubr.bf16.gmra.mrb[0].mxu0 %v2537
        %v2723 = vpop.f32.mrb[0].mxu0
        %v2724 = vadd.f32 %v2562, %v2723
        %v2725 = vpop.f32.mrb[0].mxu0
        %v2726 = vadd.f32 %v2566, %v2725
        %v2727 = vpop.f32.mrb[0].mxu0
        %v2728 = vadd.f32 %v2562, %v2727
        %v2729 = vpop.f32.mrb[0].mxu0
        %v2730 = vadd.f32 %v2566, %v2729
        %2731 = vmatprep.mubr.bf16.mxu0 0
        %2732 = vmatmul.mubr.bf16.gmra.mrb[0].mxu0 %v2538
        %v2733 = vpop.f32.mrb[0].mxu0
        %v2734 = vadd.f32 %v2562, %v2733
        %v2735 = vpop.f32.mrb[0].mxu0
        %v2736 = vadd.f32 %v2566, %v2735
        %v2737 = vpop.f32.mrb[0].mxu0
        %v2738 = vadd.f32 %v2562, %v2737
        %v2739 = vpop.f32.mrb[0].mxu0
        %v2740 = vadd.f32 %v2566, %v2739
        %2741 = vmatprep.mubr.bf16.mxu0 0
        %2742 = vmatmul.mubr.bf16.gmra.mrb[0].mxu0 %v2539
        %v2743 = vpop.f32.mrb[0].mxu0
        %v2744 = vadd.f32 %v2562, %v2743
        %v2745 = vpop.f32.mrb[0].mxu0
        %v2746 = vadd.f32 %v2566, %v2745
        %v2747 = vpop.f32.mrb[0].mxu0
        %v2748 = vadd.f32 %v2562, %v2747
        %v2749 = vpop.f32.mrb[0].mxu0
        %v2750 = vadd.f32 %v2566, %v2749
        %2751 = vmatprep.mubr.bf16.mxu0 0
        %2752 = vmatmul.mubr.bf16.gmra.mrb[0].mxu0 %v2540
        %v2753 = vpop.f32.mrb[0].mxu0
        %v2754 = vadd.f32 %v2562, %v2753
        %v2755 = vpop.f32.mrb[0].mxu0
        %v2756 = vadd.f32 %v2566, %v2755
        %v2757 = vpop.f32.mrb[0].mxu0
        %v2758 = vadd.f32 %v2562, %v2757
        %v2759 = vpop.f32.mrb[0].mxu0
        %v2760 = vadd.f32 %v2566, %v2759
        %2761 = vdwg.mxu0
        %vm2762 = vcmp.gt.f32.partialorder %v2684, 0.0
        %vm2763 = vcmp.gt.f32.partialorder %v2686, 0.0
        %vm2764 = vcmp.gt.f32.partialorder %v2688, 0.0
        %vm2765 = vcmp.gt.f32.partialorder %v2690, 0.0
        %vm2766 = vcmp.gt.f32.partialorder %v2694, 0.0
        %vm2767 = vcmp.gt.f32.partialorder %v2696, 0.0
        %vm2768 = vcmp.gt.f32.partialorder %v2698, 0.0
        %vm2769 = vcmp.gt.f32.partialorder %v2700, 0.0
        %vm2770 = vcmp.gt.f32.partialorder %v2704, 0.0
        %vm2771 = vcmp.gt.f32.partialorder %v2706, 0.0
        %vm2772 = vcmp.gt.f32.partialorder %v2708, 0.0
        %vm2773 = vcmp.gt.f32.partialorder %v2710, 0.0
        %vm2774 = vcmp.gt.f32.partialorder %v2714, 0.0
        %vm2775 = vcmp.gt.f32.partialorder %v2716, 0.0
        %vm2776 = vcmp.gt.f32.partialorder %v2718, 0.0
        %vm2777 = vcmp.gt.f32.partialorder %v2720, 0.0
        %vm2778 = vcmp.gt.f32.partialorder %v2724, 0.0
        %vm2779 = vcmp.gt.f32.partialorder %v2726, 0.0
        %vm2780 = vcmp.gt.f32.partialorder %v2728, 0.0
        %vm2781 = vcmp.gt.f32.partialorder %v2730, 0.0
        %vm2782 = vcmp.gt.f32.partialorder %v2734, 0.0
        %vm2783 = vcmp.gt.f32.partialorder %v2736, 0.0
        %vm2784 = vcmp.gt.f32.partialorder %v2738, 0.0
        %vm2785 = vcmp.gt.f32.partialorder %v2740, 0.0
        %vm2786 = vcmp.gt.f32.partialorder %v2744, 0.0
        %vm2787 = vcmp.gt.f32.partialorder %v2746, 0.0
        %vm2788 = vcmp.gt.f32.partialorder %v2748, 0.0
        %vm2789 = vcmp.gt.f32.partialorder %v2750, 0.0
        %vm2790 = vcmp.gt.f32.partialorder %v2754, 0.0
        %vm2791 = vcmp.gt.f32.partialorder %v2756, 0.0
        %vm2792 = vcmp.gt.f32.partialorder %v2758, 0.0
        %vm2793 = vcmp.gt.f32.partialorder %v2760, 0.0
        %v2794 = vmul.f32 %v2684, 0.01
        %v2795 = vmul.f32 %v2686, 0.01
        %v2796 = vmul.f32 %v2688, 0.01
        %v2797 = vmul.f32 %v2690, 0.01
        %v2798 = vmul.f32 %v2694, 0.01
        %v2799 = vmul.f32 %v2696, 0.01
        %v2800 = vmul.f32 %v2698, 0.01
        %v2801 = vmul.f32 %v2700, 0.01
        %v2802 = vmul.f32 %v2704, 0.01
        %v2803 = vmul.f32 %v2706, 0.01
        %v2804 = vmul.f32 %v2708, 0.01
        %v2805 = vmul.f32 %v2710, 0.01
        %v2806 = vmul.f32 %v2714, 0.01
        %v2807 = vmul.f32 %v2716, 0.01
        %v2808 = vmul.f32 %v2718, 0.01
        %v2809 = vmul.f32 %v2720, 0.01
        %v2810 = vmul.f32 %v2724, 0.01
        %v2811 = vmul.f32 %v2726, 0.01
        %v2812 = vmul.f32 %v2728, 0.01
        %v2813 = vmul.f32 %v2730, 0.01
        %v2814 = vmul.f32 %v2734, 0.01
        %v2815 = vmul.f32 %v2736, 0.01
        %v2816 = vmul.f32 %v2738, 0.01
        %v2817 = vmul.f32 %v2740, 0.01
        %v2818 = vmul.f32 %v2744, 0.01
        %v2819 = vmul.f32 %v2746, 0.01
        %v2820 = vmul.f32 %v2748, 0.01
        %v2821 = vmul.f32 %v2750, 0.01
        %v2822 = vmul.f32 %v2754, 0.01
        %v2823 = vmul.f32 %v2756, 0.01
        %v2824 = vmul.f32 %v2758, 0.01
        %v2825 = vmul.f32 %v2760, 0.01
        %v2826 = vsel %vm2762, %v2684, %v2794
        %v2827 = vsel %vm2763, %v2686, %v2795
        %v2828 = vsel %vm2764, %v2688, %v2796
        %v2829 = vsel %vm2765, %v2690, %v2797
        %v2830 = vsel %vm2766, %v2694, %v2798
        %v2831 = vsel %vm2767, %v2696, %v2799
        %v2832 = vsel %vm2768, %v2698, %v2800
        %v2833 = vsel %vm2769, %v2700, %v2801
        %v2834 = vsel %vm2770, %v2704, %v2802
        %v2835 = vsel %vm2771, %v2706, %v2803
        %v2836 = vsel %vm2772, %v2708, %v2804
        %v2837 = vsel %vm2773, %v2710, %v2805
        %v2838 = vsel %vm2774, %v2714, %v2806
        %v2839 = vsel %vm2775, %v2716, %v2807
        %v2840 = vsel %vm2776, %v2718, %v2808
        %v2841 = vsel %vm2777, %v2720, %v2809
        %v2842 = vsel %vm2778, %v2724, %v2810
        %v2843 = vsel %vm2779, %v2726, %v2811
        %v2844 = vsel %vm2780, %v2728, %v2812
        %v2845 = vsel %vm2781, %v2730, %v2813
        %v2846 = vsel %vm2782, %v2734, %v2814
        %v2847 = vsel %vm2783, %v2736, %v2815
        %v2848 = vsel %vm2784, %v2738, %v2816
        %v2849 = vsel %vm2785, %v2740, %v2817
        %v2850 = vsel %vm2786, %v2744, %v2818
        %v2851 = vsel %vm2787, %v2746, %v2819
        %v2852 = vsel %vm2788, %v2748, %v2820
        %v2853 = vsel %vm2789, %v2750, %v2821
        %v2854 = vsel %vm2790, %v2754, %v2822
        %v2855 = vsel %vm2791, %v2756, %v2823
        %v2856 = vsel %vm2792, %v2758, %v2824
        %v2857 = vsel %vm2793, %v2760, %v2825
        %v2858 = vpack.c.bf16 %v2828, %v2826
        %v2859 = vpack.c.bf16 %v2829, %v2827
        %v2860 = vpack.c.bf16 %v2832, %v2830
        %v2861 = vpack.c.bf16 %v2833, %v2831
        %v2862 = vpack.c.bf16 %v2836, %v2834
        %v2863 = vpack.c.bf16 %v2837, %v2835
        %v2864 = vpack.c.bf16 %v2840, %v2838
        %v2865 = vpack.c.bf16 %v2841, %v2839
        %v2866 = vpack.c.bf16 %v2844, %v2842
        %v2867 = vpack.c.bf16 %v2845, %v2843
        %v2868 = vpack.c.bf16 %v2848, %v2846
        %v2869 = vpack.c.bf16 %v2849, %v2847
        %v2870 = vpack.c.bf16 %v2852, %v2850
        %v2871 = vpack.c.bf16 %v2853, %v2851
        %v2872 = vpack.c.bf16 %v2856, %v2854
        %v2873 = vpack.c.bf16 %v2857, %v2855
        %v2874 = vld [vmem:[%s10] sm:$0xff]
        %v2875 = vld [vmem:[%s10 + $0x8] sm:$0xff]
        %v2876 = vld [vmem:[%s10 + $0x10] sm:$0xff]
        %v2877 = vld [vmem:[%s10 + $0x18] sm:$0xff]
        %v2878 = vld [vmem:[%s10 + $0x20] sm:$0xff]
        %v2879 = vld [vmem:[%s10 + $0x28] sm:$0xff]
        %v2880 = vld [vmem:[%s10 + $0x30] sm:$0xff]
        %v2881 = vld [vmem:[%s10 + $0x38] sm:$0xff]
        %v2882 = vld [vmem:[%s10 + $0x40] sm:$0xff]
        %v2883 = vld [vmem:[%s10 + $0x48] sm:$0xff]
        %v2884 = vld [vmem:[%s10 + $0x50] sm:$0xff]
        %v2885 = vld [vmem:[%s10 + $0x58] sm:$0xff]
        %v2886 = vld [vmem:[%s10 + $0x60] sm:$0xff]
        %v2887 = vld [vmem:[%s10 + $0x68] sm:$0xff]
        %v2888 = vld [vmem:[%s10 + $0x70] sm:$0xff]
        %v2889 = vld [vmem:[%s10 + $0x78] sm:$0xff]
        %v2890 = vld [vmem:[%s10 + $0x80] sm:$0xff]
        %v2891 = vld [vmem:[%s10 + $0x88] sm:$0xff]
        %v2892 = vld [vmem:[%s10 + $0x90] sm:$0xff]
        %v2893 = vld [vmem:[%s10 + $0x98] sm:$0xff]
        %v2894 = vld [vmem:[%s10 + $0xa0] sm:$0xff]
        %v2895 = vld [vmem:[%s10 + $0xa8] sm:$0xff]
        %v2896 = vld [vmem:[%s10 + $0xb0] sm:$0xff]
        %v2897 = vld [vmem:[%s10 + $0xb8] sm:$0xff]
        %v2898 = vld [vmem:[%s10 + $0xc0] sm:$0xff]
        %v2899 = vld [vmem:[%s10 + $0xc8] sm:$0xff]
        %v2900 = vld [vmem:[%s10 + $0xd0] sm:$0xff]
        %v2901 = vld [vmem:[%s10 + $0xd8] sm:$0xff]
        %v2902 = vld [vmem:[%s10 + $0xe0] sm:$0xff]
        %v2903 = vld [vmem:[%s10 + $0xe8] sm:$0xff]
        %v2904 = vld [vmem:[%s10 + $0xf0] sm:$0xff]
        %v2905 = vld [vmem:[%s10 + $0xf8] sm:$0xff]
        %v2906 = vld [vmem:[%s11] sm:$0x3]
        %v2908 = vlaneseq
        %v2909 = vshrl.u32 %v2908, 7
        %v2910 = vsub.s32 0, %v2909
        %v2911 = vrot.slane %v2906, %v2910
        %v2912 = vlaneseq
        %v2913 = vshrl.u32 %v2912, 7
        %v2914 = vsub.s32 1, %v2913
        %v2915 = vrot.slane %v2906, %v2914
        %v2950 = vunpack.c.l.b16 %v2874
        %v2951 = vunpack.c.h.b16 %v2874
        %v2952 = vunpack.c.l.b16 %v2875
        %v2953 = vunpack.c.h.b16 %v2875
        %v2954 = vunpack.c.l.b16 %v2876
        %v2955 = vunpack.c.h.b16 %v2876
        %v2956 = vunpack.c.l.b16 %v2877
        %v2957 = vunpack.c.h.b16 %v2877
        %v2958 = vunpack.c.l.b16 %v2878
        %v2959 = vunpack.c.h.b16 %v2878
        %v2960 = vunpack.c.l.b16 %v2879
        %v2961 = vunpack.c.h.b16 %v2879
        %v2962 = vunpack.c.l.b16 %v2880
        %v2963 = vunpack.c.h.b16 %v2880
        %v2964 = vunpack.c.l.b16 %v2881
        %v2965 = vunpack.c.h.b16 %v2881
        %v2966 = vunpack.c.l.b16 %v2882
        %v2967 = vunpack.c.h.b16 %v2882
        %v2968 = vunpack.c.l.b16 %v2883
        %v2969 = vunpack.c.h.b16 %v2883
        %v2970 = vunpack.c.l.b16 %v2884
        %v2971 = vunpack.c.h.b16 %v2884
        %v2972 = vunpack.c.l.b16 %v2885
        %v2973 = vunpack.c.h.b16 %v2885
        %v2974 = vunpack.c.l.b16 %v2886
        %v2975 = vunpack.c.h.b16 %v2886
        %v2976 = vunpack.c.l.b16 %v2887
        %v2977 = vunpack.c.h.b16 %v2887
        %v2978 = vunpack.c.l.b16 %v2888
        %v2979 = vunpack.c.h.b16 %v2888
        %v2980 = vunpack.c.l.b16 %v2889
        %v2981 = vunpack.c.h.b16 %v2889
        %v2982 = vunpack.c.l.b16 %v2890
        %v2983 = vunpack.c.h.b16 %v2890
        %v2984 = vunpack.c.l.b16 %v2891
        %v2985 = vunpack.c.h.b16 %v2891
        %v2986 = vunpack.c.l.b16 %v2892
        %v2987 = vunpack.c.h.b16 %v2892
        %v2988 = vunpack.c.l.b16 %v2893
        %v2989 = vunpack.c.h.b16 %v2893
        %v2990 = vunpack.c.l.b16 %v2894
        %v2991 = vunpack.c.h.b16 %v2894
        %v2992 = vunpack.c.l.b16 %v2895
        %v2993 = vunpack.c.h.b16 %v2895
        %v2994 = vunpack.c.l.b16 %v2896
        %v2995 = vunpack.c.h.b16 %v2896
        %v2996 = vunpack.c.l.b16 %v2897
        %v2997 = vunpack.c.h.b16 %v2897
        %v2998 = vunpack.c.l.b16 %v2898
        %v2999 = vunpack.c.h.b16 %v2898
        %v3000 = vunpack.c.l.b16 %v2899
        %v3001 = vunpack.c.h.b16 %v2899
        %v3002 = vunpack.c.l.b16 %v2900
        %v3003 = vunpack.c.h.b16 %v2900
        %v3004 = vunpack.c.l.b16 %v2901
        %v3005 = vunpack.c.h.b16 %v2901
        %v3006 = vunpack.c.l.b16 %v2902
        %v3007 = vunpack.c.h.b16 %v2902
        %v3008 = vunpack.c.l.b16 %v2903
        %v3009 = vunpack.c.h.b16 %v2903
        %v3010 = vunpack.c.l.b16 %v2904
        %v3011 = vunpack.c.h.b16 %v2904
        %v3012 = vunpack.c.l.b16 %v2905
        %v3013 = vunpack.c.h.b16 %v2905
        %v3014 = vpack.c.b16 %v2952, %v2950
        %v3015 = vpack.c.b16 %v2953, %v2951
        %v3016 = vpack.c.b16 %v2956, %v2954
        %v3017 = vpack.c.b16 %v2957, %v2955
        %v3018 = vpack.c.b16 %v2960, %v2958
        %v3019 = vpack.c.b16 %v2961, %v2959
        %v3020 = vpack.c.b16 %v2964, %v2962
        %v3021 = vpack.c.b16 %v2965, %v2963
        %v3022 = vpack.c.b16 %v2968, %v2966
        %v3023 = vpack.c.b16 %v2969, %v2967
        %v3024 = vpack.c.b16 %v2972, %v2970
        %v3025 = vpack.c.b16 %v2973, %v2971
        %v3026 = vpack.c.b16 %v2976, %v2974
        %v3027 = vpack.c.b16 %v2977, %v2975
        %v3028 = vpack.c.b16 %v2980, %v2978
        %v3029 = vpack.c.b16 %v2981, %v2979
        %v3030 = vpack.c.b16 %v2984, %v2982
        %v3031 = vpack.c.b16 %v2985, %v2983
        %v3032 = vpack.c.b16 %v2988, %v2986
        %v3033 = vpack.c.b16 %v2989, %v2987
        %v3034 = vpack.c.b16 %v2992, %v2990
        %v3035 = vpack.c.b16 %v2993, %v2991
        %v3036 = vpack.c.b16 %v2996, %v2994
        %v3037 = vpack.c.b16 %v2997, %v2995
        %v3038 = vpack.c.b16 %v3000, %v2998
        %v3039 = vpack.c.b16 %v3001, %v2999
        %v3040 = vpack.c.b16 %v3004, %v3002
        %v3041 = vpack.c.b16 %v3005, %v3003
        %v3042 = vpack.c.b16 %v3008, %v3006
        %v3043 = vpack.c.b16 %v3009, %v3007
        %v3044 = vpack.c.b16 %v3012, %v3010
        %v3045 = vpack.c.b16 %v3013, %v3011
        %3078 = vmatprep.subr.bf16.mxu0 %v3015
        %3079 = vmatpush1.bf16.msra.mxu0 %v3014
        %3080 = vmatprep.subr.bf16.mxu0 %v3017
        %3081 = vmatpush1.bf16.msra.mxu0 %v3016
        %3082 = vmatprep.subr.bf16.mxu0 %v3019
        %3083 = vmatpush1.bf16.msra.mxu0 %v3018
        %3084 = vmatprep.subr.bf16.mxu0 %v3021
        %3085 = vmatpush1.bf16.msra.mxu0 %v3020
        %3086 = vmatprep.subr.bf16.mxu0 %v3023
        %3087 = vmatpush1.bf16.msra.mxu0 %v3022
        %3088 = vmatprep.subr.bf16.mxu0 %v3025
        %3089 = vmatpush1.bf16.msra.mxu0 %v3024
        %3090 = vmatprep.subr.bf16.mxu0 %v3027
        %3091 = vmatpush1.bf16.msra.mxu0 %v3026
        %3092 = vmatprep.subr.bf16.mxu0 %v3029
        %3093 = vmatpush1.bf16.msra.mxu0 %v3028
        %3094 = vmatprep.subr.bf16.mxu0 %v3031
        %3095 = vmatpush1.bf16.msra.mxu0 %v3030
        %3096 = vmatprep.subr.bf16.mxu0 %v3033
        %3097 = vmatpush1.bf16.msra.mxu0 %v3032
        %3098 = vmatprep.subr.bf16.mxu0 %v3035
        %3099 = vmatpush1.bf16.msra.mxu0 %v3034
        %3100 = vmatprep.subr.bf16.mxu0 %v3037
        %3101 = vmatpush1.bf16.msra.mxu0 %v3036
        %3102 = vmatprep.subr.bf16.mxu0 %v3039
        %3103 = vmatpush1.bf16.msra.mxu0 %v3038
        %3104 = vmatprep.subr.bf16.mxu0 %v3041
        %3105 = vmatpush1.bf16.msra.mxu0 %v3040
        %3106 = vmatprep.subr.bf16.mxu0 %v3043
        %3107 = vmatpush1.bf16.msra.mxu0 %v3042
        %3108 = vmatprep.subr.bf16.mxu0 %v3045
        %3109 = vmatpush1.bf16.msra.mxu0 %v3044
        %3110 = vmatprep.mubr.bf16.mxu0 %v2859
        %3111 = vmatmul.mubr.bf16.gmra.mrb[0].mxu0 %v2858
        %v3112 = vpop.f32.mrb[0].mxu0
        %v3113 = vadd.f32 %v2911, %v3112
        %v3114 = vpop.f32.mrb[0].mxu0
        %v3115 = vadd.f32 %v2915, %v3114
        %v3116 = vpop.f32.mrb[0].mxu0
        %v3117 = vadd.f32 %v2911, %v3116
        %v3118 = vpop.f32.mrb[0].mxu0
        %v3119 = vadd.f32 %v2915, %v3118
        %3120 = vmatprep.mubr.bf16.mxu0 %v2861
        %3121 = vmatmul.mubr.bf16.gmra.mrb[0].mxu0 %v2860
        %v3122 = vpop.f32.mrb[0].mxu0
        %v3123 = vadd.f32 %v2911, %v3122
        %v3124 = vpop.f32.mrb[0].mxu0
        %v3125 = vadd.f32 %v2915, %v3124
        %v3126 = vpop.f32.mrb[0].mxu0
        %v3127 = vadd.f32 %v2911, %v3126
        %v3128 = vpop.f32.mrb[0].mxu0
        %v3129 = vadd.f32 %v2915, %v3128
        %3130 = vmatprep.mubr.bf16.mxu0 %v2863
        %3131 = vmatmul.mubr.bf16.gmra.mrb[0].mxu0 %v2862
        %v3132 = vpop.f32.mrb[0].mxu0
        %v3133 = vadd.f32 %v2911, %v3132
        %v3134 = vpop.f32.mrb[0].mxu0
        %v3135 = vadd.f32 %v2915, %v3134
        %v3136 = vpop.f32.mrb[0].mxu0
        %v3137 = vadd.f32 %v2911, %v3136
        %v3138 = vpop.f32.mrb[0].mxu0
        %v3139 = vadd.f32 %v2915, %v3138
        %3140 = vmatprep.mubr.bf16.mxu0 %v2865
        %3141 = vmatmul.mubr.bf16.gmra.mrb[0].mxu0 %v2864
        %v3142 = vpop.f32.mrb[0].mxu0
        %v3143 = vadd.f32 %v2911, %v3142
        %v3144 = vpop.f32.mrb[0].mxu0
        %v3145 = vadd.f32 %v2915, %v3144
        %v3146 = vpop.f32.mrb[0].mxu0
        %v3147 = vadd.f32 %v2911, %v3146
        %v3148 = vpop.f32.mrb[0].mxu0
        %v3149 = vadd.f32 %v2915, %v3148
        %3150 = vmatprep.mubr.bf16.mxu0 %v2867
        %3151 = vmatmul.mubr.bf16.gmra.mrb[0].mxu0 %v2866
        %v3152 = vpop.f32.mrb[0].mxu0
        %v3153 = vadd.f32 %v2911, %v3152
        %v3154 = vpop.f32.mrb[0].mxu0
        %v3155 = vadd.f32 %v2915, %v3154
        %v3156 = vpop.f32.mrb[0].mxu0
        %v3157 = vadd.f32 %v2911, %v3156
        %v3158 = vpop.f32.mrb[0].mxu0
        %v3159 = vadd.f32 %v2915, %v3158
        %3160 = vmatprep.mubr.bf16.mxu0 %v2869
        %3161 = vmatmul.mubr.bf16.gmra.mrb[0].mxu0 %v2868
        %v3162 = vpop.f32.mrb[0].mxu0
        %v3163 = vadd.f32 %v2911, %v3162
        %v3164 = vpop.f32.mrb[0].mxu0
        %v3165 = vadd.f32 %v2915, %v3164
        %v3166 = vpop.f32.mrb[0].mxu0
        %v3167 = vadd.f32 %v2911, %v3166
        %v3168 = vpop.f32.mrb[0].mxu0
        %v3169 = vadd.f32 %v2915, %v3168
        %3170 = vmatprep.mubr.bf16.mxu0 %v2871
        %3171 = vmatmul.mubr.bf16.gmra.mrb[0].mxu0 %v2870
        %v3172 = vpop.f32.mrb[0].mxu0
        %v3173 = vadd.f32 %v2911, %v3172
        %v3174 = vpop.f32.mrb[0].mxu0
        %v3175 = vadd.f32 %v2915, %v3174
        %v3176 = vpop.f32.mrb[0].mxu0
        %v3177 = vadd.f32 %v2911, %v3176
        %v3178 = vpop.f32.mrb[0].mxu0
        %v3179 = vadd.f32 %v2915, %v3178
        %3180 = vmatprep.mubr.bf16.mxu0 %v2873
        %3181 = vmatmul.mubr.bf16.gmra.mrb[0].mxu0 %v2872
        %v3182 = vpop.f32.mrb[0].mxu0
        %v3183 = vadd.f32 %v2911, %v3182
        %v3184 = vpop.f32.mrb[0].mxu0
        %v3185 = vadd.f32 %v2915, %v3184
        %v3186 = vpop.f32.mrb[0].mxu0
        %v3187 = vadd.f32 %v2911, %v3186
        %v3188 = vpop.f32.mrb[0].mxu0
        %v3189 = vadd.f32 %v2915, %v3188
        %3190 = vdwg.mxu0
        %vm3191 = vcmp.gt.f32.partialorder %v3113, 0.0
        %vm3192 = vcmp.gt.f32.partialorder %v3115, 0.0
        %vm3193 = vcmp.gt.f32.partialorder %v3117, 0.0
        %vm3194 = vcmp.gt.f32.partialorder %v3119, 0.0
        %vm3195 = vcmp.gt.f32.partialorder %v3123, 0.0
        %vm3196 = vcmp.gt.f32.partialorder %v3125, 0.0
        %vm3197 = vcmp.gt.f32.partialorder %v3127, 0.0
        %vm3198 = vcmp.gt.f32.partialorder %v3129, 0.0
        %vm3199 = vcmp.gt.f32.partialorder %v3133, 0.0
        %vm3200 = vcmp.gt.f32.partialorder %v3135, 0.0
        %vm3201 = vcmp.gt.f32.partialorder %v3137, 0.0
        %vm3202 = vcmp.gt.f32.partialorder %v3139, 0.0
        %vm3203 = vcmp.gt.f32.partialorder %v3143, 0.0
        %vm3204 = vcmp.gt.f32.partialorder %v3145, 0.0
        %vm3205 = vcmp.gt.f32.partialorder %v3147, 0.0
        %vm3206 = vcmp.gt.f32.partialorder %v3149, 0.0
        %vm3207 = vcmp.gt.f32.partialorder %v3153, 0.0
        %vm3208 = vcmp.gt.f32.partialorder %v3155, 0.0
        %vm3209 = vcmp.gt.f32.partialorder %v3157, 0.0
        %vm3210 = vcmp.gt.f32.partialorder %v3159, 0.0
        %vm3211 = vcmp.gt.f32.partialorder %v3163, 0.0
        %vm3212 = vcmp.gt.f32.partialorder %v3165, 0.0
        %vm3213 = vcmp.gt.f32.partialorder %v3167, 0.0
        %vm3214 = vcmp.gt.f32.partialorder %v3169, 0.0
        %vm3215 = vcmp.gt.f32.partialorder %v3173, 0.0
        %vm3216 = vcmp.gt.f32.partialorder %v3175, 0.0
        %vm3217 = vcmp.gt.f32.partialorder %v3177, 0.0
        %vm3218 = vcmp.gt.f32.partialorder %v3179, 0.0
        %vm3219 = vcmp.gt.f32.partialorder %v3183, 0.0
        %vm3220 = vcmp.gt.f32.partialorder %v3185, 0.0
        %vm3221 = vcmp.gt.f32.partialorder %v3187, 0.0
        %vm3222 = vcmp.gt.f32.partialorder %v3189, 0.0
        %v3223 = vmul.f32 %v3113, 0.01
        %v3224 = vmul.f32 %v3115, 0.01
        %v3225 = vmul.f32 %v3117, 0.01
        %v3226 = vmul.f32 %v3119, 0.01
        %v3227 = vmul.f32 %v3123, 0.01
        %v3228 = vmul.f32 %v3125, 0.01
        %v3229 = vmul.f32 %v3127, 0.01
        %v3230 = vmul.f32 %v3129, 0.01
        %v3231 = vmul.f32 %v3133, 0.01
        %v3232 = vmul.f32 %v3135, 0.01
        %v3233 = vmul.f32 %v3137, 0.01
        %v3234 = vmul.f32 %v3139, 0.01
        %v3235 = vmul.f32 %v3143, 0.01
        %v3236 = vmul.f32 %v3145, 0.01
        %v3237 = vmul.f32 %v3147, 0.01
        %v3238 = vmul.f32 %v3149, 0.01
        %v3239 = vmul.f32 %v3153, 0.01
        %v3240 = vmul.f32 %v3155, 0.01
        %v3241 = vmul.f32 %v3157, 0.01
        %v3242 = vmul.f32 %v3159, 0.01
        %v3243 = vmul.f32 %v3163, 0.01
        %v3244 = vmul.f32 %v3165, 0.01
        %v3245 = vmul.f32 %v3167, 0.01
        %v3246 = vmul.f32 %v3169, 0.01
        %v3247 = vmul.f32 %v3173, 0.01
        %v3248 = vmul.f32 %v3175, 0.01
        %v3249 = vmul.f32 %v3177, 0.01
        %v3250 = vmul.f32 %v3179, 0.01
        %v3251 = vmul.f32 %v3183, 0.01
        %v3252 = vmul.f32 %v3185, 0.01
        %v3253 = vmul.f32 %v3187, 0.01
        %v3254 = vmul.f32 %v3189, 0.01
        %v3255 = vsel %vm3191, %v3113, %v3223
        %v3256 = vsel %vm3192, %v3115, %v3224
        %v3257 = vsel %vm3193, %v3117, %v3225
        %v3258 = vsel %vm3194, %v3119, %v3226
        %v3259 = vsel %vm3195, %v3123, %v3227
        %v3260 = vsel %vm3196, %v3125, %v3228
        %v3261 = vsel %vm3197, %v3127, %v3229
        %v3262 = vsel %vm3198, %v3129, %v3230
        %v3263 = vsel %vm3199, %v3133, %v3231
        %v3264 = vsel %vm3200, %v3135, %v3232
        %v3265 = vsel %vm3201, %v3137, %v3233
        %v3266 = vsel %vm3202, %v3139, %v3234
        %v3267 = vsel %vm3203, %v3143, %v3235
        %v3268 = vsel %vm3204, %v3145, %v3236
        %v3269 = vsel %vm3205, %v3147, %v3237
        %v3270 = vsel %vm3206, %v3149, %v3238
        %v3271 = vsel %vm3207, %v3153, %v3239
        %v3272 = vsel %vm3208, %v3155, %v3240
        %v3273 = vsel %vm3209, %v3157, %v3241
        %v3274 = vsel %vm3210, %v3159, %v3242
        %v3275 = vsel %vm3211, %v3163, %v3243
        %v3276 = vsel %vm3212, %v3165, %v3244
        %v3277 = vsel %vm3213, %v3167, %v3245
        %v3278 = vsel %vm3214, %v3169, %v3246
        %v3279 = vsel %vm3215, %v3173, %v3247
        %v3280 = vsel %vm3216, %v3175, %v3248
        %v3281 = vsel %vm3217, %v3177, %v3249
        %v3282 = vsel %vm3218, %v3179, %v3250
        %v3283 = vsel %vm3219, %v3183, %v3251
        %v3284 = vsel %vm3220, %v3185, %v3252
        %v3285 = vsel %vm3221, %v3187, %v3253
        %v3286 = vsel %vm3222, %v3189, %v3254
        %v3287 = vpack.c.bf16 %v3257, %v3255
        %v3288 = vpack.c.bf16 %v3258, %v3256
        %v3289 = vpack.c.bf16 %v3261, %v3259
        %v3290 = vpack.c.bf16 %v3262, %v3260
        %v3291 = vpack.c.bf16 %v3265, %v3263
        %v3292 = vpack.c.bf16 %v3266, %v3264
        %v3293 = vpack.c.bf16 %v3269, %v3267
        %v3294 = vpack.c.bf16 %v3270, %v3268
        %v3295 = vpack.c.bf16 %v3273, %v3271
        %v3296 = vpack.c.bf16 %v3274, %v3272
        %v3297 = vpack.c.bf16 %v3277, %v3275
        %v3298 = vpack.c.bf16 %v3278, %v3276
        %v3299 = vpack.c.bf16 %v3281, %v3279
        %v3300 = vpack.c.bf16 %v3282, %v3280
        %v3301 = vpack.c.bf16 %v3285, %v3283
        %v3302 = vpack.c.bf16 %v3286, %v3284
        %v3303 = vld [vmem:[#allocation5] sm:$0xff]
        %v3304 = vld [vmem:[#allocation5 + $0x8] sm:$0xff]
        %v3305 = vld [vmem:[#allocation5 + $0x10] sm:$0xff]
        %v3306 = vld [vmem:[#allocation5 + $0x18] sm:$0xff]
        %v3307 = vld [vmem:[#allocation5 + $0x20] sm:$0xff]
        %v3308 = vld [vmem:[#allocation5 + $0x28] sm:$0xff]
        %v3309 = vld [vmem:[#allocation5 + $0x30] sm:$0xff]
        %v3310 = vld [vmem:[#allocation5 + $0x38] sm:$0xff]
        %v3311 = vld [vmem:[#allocation5 + $0x40] sm:$0xff]
        %v3312 = vld [vmem:[#allocation5 + $0x48] sm:$0xff]
        %v3313 = vld [vmem:[#allocation5 + $0x50] sm:$0xff]
        %v3314 = vld [vmem:[#allocation5 + $0x58] sm:$0xff]
        %v3315 = vld [vmem:[#allocation5 + $0x60] sm:$0xff]
        %v3316 = vld [vmem:[#allocation5 + $0x68] sm:$0xff]
        %v3317 = vld [vmem:[#allocation5 + $0x70] sm:$0xff]
        %v3318 = vld [vmem:[#allocation5 + $0x78] sm:$0xff]
        %v3319 = vld [vmem:[#allocation5 + $0x80] sm:$0xff]
        %v3320 = vld [vmem:[#allocation5 + $0x88] sm:$0xff]
        %v3321 = vld [vmem:[#allocation5 + $0x90] sm:$0xff]
        %v3322 = vld [vmem:[#allocation5 + $0x98] sm:$0xff]
        %v3323 = vld [vmem:[#allocation5 + $0xa0] sm:$0xff]
        %v3324 = vld [vmem:[#allocation5 + $0xa8] sm:$0xff]
        %v3325 = vld [vmem:[#allocation5 + $0xb0] sm:$0xff]
        %v3326 = vld [vmem:[#allocation5 + $0xb8] sm:$0xff]
        %v3327 = vld [vmem:[#allocation5 + $0xc0] sm:$0xff]
        %v3328 = vld [vmem:[#allocation5 + $0xc8] sm:$0xff]
        %v3329 = vld [vmem:[#allocation5 + $0xd0] sm:$0xff]
        %v3330 = vld [vmem:[#allocation5 + $0xd8] sm:$0xff]
        %v3331 = vld [vmem:[#allocation5 + $0xe0] sm:$0xff]
        %v3332 = vld [vmem:[#allocation5 + $0xe8] sm:$0xff]
        %v3333 = vld [vmem:[#allocation5 + $0xf0] sm:$0xff]
        %v3334 = vld [vmem:[#allocation5 + $0xf8] sm:$0xff]
        %v3335 = vld [vmem:[%s13] sm:$0x3]
        %v3337 = vlaneseq
        %v3338 = vshrl.u32 %v3337, 7
        %v3339 = vsub.s32 0, %v3338
        %v3340 = vrot.slane %v3335, %v3339
        %v3341 = vlaneseq
        %v3342 = vshrl.u32 %v3341, 7
        %v3343 = vsub.s32 1, %v3342
        %v3344 = vrot.slane %v3335, %v3343
        %v3379 = vunpack.c.l.b16 %v3303
        %v3380 = vunpack.c.h.b16 %v3303
        %v3381 = vunpack.c.l.b16 %v3304
        %v3382 = vunpack.c.h.b16 %v3304
        %v3383 = vunpack.c.l.b16 %v3305
        %v3384 = vunpack.c.h.b16 %v3305
        %v3385 = vunpack.c.l.b16 %v3306
        %v3386 = vunpack.c.h.b16 %v3306
        %v3387 = vunpack.c.l.b16 %v3307
        %v3388 = vunpack.c.h.b16 %v3307
        %v3389 = vunpack.c.l.b16 %v3308
        %v3390 = vunpack.c.h.b16 %v3308
        %v3391 = vunpack.c.l.b16 %v3309
        %v3392 = vunpack.c.h.b16 %v3309
        %v3393 = vunpack.c.l.b16 %v3310
        %v3394 = vunpack.c.h.b16 %v3310
        %v3395 = vunpack.c.l.b16 %v3311
        %v3396 = vunpack.c.h.b16 %v3311
        %v3397 = vunpack.c.l.b16 %v3312
        %v3398 = vunpack.c.h.b16 %v3312
        %v3399 = vunpack.c.l.b16 %v3313
        %v3400 = vunpack.c.h.b16 %v3313
        %v3401 = vunpack.c.l.b16 %v3314
        %v3402 = vunpack.c.h.b16 %v3314
        %v3403 = vunpack.c.l.b16 %v3315
        %v3404 = vunpack.c.h.b16 %v3315
        %v3405 = vunpack.c.l.b16 %v3316
        %v3406 = vunpack.c.h.b16 %v3316
        %v3407 = vunpack.c.l.b16 %v3317
        %v3408 = vunpack.c.h.b16 %v3317
        %v3409 = vunpack.c.l.b16 %v3318
        %v3410 = vunpack.c.h.b16 %v3318
        %v3411 = vunpack.c.l.b16 %v3319
        %v3412 = vunpack.c.h.b16 %v3319
        %v3413 = vunpack.c.l.b16 %v3320
        %v3414 = vunpack.c.h.b16 %v3320
        %v3415 = vunpack.c.l.b16 %v3321
        %v3416 = vunpack.c.h.b16 %v3321
        %v3417 = vunpack.c.l.b16 %v3322
        %v3418 = vunpack.c.h.b16 %v3322
        %v3419 = vunpack.c.l.b16 %v3323
        %v3420 = vunpack.c.h.b16 %v3323
        %v3421 = vunpack.c.l.b16 %v3324
        %v3422 = vunpack.c.h.b16 %v3324
        %v3423 = vunpack.c.l.b16 %v3325
        %v3424 = vunpack.c.h.b16 %v3325
        %v3425 = vunpack.c.l.b16 %v3326
        %v3426 = vunpack.c.h.b16 %v3326
        %v3427 = vunpack.c.l.b16 %v3327
        %v3428 = vunpack.c.h.b16 %v3327
        %v3429 = vunpack.c.l.b16 %v3328
        %v3430 = vunpack.c.h.b16 %v3328
        %v3431 = vunpack.c.l.b16 %v3329
        %v3432 = vunpack.c.h.b16 %v3329
        %v3433 = vunpack.c.l.b16 %v3330
        %v3434 = vunpack.c.h.b16 %v3330
        %v3435 = vunpack.c.l.b16 %v3331
        %v3436 = vunpack.c.h.b16 %v3331
        %v3437 = vunpack.c.l.b16 %v3332
        %v3438 = vunpack.c.h.b16 %v3332
        %v3439 = vunpack.c.l.b16 %v3333
        %v3440 = vunpack.c.h.b16 %v3333
        %v3441 = vunpack.c.l.b16 %v3334
        %v3442 = vunpack.c.h.b16 %v3334
        %v3443 = vpack.c.b16 %v3381, %v3379
        %v3444 = vpack.c.b16 %v3382, %v3380
        %v3445 = vpack.c.b16 %v3385, %v3383
        %v3446 = vpack.c.b16 %v3386, %v3384
        %v3447 = vpack.c.b16 %v3389, %v3387
        %v3448 = vpack.c.b16 %v3390, %v3388
        %v3449 = vpack.c.b16 %v3393, %v3391
        %v3450 = vpack.c.b16 %v3394, %v3392
        %v3451 = vpack.c.b16 %v3397, %v3395
        %v3452 = vpack.c.b16 %v3398, %v3396
        %v3453 = vpack.c.b16 %v3401, %v3399
        %v3454 = vpack.c.b16 %v3402, %v3400
        %v3455 = vpack.c.b16 %v3405, %v3403
        %v3456 = vpack.c.b16 %v3406, %v3404
        %v3457 = vpack.c.b16 %v3409, %v3407
        %v3458 = vpack.c.b16 %v3410, %v3408
        %v3459 = vpack.c.b16 %v3413, %v3411
        %v3460 = vpack.c.b16 %v3414, %v3412
        %v3461 = vpack.c.b16 %v3417, %v3415
        %v3462 = vpack.c.b16 %v3418, %v3416
        %v3463 = vpack.c.b16 %v3421, %v3419
        %v3464 = vpack.c.b16 %v3422, %v3420
        %v3465 = vpack.c.b16 %v3425, %v3423
        %v3466 = vpack.c.b16 %v3426, %v3424
        %v3467 = vpack.c.b16 %v3429, %v3427
        %v3468 = vpack.c.b16 %v3430, %v3428
        %v3469 = vpack.c.b16 %v3433, %v3431
        %v3470 = vpack.c.b16 %v3434, %v3432
        %v3471 = vpack.c.b16 %v3437, %v3435
        %v3472 = vpack.c.b16 %v3438, %v3436
        %v3473 = vpack.c.b16 %v3441, %v3439
        %v3474 = vpack.c.b16 %v3442, %v3440
        %3507 = vmatprep.subr.bf16.mxu0 %v3444
        %3508 = vmatpush1.bf16.msra.mxu0 %v3443
        %3509 = vmatprep.subr.bf16.mxu0 %v3446
        %3510 = vmatpush1.bf16.msra.mxu0 %v3445
        %3511 = vmatprep.subr.bf16.mxu0 %v3448
        %3512 = vmatpush1.bf16.msra.mxu0 %v3447
        %3513 = vmatprep.subr.bf16.mxu0 %v3450
        %3514 = vmatpush1.bf16.msra.mxu0 %v3449
        %3515 = vmatprep.subr.bf16.mxu0 %v3452
        %3516 = vmatpush1.bf16.msra.mxu0 %v3451
        %3517 = vmatprep.subr.bf16.mxu0 %v3454
        %3518 = vmatpush1.bf16.msra.mxu0 %v3453
        %3519 = vmatprep.subr.bf16.mxu0 %v3456
        %3520 = vmatpush1.bf16.msra.mxu0 %v3455
        %3521 = vmatprep.subr.bf16.mxu0 %v3458
        %3522 = vmatpush1.bf16.msra.mxu0 %v3457
        %3523 = vmatprep.subr.bf16.mxu0 %v3460
        %3524 = vmatpush1.bf16.msra.mxu0 %v3459
        %3525 = vmatprep.subr.bf16.mxu0 %v3462
        %3526 = vmatpush1.bf16.msra.mxu0 %v3461
        %3527 = vmatprep.subr.bf16.mxu0 %v3464
        %3528 = vmatpush1.bf16.msra.mxu0 %v3463
        %3529 = vmatprep.subr.bf16.mxu0 %v3466
        %3530 = vmatpush1.bf16.msra.mxu0 %v3465
        %3531 = vmatprep.subr.bf16.mxu0 %v3468
        %3532 = vmatpush1.bf16.msra.mxu0 %v3467
        %3533 = vmatprep.subr.bf16.mxu0 %v3470
        %3534 = vmatpush1.bf16.msra.mxu0 %v3469
        %3535 = vmatprep.subr.bf16.mxu0 %v3472
        %3536 = vmatpush1.bf16.msra.mxu0 %v3471
        %3537 = vmatprep.subr.bf16.mxu0 %v3474
        %3538 = vmatpush1.bf16.msra.mxu0 %v3473
        %3539 = vmatprep.mubr.bf16.mxu0 %v3288
        %3540 = vmatmul.mubr.bf16.gmra.mrb[0].mxu0 %v3287
        %v3541 = vpop.f32.mrb[0].mxu0
        %v3542 = vadd.f32 %v3340, %v3541
        %v3543 = vpop.f32.mrb[0].mxu0
        %v3544 = vadd.f32 %v3344, %v3543
        %v3545 = vpop.f32.mrb[0].mxu0
        %v3546 = vadd.f32 %v3340, %v3545
        %v3547 = vpop.f32.mrb[0].mxu0
        %v3548 = vadd.f32 %v3344, %v3547
        %3549 = vmatprep.mubr.bf16.mxu0 %v3290
        %3550 = vmatmul.mubr.bf16.gmra.mrb[0].mxu0 %v3289
        %v3551 = vpop.f32.mrb[0].mxu0
        %v3552 = vadd.f32 %v3340, %v3551
        %v3553 = vpop.f32.mrb[0].mxu0
        %v3554 = vadd.f32 %v3344, %v3553
        %v3555 = vpop.f32.mrb[0].mxu0
        %v3556 = vadd.f32 %v3340, %v3555
        %v3557 = vpop.f32.mrb[0].mxu0
        %v3558 = vadd.f32 %v3344, %v3557
        %3559 = vmatprep.mubr.bf16.mxu0 %v3292
        %3560 = vmatmul.mubr.bf16.gmra.mrb[0].mxu0 %v3291
        %v3561 = vpop.f32.mrb[0].mxu0
        %v3562 = vadd.f32 %v3340, %v3561
        %v3563 = vpop.f32.mrb[0].mxu0
        %v3564 = vadd.f32 %v3344, %v3563
        %v3565 = vpop.f32.mrb[0].mxu0
        %v3566 = vadd.f32 %v3340, %v3565
        %v3567 = vpop.f32.mrb[0].mxu0
        %v3568 = vadd.f32 %v3344, %v3567
        %3569 = vmatprep.mubr.bf16.mxu0 %v3294
        %3570 = vmatmul.mubr.bf16.gmra.mrb[0].mxu0 %v3293
        %v3571 = vpop.f32.mrb[0].mxu0
        %v3572 = vadd.f32 %v3340, %v3571
        %v3573 = vpop.f32.mrb[0].mxu0
        %v3574 = vadd.f32 %v3344, %v3573
        %v3575 = vpop.f32.mrb[0].mxu0
        %v3576 = vadd.f32 %v3340, %v3575
        %v3577 = vpop.f32.mrb[0].mxu0
        %v3578 = vadd.f32 %v3344, %v3577
        %3579 = vmatprep.mubr.bf16.mxu0 %v3296
        %3580 = vmatmul.mubr.bf16.gmra.mrb[0].mxu0 %v3295
        %v3581 = vpop.f32.mrb[0].mxu0
        %v3582 = vadd.f32 %v3340, %v3581
        %v3583 = vpop.f32.mrb[0].mxu0
        %v3584 = vadd.f32 %v3344, %v3583
        %v3585 = vpop.f32.mrb[0].mxu0
        %v3586 = vadd.f32 %v3340, %v3585
        %v3587 = vpop.f32.mrb[0].mxu0
        %v3588 = vadd.f32 %v3344, %v3587
        %3589 = vmatprep.mubr.bf16.mxu0 %v3298
        %3590 = vmatmul.mubr.bf16.gmra.mrb[0].mxu0 %v3297
        %v3591 = vpop.f32.mrb[0].mxu0
        %v3592 = vadd.f32 %v3340, %v3591
        %v3593 = vpop.f32.mrb[0].mxu0
        %v3594 = vadd.f32 %v3344, %v3593
        %v3595 = vpop.f32.mrb[0].mxu0
        %v3596 = vadd.f32 %v3340, %v3595
        %v3597 = vpop.f32.mrb[0].mxu0
        %v3598 = vadd.f32 %v3344, %v3597
        %3599 = vmatprep.mubr.bf16.mxu0 %v3300
        %3600 = vmatmul.mubr.bf16.gmra.mrb[0].mxu0 %v3299
        %v3601 = vpop.f32.mrb[0].mxu0
        %v3602 = vadd.f32 %v3340, %v3601
        %v3603 = vpop.f32.mrb[0].mxu0
        %v3604 = vadd.f32 %v3344, %v3603
        %v3605 = vpop.f32.mrb[0].mxu0
        %v3606 = vadd.f32 %v3340, %v3605
        %v3607 = vpop.f32.mrb[0].mxu0
        %v3608 = vadd.f32 %v3344, %v3607
        %3609 = vmatprep.mubr.bf16.mxu0 %v3302
        %3610 = vmatmul.mubr.bf16.gmra.mrb[0].mxu0 %v3301
        %v3611 = vpop.f32.mrb[0].mxu0
        %v3612 = vadd.f32 %v3340, %v3611
        %v3613 = vpop.f32.mrb[0].mxu0
        %v3614 = vadd.f32 %v3344, %v3613
        %v3615 = vpop.f32.mrb[0].mxu0
        %v3616 = vadd.f32 %v3340, %v3615
        %v3617 = vpop.f32.mrb[0].mxu0
        %v3618 = vadd.f32 %v3344, %v3617
        %3619 = vdwg.mxu0
        %vm3620 = vcmp.gt.f32.partialorder %v3542, 0.0
        %vm3621 = vcmp.gt.f32.partialorder %v3544, 0.0
        %vm3622 = vcmp.gt.f32.partialorder %v3546, 0.0
        %vm3623 = vcmp.gt.f32.partialorder %v3548, 0.0
        %vm3624 = vcmp.gt.f32.partialorder %v3552, 0.0
        %vm3625 = vcmp.gt.f32.partialorder %v3554, 0.0
        %vm3626 = vcmp.gt.f32.partialorder %v3556, 0.0
        %vm3627 = vcmp.gt.f32.partialorder %v3558, 0.0
        %vm3628 = vcmp.gt.f32.partialorder %v3562, 0.0
        %vm3629 = vcmp.gt.f32.partialorder %v3564, 0.0
        %vm3630 = vcmp.gt.f32.partialorder %v3566, 0.0
        %vm3631 = vcmp.gt.f32.partialorder %v3568, 0.0
        %vm3632 = vcmp.gt.f32.partialorder %v3572, 0.0
        %vm3633 = vcmp.gt.f32.partialorder %v3574, 0.0
        %vm3634 = vcmp.gt.f32.partialorder %v3576, 0.0
        %vm3635 = vcmp.gt.f32.partialorder %v3578, 0.0
        %vm3636 = vcmp.gt.f32.partialorder %v3582, 0.0
        %vm3637 = vcmp.gt.f32.partialorder %v3584, 0.0
        %vm3638 = vcmp.gt.f32.partialorder %v3586, 0.0
        %vm3639 = vcmp.gt.f32.partialorder %v3588, 0.0
        %vm3640 = vcmp.gt.f32.partialorder %v3592, 0.0
        %vm3641 = vcmp.gt.f32.partialorder %v3594, 0.0
        %vm3642 = vcmp.gt.f32.partialorder %v3596, 0.0
        %vm3643 = vcmp.gt.f32.partialorder %v3598, 0.0
        %vm3644 = vcmp.gt.f32.partialorder %v3602, 0.0
        %vm3645 = vcmp.gt.f32.partialorder %v3604, 0.0
        %vm3646 = vcmp.gt.f32.partialorder %v3606, 0.0
        %vm3647 = vcmp.gt.f32.partialorder %v3608, 0.0
        %vm3648 = vcmp.gt.f32.partialorder %v3612, 0.0
        %vm3649 = vcmp.gt.f32.partialorder %v3614, 0.0
        %vm3650 = vcmp.gt.f32.partialorder %v3616, 0.0
        %vm3651 = vcmp.gt.f32.partialorder %v3618, 0.0
        %v3652 = vmul.f32 %v3542, 0.01
        %v3653 = vmul.f32 %v3544, 0.01
        %v3654 = vmul.f32 %v3546, 0.01
        %v3655 = vmul.f32 %v3548, 0.01
        %v3656 = vmul.f32 %v3552, 0.01
        %v3657 = vmul.f32 %v3554, 0.01
        %v3658 = vmul.f32 %v3556, 0.01
        %v3659 = vmul.f32 %v3558, 0.01
        %v3660 = vmul.f32 %v3562, 0.01
        %v3661 = vmul.f32 %v3564, 0.01
        %v3662 = vmul.f32 %v3566, 0.01
        %v3663 = vmul.f32 %v3568, 0.01
        %v3664 = vmul.f32 %v3572, 0.01
        %v3665 = vmul.f32 %v3574, 0.01
        %v3666 = vmul.f32 %v3576, 0.01
        %v3667 = vmul.f32 %v3578, 0.01
        %v3668 = vmul.f32 %v3582, 0.01
        %v3669 = vmul.f32 %v3584, 0.01
        %v3670 = vmul.f32 %v3586, 0.01
        %v3671 = vmul.f32 %v3588, 0.01
        %v3672 = vmul.f32 %v3592, 0.01
        %v3673 = vmul.f32 %v3594, 0.01
        %v3674 = vmul.f32 %v3596, 0.01
        %v3675 = vmul.f32 %v3598, 0.01
        %v3676 = vmul.f32 %v3602, 0.01
        %v3677 = vmul.f32 %v3604, 0.01
        %v3678 = vmul.f32 %v3606, 0.01
        %v3679 = vmul.f32 %v3608, 0.01
        %v3680 = vmul.f32 %v3612, 0.01
        %v3681 = vmul.f32 %v3614, 0.01
        %v3682 = vmul.f32 %v3616, 0.01
        %v3683 = vmul.f32 %v3618, 0.01
        %v3684 = vsel %vm3620, %v3542, %v3652
        %v3685 = vsel %vm3621, %v3544, %v3653
        %v3686 = vsel %vm3622, %v3546, %v3654
        %v3687 = vsel %vm3623, %v3548, %v3655
        %v3688 = vsel %vm3624, %v3552, %v3656
        %v3689 = vsel %vm3625, %v3554, %v3657
        %v3690 = vsel %vm3626, %v3556, %v3658
        %v3691 = vsel %vm3627, %v3558, %v3659
        %v3692 = vsel %vm3628, %v3562, %v3660
        %v3693 = vsel %vm3629, %v3564, %v3661
        %v3694 = vsel %vm3630, %v3566, %v3662
        %v3695 = vsel %vm3631, %v3568, %v3663
        %v3696 = vsel %vm3632, %v3572, %v3664
        %v3697 = vsel %vm3633, %v3574, %v3665
        %v3698 = vsel %vm3634, %v3576, %v3666
        %v3699 = vsel %vm3635, %v3578, %v3667
        %v3700 = vsel %vm3636, %v3582, %v3668
        %v3701 = vsel %vm3637, %v3584, %v3669
        %v3702 = vsel %vm3638, %v3586, %v3670
        %v3703 = vsel %vm3639, %v3588, %v3671
        %v3704 = vsel %vm3640, %v3592, %v3672
        %v3705 = vsel %vm3641, %v3594, %v3673
        %v3706 = vsel %vm3642, %v3596, %v3674
        %v3707 = vsel %vm3643, %v3598, %v3675
        %v3708 = vsel %vm3644, %v3602, %v3676
        %v3709 = vsel %vm3645, %v3604, %v3677
        %v3710 = vsel %vm3646, %v3606, %v3678
        %v3711 = vsel %vm3647, %v3608, %v3679
        %v3712 = vsel %vm3648, %v3612, %v3680
        %v3713 = vsel %vm3649, %v3614, %v3681
        %v3714 = vsel %vm3650, %v3616, %v3682
        %v3715 = vsel %vm3651, %v3618, %v3683
        %v3716 = vpack.c.bf16 %v1750, %v1746
        %v3717 = vpack.c.bf16 %v1751, %v1747
        %v3718 = vpack.c.bf16 %v1758, %v1754
        %v3719 = vpack.c.bf16 %v1759, %v1755
        %v3720 = vpack.c.bf16 %v1766, %v1762
        %v3721 = vpack.c.bf16 %v1767, %v1763
        %v3722 = vpack.c.bf16 %v1774, %v1770
        %v3723 = vpack.c.bf16 %v1775, %v1771
        %v3724 = vpack.c.bf16 %v1782, %v1778
        %v3725 = vpack.c.bf16 %v1783, %v1779
        %v3726 = vpack.c.bf16 %v1790, %v1786
        %v3727 = vpack.c.bf16 %v1791, %v1787
        %v3728 = vpack.c.bf16 %v1798, %v1794
        %v3729 = vpack.c.bf16 %v1799, %v1795
        %v3730 = vpack.c.bf16 %v1806, %v1802
        %v3731 = vpack.c.bf16 %v1807, %v1803
        %v3732 = vld [vmem:[#allocation7] sm:$0xff]
        %v3733 = vld [vmem:[#allocation7 + $0x8] sm:$0xff]
        %v3734 = vld [vmem:[#allocation7 + $0x10] sm:$0xff]
        %v3735 = vld [vmem:[#allocation7 + $0x18] sm:$0xff]
        %v3736 = vld [vmem:[#allocation7 + $0x20] sm:$0xff]
        %v3737 = vld [vmem:[#allocation7 + $0x28] sm:$0xff]
        %v3738 = vld [vmem:[#allocation7 + $0x30] sm:$0xff]
        %v3739 = vld [vmem:[#allocation7 + $0x38] sm:$0xff]
        %v3740 = vld [vmem:[#allocation7 + $0x40] sm:$0xff]
        %v3741 = vld [vmem:[#allocation7 + $0x48] sm:$0xff]
        %v3742 = vld [vmem:[#allocation7 + $0x50] sm:$0xff]
        %v3743 = vld [vmem:[#allocation7 + $0x58] sm:$0xff]
        %v3744 = vld [vmem:[#allocation7 + $0x60] sm:$0xff]
        %v3745 = vld [vmem:[#allocation7 + $0x68] sm:$0xff]
        %v3746 = vld [vmem:[#allocation7 + $0x70] sm:$0xff]
        %v3747 = vld [vmem:[#allocation7 + $0x78] sm:$0xff]
        %v3748 = vld [vmem:[#allocation7 + $0x80] sm:$0xff]
        %v3749 = vld [vmem:[#allocation7 + $0x88] sm:$0xff]
        %v3750 = vld [vmem:[#allocation7 + $0x90] sm:$0xff]
        %v3751 = vld [vmem:[#allocation7 + $0x98] sm:$0xff]
        %v3752 = vld [vmem:[#allocation7 + $0xa0] sm:$0xff]
        %v3753 = vld [vmem:[#allocation7 + $0xa8] sm:$0xff]
        %v3754 = vld [vmem:[#allocation7 + $0xb0] sm:$0xff]
        %v3755 = vld [vmem:[#allocation7 + $0xb8] sm:$0xff]
        %v3756 = vld [vmem:[#allocation7 + $0xc0] sm:$0xff]
        %v3757 = vld [vmem:[#allocation7 + $0xc8] sm:$0xff]
        %v3758 = vld [vmem:[#allocation7 + $0xd0] sm:$0xff]
        %v3759 = vld [vmem:[#allocation7 + $0xd8] sm:$0xff]
        %v3760 = vld [vmem:[#allocation7 + $0xe0] sm:$0xff]
        %v3761 = vld [vmem:[#allocation7 + $0xe8] sm:$0xff]
        %v3762 = vld [vmem:[#allocation7 + $0xf0] sm:$0xff]
        %v3763 = vld [vmem:[#allocation7 + $0xf8] sm:$0xff]
        %v3764 = vld [vmem:[%s15] sm:$0x3]
        %v3766 = vlaneseq
        %v3767 = vshrl.u32 %v3766, 7
        %v3768 = vsub.s32 0, %v3767
        %v3769 = vrot.slane %v3764, %v3768
        %v3770 = vlaneseq
        %v3771 = vshrl.u32 %v3770, 7
        %v3772 = vsub.s32 1, %v3771
        %v3773 = vrot.slane %v3764, %v3772
        %v3808 = vunpack.c.l.b16 %v3732
        %v3809 = vunpack.c.h.b16 %v3732
        %v3810 = vunpack.c.l.b16 %v3733
        %v3811 = vunpack.c.h.b16 %v3733
        %v3812 = vunpack.c.l.b16 %v3734
        %v3813 = vunpack.c.h.b16 %v3734
        %v3814 = vunpack.c.l.b16 %v3735
        %v3815 = vunpack.c.h.b16 %v3735
        %v3816 = vunpack.c.l.b16 %v3736
        %v3817 = vunpack.c.h.b16 %v3736
        %v3818 = vunpack.c.l.b16 %v3737
        %v3819 = vunpack.c.h.b16 %v3737
        %v3820 = vunpack.c.l.b16 %v3738
        %v3821 = vunpack.c.h.b16 %v3738
        %v3822 = vunpack.c.l.b16 %v3739
        %v3823 = vunpack.c.h.b16 %v3739
        %v3824 = vunpack.c.l.b16 %v3740
        %v3825 = vunpack.c.h.b16 %v3740
        %v3826 = vunpack.c.l.b16 %v3741
        %v3827 = vunpack.c.h.b16 %v3741
        %v3828 = vunpack.c.l.b16 %v3742
        %v3829 = vunpack.c.h.b16 %v3742
        %v3830 = vunpack.c.l.b16 %v3743
        %v3831 = vunpack.c.h.b16 %v3743
        %v3832 = vunpack.c.l.b16 %v3744
        %v3833 = vunpack.c.h.b16 %v3744
        %v3834 = vunpack.c.l.b16 %v3745
        %v3835 = vunpack.c.h.b16 %v3745
        %v3836 = vunpack.c.l.b16 %v3746
        %v3837 = vunpack.c.h.b16 %v3746
        %v3838 = vunpack.c.l.b16 %v3747
        %v3839 = vunpack.c.h.b16 %v3747
        %v3840 = vunpack.c.l.b16 %v3748
        %v3841 = vunpack.c.h.b16 %v3748
        %v3842 = vunpack.c.l.b16 %v3749
        %v3843 = vunpack.c.h.b16 %v3749
        %v3844 = vunpack.c.l.b16 %v3750
        %v3845 = vunpack.c.h.b16 %v3750
        %v3846 = vunpack.c.l.b16 %v3751
        %v3847 = vunpack.c.h.b16 %v3751
        %v3848 = vunpack.c.l.b16 %v3752
        %v3849 = vunpack.c.h.b16 %v3752
        %v3850 = vunpack.c.l.b16 %v3753
        %v3851 = vunpack.c.h.b16 %v3753
        %v3852 = vunpack.c.l.b16 %v3754
        %v3853 = vunpack.c.h.b16 %v3754
        %v3854 = vunpack.c.l.b16 %v3755
        %v3855 = vunpack.c.h.b16 %v3755
        %v3856 = vunpack.c.l.b16 %v3756
        %v3857 = vunpack.c.h.b16 %v3756
        %v3858 = vunpack.c.l.b16 %v3757
        %v3859 = vunpack.c.h.b16 %v3757
        %v3860 = vunpack.c.l.b16 %v3758
        %v3861 = vunpack.c.h.b16 %v3758
        %v3862 = vunpack.c.l.b16 %v3759
        %v3863 = vunpack.c.h.b16 %v3759
        %v3864 = vunpack.c.l.b16 %v3760
        %v3865 = vunpack.c.h.b16 %v3760
        %v3866 = vunpack.c.l.b16 %v3761
        %v3867 = vunpack.c.h.b16 %v3761
        %v3868 = vunpack.c.l.b16 %v3762
        %v3869 = vunpack.c.h.b16 %v3762
        %v3870 = vunpack.c.l.b16 %v3763
        %v3871 = vunpack.c.h.b16 %v3763
        %v3872 = vpack.c.b16 %v3810, %v3808
        %v3873 = vpack.c.b16 %v3811, %v3809
        %v3874 = vpack.c.b16 %v3814, %v3812
        %v3875 = vpack.c.b16 %v3815, %v3813
        %v3876 = vpack.c.b16 %v3818, %v3816
        %v3877 = vpack.c.b16 %v3819, %v3817
        %v3878 = vpack.c.b16 %v3822, %v3820
        %v3879 = vpack.c.b16 %v3823, %v3821
        %v3880 = vpack.c.b16 %v3826, %v3824
        %v3881 = vpack.c.b16 %v3827, %v3825
        %v3882 = vpack.c.b16 %v3830, %v3828
        %v3883 = vpack.c.b16 %v3831, %v3829
        %v3884 = vpack.c.b16 %v3834, %v3832
        %v3885 = vpack.c.b16 %v3835, %v3833
        %v3886 = vpack.c.b16 %v3838, %v3836
        %v3887 = vpack.c.b16 %v3839, %v3837
        %v3888 = vpack.c.b16 %v3842, %v3840
        %v3889 = vpack.c.b16 %v3843, %v3841
        %v3890 = vpack.c.b16 %v3846, %v3844
        %v3891 = vpack.c.b16 %v3847, %v3845
        %v3892 = vpack.c.b16 %v3850, %v3848
        %v3893 = vpack.c.b16 %v3851, %v3849
        %v3894 = vpack.c.b16 %v3854, %v3852
        %v3895 = vpack.c.b16 %v3855, %v3853
        %v3896 = vpack.c.b16 %v3858, %v3856
        %v3897 = vpack.c.b16 %v3859, %v3857
        %v3898 = vpack.c.b16 %v3862, %v3860
        %v3899 = vpack.c.b16 %v3863, %v3861
        %v3900 = vpack.c.b16 %v3866, %v3864
        %v3901 = vpack.c.b16 %v3867, %v3865
        %v3902 = vpack.c.b16 %v3870, %v3868
        %v3903 = vpack.c.b16 %v3871, %v3869
        %3936 = vmatprep.subr.bf16.mxu0 %v3873
        %3937 = vmatpush1.bf16.msra.mxu0 %v3872
        %3938 = vmatprep.subr.bf16.mxu0 %v3875
        %3939 = vmatpush1.bf16.msra.mxu0 %v3874
        %3940 = vmatprep.subr.bf16.mxu0 %v3877
        %3941 = vmatpush1.bf16.msra.mxu0 %v3876
        %3942 = vmatprep.subr.bf16.mxu0 %v3879
        %3943 = vmatpush1.bf16.msra.mxu0 %v3878
        %3944 = vmatprep.subr.bf16.mxu0 %v3881
        %3945 = vmatpush1.bf16.msra.mxu0 %v3880
        %3946 = vmatprep.subr.bf16.mxu0 %v3883
        %3947 = vmatpush1.bf16.msra.mxu0 %v3882
        %3948 = vmatprep.subr.bf16.mxu0 %v3885
        %3949 = vmatpush1.bf16.msra.mxu0 %v3884
        %3950 = vmatprep.subr.bf16.mxu0 %v3887
        %3951 = vmatpush1.bf16.msra.mxu0 %v3886
        %3952 = vmatprep.subr.bf16.mxu0 %v3889
        %3953 = vmatpush1.bf16.msra.mxu0 %v3888
        %3954 = vmatprep.subr.bf16.mxu0 %v3891
        %3955 = vmatpush1.bf16.msra.mxu0 %v3890
        %3956 = vmatprep.subr.bf16.mxu0 %v3893
        %3957 = vmatpush1.bf16.msra.mxu0 %v3892
        %3958 = vmatprep.subr.bf16.mxu0 %v3895
        %3959 = vmatpush1.bf16.msra.mxu0 %v3894
        %3960 = vmatprep.subr.bf16.mxu0 %v3897
        %3961 = vmatpush1.bf16.msra.mxu0 %v3896
        %3962 = vmatprep.subr.bf16.mxu0 %v3899
        %3963 = vmatpush1.bf16.msra.mxu0 %v3898
        %3964 = vmatprep.subr.bf16.mxu0 %v3901
        %3965 = vmatpush1.bf16.msra.mxu0 %v3900
        %3966 = vmatprep.subr.bf16.mxu0 %v3903
        %3967 = vmatpush1.bf16.msra.mxu0 %v3902
        %3968 = vmatprep.mubr.bf16.mxu0 %v3717
        %3969 = vmatmul.mubr.bf16.gmra.mrb[0].mxu0 %v3716
        %v3970 = vpop.f32.mrb[0].mxu0
        %v3971 = vadd.f32 %v3769, %v3970
        %v3972 = vpop.f32.mrb[0].mxu0
        %v3973 = vadd.f32 %v3773, %v3972
        %v3974 = vpop.f32.mrb[0].mxu0
        %v3975 = vadd.f32 %v3769, %v3974
        %v3976 = vpop.f32.mrb[0].mxu0
        %v3977 = vadd.f32 %v3773, %v3976
        %3978 = vmatprep.mubr.bf16.mxu0 %v3719
        %3979 = vmatmul.mubr.bf16.gmra.mrb[0].mxu0 %v3718
        %v3980 = vpop.f32.mrb[0].mxu0
        %v3981 = vadd.f32 %v3769, %v3980
        %v3982 = vpop.f32.mrb[0].mxu0
        %v3983 = vadd.f32 %v3773, %v3982
        %v3984 = vpop.f32.mrb[0].mxu0
        %v3985 = vadd.f32 %v3769, %v3984
        %v3986 = vpop.f32.mrb[0].mxu0
        %v3987 = vadd.f32 %v3773, %v3986
        %3988 = vmatprep.mubr.bf16.mxu0 %v3721
        %3989 = vmatmul.mubr.bf16.gmra.mrb[0].mxu0 %v3720
        %v3990 = vpop.f32.mrb[0].mxu0
        %v3991 = vadd.f32 %v3769, %v3990
        %v3992 = vpop.f32.mrb[0].mxu0
        %v3993 = vadd.f32 %v3773, %v3992
        %v3994 = vpop.f32.mrb[0].mxu0
        %v3995 = vadd.f32 %v3769, %v3994
        %v3996 = vpop.f32.mrb[0].mxu0
        %v3997 = vadd.f32 %v3773, %v3996
        %3998 = vmatprep.mubr.bf16.mxu0 %v3723
        %3999 = vmatmul.mubr.bf16.gmra.mrb[0].mxu0 %v3722
        %v4000 = vpop.f32.mrb[0].mxu0
        %v4001 = vadd.f32 %v3769, %v4000
        %v4002 = vpop.f32.mrb[0].mxu0
        %v4003 = vadd.f32 %v3773, %v4002
        %v4004 = vpop.f32.mrb[0].mxu0
        %v4005 = vadd.f32 %v3769, %v4004
        %v4006 = vpop.f32.mrb[0].mxu0
        %v4007 = vadd.f32 %v3773, %v4006
        %4008 = vmatprep.mubr.bf16.mxu0 %v3725
        %4009 = vmatmul.mubr.bf16.gmra.mrb[0].mxu0 %v3724
        %v4010 = vpop.f32.mrb[0].mxu0
        %v4011 = vadd.f32 %v3769, %v4010
        %v4012 = vpop.f32.mrb[0].mxu0
        %v4013 = vadd.f32 %v3773, %v4012
        %v4014 = vpop.f32.mrb[0].mxu0
        %v4015 = vadd.f32 %v3769, %v4014
        %v4016 = vpop.f32.mrb[0].mxu0
        %v4017 = vadd.f32 %v3773, %v4016
        %4018 = vmatprep.mubr.bf16.mxu0 %v3727
        %4019 = vmatmul.mubr.bf16.gmra.mrb[0].mxu0 %v3726
        %v4020 = vpop.f32.mrb[0].mxu0
        %v4021 = vadd.f32 %v3769, %v4020
        %v4022 = vpop.f32.mrb[0].mxu0
        %v4023 = vadd.f32 %v3773, %v4022
        %v4024 = vpop.f32.mrb[0].mxu0
        %v4025 = vadd.f32 %v3769, %v4024
        %v4026 = vpop.f32.mrb[0].mxu0
        %v4027 = vadd.f32 %v3773, %v4026
        %4028 = vmatprep.mubr.bf16.mxu0 %v3729
        %4029 = vmatmul.mubr.bf16.gmra.mrb[0].mxu0 %v3728
        %v4030 = vpop.f32.mrb[0].mxu0
        %v4031 = vadd.f32 %v3769, %v4030
        %v4032 = vpop.f32.mrb[0].mxu0
        %v4033 = vadd.f32 %v3773, %v4032
        %v4034 = vpop.f32.mrb[0].mxu0
        %v4035 = vadd.f32 %v3769, %v4034
        %v4036 = vpop.f32.mrb[0].mxu0
        %v4037 = vadd.f32 %v3773, %v4036
        %4038 = vmatprep.mubr.bf16.mxu0 %v3731
        %4039 = vmatmul.mubr.bf16.gmra.mrb[0].mxu0 %v3730
        %v4040 = vpop.f32.mrb[0].mxu0
        %v4041 = vadd.f32 %v3769, %v4040
        %v4042 = vpop.f32.mrb[0].mxu0
        %v4043 = vadd.f32 %v3773, %v4042
        %v4044 = vpop.f32.mrb[0].mxu0
        %v4045 = vadd.f32 %v3769, %v4044
        %v4046 = vpop.f32.mrb[0].mxu0
        %v4047 = vadd.f32 %v3773, %v4046
        %4048 = vdwg.mxu0
        %vm4049 = vcmp.gt.f32.partialorder %v3971, 0.0
        %vm4050 = vcmp.gt.f32.partialorder %v3973, 0.0
        %vm4051 = vcmp.gt.f32.partialorder %v3975, 0.0
        %vm4052 = vcmp.gt.f32.partialorder %v3977, 0.0
        %vm4053 = vcmp.gt.f32.partialorder %v3981, 0.0
        %vm4054 = vcmp.gt.f32.partialorder %v3983, 0.0
        %vm4055 = vcmp.gt.f32.partialorder %v3985, 0.0
        %vm4056 = vcmp.gt.f32.partialorder %v3987, 0.0
        %vm4057 = vcmp.gt.f32.partialorder %v3991, 0.0
        %vm4058 = vcmp.gt.f32.partialorder %v3993, 0.0
        %vm4059 = vcmp.gt.f32.partialorder %v3995, 0.0
        %vm4060 = vcmp.gt.f32.partialorder %v3997, 0.0
        %vm4061 = vcmp.gt.f32.partialorder %v4001, 0.0
        %vm4062 = vcmp.gt.f32.partialorder %v4003, 0.0
        %vm4063 = vcmp.gt.f32.partialorder %v4005, 0.0
        %vm4064 = vcmp.gt.f32.partialorder %v4007, 0.0
        %vm4065 = vcmp.gt.f32.partialorder %v4011, 0.0
        %vm4066 = vcmp.gt.f32.partialorder %v4013, 0.0
        %vm4067 = vcmp.gt.f32.partialorder %v4015, 0.0
        %vm4068 = vcmp.gt.f32.partialorder %v4017, 0.0
        %vm4069 = vcmp.gt.f32.partialorder %v4021, 0.0
        %vm4070 = vcmp.gt.f32.partialorder %v4023, 0.0
        %vm4071 = vcmp.gt.f32.partialorder %v4025, 0.0
        %vm4072 = vcmp.gt.f32.partialorder %v4027, 0.0
        %vm4073 = vcmp.gt.f32.partialorder %v4031, 0.0
        %vm4074 = vcmp.gt.f32.partialorder %v4033, 0.0
        %vm4075 = vcmp.gt.f32.partialorder %v4035, 0.0
        %vm4076 = vcmp.gt.f32.partialorder %v4037, 0.0
        %vm4077 = vcmp.gt.f32.partialorder %v4041, 0.0
        %vm4078 = vcmp.gt.f32.partialorder %v4043, 0.0
        %vm4079 = vcmp.gt.f32.partialorder %v4045, 0.0
        %vm4080 = vcmp.gt.f32.partialorder %v4047, 0.0
        %v4081 = vmul.f32 %v3971, 0.01
        %v4082 = vmul.f32 %v3973, 0.01
        %v4083 = vmul.f32 %v3975, 0.01
        %v4084 = vmul.f32 %v3977, 0.01
        %v4085 = vmul.f32 %v3981, 0.01
        %v4086 = vmul.f32 %v3983, 0.01
        %v4087 = vmul.f32 %v3985, 0.01
        %v4088 = vmul.f32 %v3987, 0.01
        %v4089 = vmul.f32 %v3991, 0.01
        %v4090 = vmul.f32 %v3993, 0.01
        %v4091 = vmul.f32 %v3995, 0.01
        %v4092 = vmul.f32 %v3997, 0.01
        %v4093 = vmul.f32 %v4001, 0.01
        %v4094 = vmul.f32 %v4003, 0.01
        %v4095 = vmul.f32 %v4005, 0.01
        %v4096 = vmul.f32 %v4007, 0.01
        %v4097 = vmul.f32 %v4011, 0.01
        %v4098 = vmul.f32 %v4013, 0.01
        %v4099 = vmul.f32 %v4015, 0.01
        %v4100 = vmul.f32 %v4017, 0.01
        %v4101 = vmul.f32 %v4021, 0.01
        %v4102 = vmul.f32 %v4023, 0.01
        %v4103 = vmul.f32 %v4025, 0.01
        %v4104 = vmul.f32 %v4027, 0.01
        %v4105 = vmul.f32 %v4031, 0.01
        %v4106 = vmul.f32 %v4033, 0.01
        %v4107 = vmul.f32 %v4035, 0.01
        %v4108 = vmul.f32 %v4037, 0.01
        %v4109 = vmul.f32 %v4041, 0.01
        %v4110 = vmul.f32 %v4043, 0.01
        %v4111 = vmul.f32 %v4045, 0.01
        %v4112 = vmul.f32 %v4047, 0.01
        %v4113 = vsel %vm4049, %v3971, %v4081
        %v4114 = vsel %vm4050, %v3973, %v4082
        %v4115 = vsel %vm4051, %v3975, %v4083
        %v4116 = vsel %vm4052, %v3977, %v4084
        %v4117 = vsel %vm4053, %v3981, %v4085
        %v4118 = vsel %vm4054, %v3983, %v4086
        %v4119 = vsel %vm4055, %v3985, %v4087
        %v4120 = vsel %vm4056, %v3987, %v4088
        %v4121 = vsel %vm4057, %v3991, %v4089
        %v4122 = vsel %vm4058, %v3993, %v4090
        %v4123 = vsel %vm4059, %v3995, %v4091
        %v4124 = vsel %vm4060, %v3997, %v4092
        %v4125 = vsel %vm4061, %v4001, %v4093
        %v4126 = vsel %vm4062, %v4003, %v4094
        %v4127 = vsel %vm4063, %v4005, %v4095
        %v4128 = vsel %vm4064, %v4007, %v4096
        %v4129 = vsel %vm4065, %v4011, %v4097
        %v4130 = vsel %vm4066, %v4013, %v4098
        %v4131 = vsel %vm4067, %v4015, %v4099
        %v4132 = vsel %vm4068, %v4017, %v4100
        %v4133 = vsel %vm4069, %v4021, %v4101
        %v4134 = vsel %vm4070, %v4023, %v4102
        %v4135 = vsel %vm4071, %v4025, %v4103
        %v4136 = vsel %vm4072, %v4027, %v4104
        %v4137 = vsel %vm4073, %v4031, %v4105
        %v4138 = vsel %vm4074, %v4033, %v4106
        %v4139 = vsel %vm4075, %v4035, %v4107
        %v4140 = vsel %vm4076, %v4037, %v4108
        %v4141 = vsel %vm4077, %v4041, %v4109
        %v4142 = vsel %vm4078, %v4043, %v4110
        %v4143 = vsel %vm4079, %v4045, %v4111
        %v4144 = vsel %vm4080, %v4047, %v4112
        %v4145 = vpack.c.bf16 %v4115, %v4113
        %v4146 = vpack.c.bf16 %v4116, %v4114
        %v4147 = vpack.c.bf16 %v4119, %v4117
        %v4148 = vpack.c.bf16 %v4120, %v4118
        %v4149 = vpack.c.bf16 %v4123, %v4121
        %v4150 = vpack.c.bf16 %v4124, %v4122
        %v4151 = vpack.c.bf16 %v4127, %v4125
        %v4152 = vpack.c.bf16 %v4128, %v4126
        %v4153 = vpack.c.bf16 %v4131, %v4129
        %v4154 = vpack.c.bf16 %v4132, %v4130
        %v4155 = vpack.c.bf16 %v4135, %v4133
        %v4156 = vpack.c.bf16 %v4136, %v4134
        %v4157 = vpack.c.bf16 %v4139, %v4137
        %v4158 = vpack.c.bf16 %v4140, %v4138
        %v4159 = vpack.c.bf16 %v4143, %v4141
        %v4160 = vpack.c.bf16 %v4144, %v4142
        %v4161 = vld [vmem:[%s16] sm:$0xf]
        %v4162 = vld [vmem:[%s16 + $0x4] sm:$0xf]
        %v4163 = vld [vmem:[%s16 + $0x8] sm:$0xf]
        %v4164 = vld [vmem:[%s16 + $0xc] sm:$0xf]
        %v4165 = vld [vmem:[%s16 + $0x10] sm:$0xf]
        %v4166 = vld [vmem:[%s16 + $0x14] sm:$0xf]
        %v4167 = vld [vmem:[%s16 + $0x18] sm:$0xf]
        %v4168 = vld [vmem:[%s16 + $0x1c] sm:$0xf]
        %v4169 = vld [vmem:[%s16 + $0x20] sm:$0xf]
        %v4170 = vld [vmem:[%s16 + $0x24] sm:$0xf]
        %v4171 = vld [vmem:[%s16 + $0x28] sm:$0xf]
        %v4172 = vld [vmem:[%s16 + $0x2c] sm:$0xf]
        %v4173 = vld [vmem:[%s16 + $0x30] sm:$0xf]
        %v4174 = vld [vmem:[%s16 + $0x34] sm:$0xf]
        %v4175 = vld [vmem:[%s16 + $0x38] sm:$0xf]
        %v4176 = vld [vmem:[%s16 + $0x3c] sm:$0xf]
        %v4177 = vld [vmem:[%s16 + $0x40] sm:$0xf]
        %v4178 = vld [vmem:[%s16 + $0x44] sm:$0xf]
        %v4179 = vld [vmem:[%s16 + $0x48] sm:$0xf]
        %v4180 = vld [vmem:[%s16 + $0x4c] sm:$0xf]
        %v4181 = vld [vmem:[%s16 + $0x50] sm:$0xf]
        %v4182 = vld [vmem:[%s16 + $0x54] sm:$0xf]
        %v4183 = vld [vmem:[%s16 + $0x58] sm:$0xf]
        %v4184 = vld [vmem:[%s16 + $0x5c] sm:$0xf]
        %v4185 = vld [vmem:[%s16 + $0x60] sm:$0xf]
        %v4186 = vld [vmem:[%s16 + $0x64] sm:$0xf]
        %v4187 = vld [vmem:[%s16 + $0x68] sm:$0xf]
        %v4188 = vld [vmem:[%s16 + $0x6c] sm:$0xf]
        %v4189 = vld [vmem:[%s16 + $0x70] sm:$0xf]
        %v4190 = vld [vmem:[%s16 + $0x74] sm:$0xf]
        %v4191 = vld [vmem:[%s16 + $0x78] sm:$0xf]
        %v4192 = vld [vmem:[%s16 + $0x7c] sm:$0xf]
        %v4193 = vld [vmem:[%s17] sm:$0x1]
        %v4195 = vlaneseq
        %v4196 = vshrl.u32 %v4195, 7
        %v4197 = vsub.s32 0, %v4196
        %v4198 = vrot.slane %v4193, %v4197
        %v4232 = vunpack.c.l.b16 %v4161
        %v4233 = vunpack.c.l.b16 %v4162
        %v4234 = vunpack.c.l.b16 %v4163
        %v4235 = vunpack.c.l.b16 %v4164
        %v4236 = vunpack.c.l.b16 %v4165
        %v4237 = vunpack.c.l.b16 %v4166
        %v4238 = vunpack.c.l.b16 %v4167
        %v4239 = vunpack.c.l.b16 %v4168
        %v4240 = vunpack.c.l.b16 %v4169
        %v4241 = vunpack.c.l.b16 %v4170
        %v4242 = vunpack.c.l.b16 %v4171
        %v4243 = vunpack.c.l.b16 %v4172
        %v4244 = vunpack.c.l.b16 %v4173
        %v4245 = vunpack.c.l.b16 %v4174
        %v4246 = vunpack.c.l.b16 %v4175
        %v4247 = vunpack.c.l.b16 %v4176
        %v4248 = vunpack.c.l.b16 %v4177
        %v4249 = vunpack.c.l.b16 %v4178
        %v4250 = vunpack.c.l.b16 %v4179
        %v4251 = vunpack.c.l.b16 %v4180
        %v4252 = vunpack.c.l.b16 %v4181
        %v4253 = vunpack.c.l.b16 %v4182
        %v4254 = vunpack.c.l.b16 %v4183
        %v4255 = vunpack.c.l.b16 %v4184
        %v4256 = vunpack.c.l.b16 %v4185
        %v4257 = vunpack.c.l.b16 %v4186
        %v4258 = vunpack.c.l.b16 %v4187
        %v4259 = vunpack.c.l.b16 %v4188
        %v4260 = vunpack.c.l.b16 %v4189
        %v4261 = vunpack.c.l.b16 %v4190
        %v4262 = vunpack.c.l.b16 %v4191
        %v4263 = vunpack.c.l.b16 %v4192
        %v4264 = vpack.c.b16 %v4233, %v4232
        %v4265 = vpack.c.b16 %v4235, %v4234
        %v4266 = vpack.c.b16 %v4237, %v4236
        %v4267 = vpack.c.b16 %v4239, %v4238
        %v4268 = vpack.c.b16 %v4241, %v4240
        %v4269 = vpack.c.b16 %v4243, %v4242
        %v4270 = vpack.c.b16 %v4245, %v4244
        %v4271 = vpack.c.b16 %v4247, %v4246
        %v4272 = vpack.c.b16 %v4249, %v4248
        %v4273 = vpack.c.b16 %v4251, %v4250
        %v4274 = vpack.c.b16 %v4253, %v4252
        %v4275 = vpack.c.b16 %v4255, %v4254
        %v4276 = vpack.c.b16 %v4257, %v4256
        %v4277 = vpack.c.b16 %v4259, %v4258
        %v4278 = vpack.c.b16 %v4261, %v4260
        %v4279 = vpack.c.b16 %v4263, %v4262
        %4296 = vmatprep.subr.bf16.mxu0 0
        %4297 = vmatpush1.bf16.msra.mxu0 %v4264
        %4298 = vmatprep.subr.bf16.mxu0 0
        %4299 = vmatpush1.bf16.msra.mxu0 %v4265
        %4300 = vmatprep.subr.bf16.mxu0 0
        %4301 = vmatpush1.bf16.msra.mxu0 %v4266
        %4302 = vmatprep.subr.bf16.mxu0 0
        %4303 = vmatpush1.bf16.msra.mxu0 %v4267
        %4304 = vmatprep.subr.bf16.mxu0 0
        %4305 = vmatpush1.bf16.msra.mxu0 %v4268
        %4306 = vmatprep.subr.bf16.mxu0 0
        %4307 = vmatpush1.bf16.msra.mxu0 %v4269
        %4308 = vmatprep.subr.bf16.mxu0 0
        %4309 = vmatpush1.bf16.msra.mxu0 %v4270
        %4310 = vmatprep.subr.bf16.mxu0 0
        %4311 = vmatpush1.bf16.msra.mxu0 %v4271
        %4312 = vmatprep.subr.bf16.mxu0 0
        %4313 = vmatpush1.bf16.msra.mxu0 %v4272
        %4314 = vmatprep.subr.bf16.mxu0 0
        %4315 = vmatpush1.bf16.msra.mxu0 %v4273
        %4316 = vmatprep.subr.bf16.mxu0 0
        %4317 = vmatpush1.bf16.msra.mxu0 %v4274
        %4318 = vmatprep.subr.bf16.mxu0 0
        %4319 = vmatpush1.bf16.msra.mxu0 %v4275
        %4320 = vmatprep.subr.bf16.mxu0 0
        %4321 = vmatpush1.bf16.msra.mxu0 %v4276
        %4322 = vmatprep.subr.bf16.mxu0 0
        %4323 = vmatpush1.bf16.msra.mxu0 %v4277
        %4324 = vmatprep.subr.bf16.mxu0 0
        %4325 = vmatpush1.bf16.msra.mxu0 %v4278
        %4326 = vmatprep.subr.bf16.mxu0 0
        %4327 = vmatpush1.bf16.msra.mxu0 %v4279
        %4328 = vmatprep.mubr.bf16.mxu0 %v4146
        %4329 = vmatmul.mubr.bf16.gmra.mrb[0].mxu0 %v4145
        %v4330 = vpop.f32.mrb[0].mxu0
        %v4331 = vadd.f32 %v4198, %v4330
        %v4332 = vpop.f32.mrb[0].mxu0
        %v4333 = vpop.f32.mrb[0].mxu0
        %v4334 = vadd.f32 %v4198, %v4333
        %v4335 = vpop.f32.mrb[0].mxu0
        %4336 = vmatprep.mubr.bf16.mxu0 %v4148
        %4337 = vmatmul.mubr.bf16.gmra.mrb[0].mxu0 %v4147
        %v4338 = vpop.f32.mrb[0].mxu0
        %v4339 = vadd.f32 %v4198, %v4338
        %v4340 = vpop.f32.mrb[0].mxu0
        %v4341 = vpop.f32.mrb[0].mxu0
        %v4342 = vadd.f32 %v4198, %v4341
        %v4343 = vpop.f32.mrb[0].mxu0
        %4344 = vmatprep.mubr.bf16.mxu0 %v4150
        %4345 = vmatmul.mubr.bf16.gmra.mrb[0].mxu0 %v4149
        %v4346 = vpop.f32.mrb[0].mxu0
        %v4347 = vadd.f32 %v4198, %v4346
        %v4348 = vpop.f32.mrb[0].mxu0
        %v4349 = vpop.f32.mrb[0].mxu0
        %v4350 = vadd.f32 %v4198, %v4349
        %v4351 = vpop.f32.mrb[0].mxu0
        %4352 = vmatprep.mubr.bf16.mxu0 %v4152
        %4353 = vmatmul.mubr.bf16.gmra.mrb[0].mxu0 %v4151
        %v4354 = vpop.f32.mrb[0].mxu0
        %v4355 = vadd.f32 %v4198, %v4354
        %v4356 = vpop.f32.mrb[0].mxu0
        %v4357 = vpop.f32.mrb[0].mxu0
        %v4358 = vadd.f32 %v4198, %v4357
        %v4359 = vpop.f32.mrb[0].mxu0
        %4360 = vmatprep.mubr.bf16.mxu0 %v4154
        %4361 = vmatmul.mubr.bf16.gmra.mrb[0].mxu0 %v4153
        %v4362 = vpop.f32.mrb[0].mxu0
        %v4363 = vadd.f32 %v4198, %v4362
        %v4364 = vpop.f32.mrb[0].mxu0
        %v4365 = vpop.f32.mrb[0].mxu0
        %v4366 = vadd.f32 %v4198, %v4365
        %v4367 = vpop.f32.mrb[0].mxu0
        %4368 = vmatprep.mubr.bf16.mxu0 %v4156
        %4369 = vmatmul.mubr.bf16.gmra.mrb[0].mxu0 %v4155
        %v4370 = vpop.f32.mrb[0].mxu0
        %v4371 = vadd.f32 %v4198, %v4370
        %v4372 = vpop.f32.mrb[0].mxu0
        %v4373 = vpop.f32.mrb[0].mxu0
        %v4374 = vadd.f32 %v4198, %v4373
        %v4375 = vpop.f32.mrb[0].mxu0
        %4376 = vmatprep.mubr.bf16.mxu0 %v4158
        %4377 = vmatmul.mubr.bf16.gmra.mrb[0].mxu0 %v4157
        %v4378 = vpop.f32.mrb[0].mxu0
        %v4379 = vadd.f32 %v4198, %v4378
        %v4380 = vpop.f32.mrb[0].mxu0
        %v4381 = vpop.f32.mrb[0].mxu0
        %v4382 = vadd.f32 %v4198, %v4381
        %v4383 = vpop.f32.mrb[0].mxu0
        %4384 = vmatprep.mubr.bf16.mxu0 %v4160
        %4385 = vmatmul.mubr.bf16.gmra.mrb[0].mxu0 %v4159
        %v4386 = vpop.f32.mrb[0].mxu0
        %v4387 = vadd.f32 %v4198, %v4386
        %v4388 = vpop.f32.mrb[0].mxu0
        %v4389 = vpop.f32.mrb[0].mxu0
        %v4390 = vadd.f32 %v4198, %v4389
        %v4391 = vpop.f32.mrb[0].mxu0
        %4392 = vdwg.mxu0
        %vm4393 = vcmp.gt.f32.partialorder %v4331, 0.0
        %vm4394 = vcmp.gt.f32.partialorder %v4334, 0.0
        %vm4395 = vcmp.gt.f32.partialorder %v4339, 0.0
        %vm4396 = vcmp.gt.f32.partialorder %v4342, 0.0
        %vm4397 = vcmp.gt.f32.partialorder %v4347, 0.0
        %vm4398 = vcmp.gt.f32.partialorder %v4350, 0.0
        %vm4399 = vcmp.gt.f32.partialorder %v4355, 0.0
        %vm4400 = vcmp.gt.f32.partialorder %v4358, 0.0
        %vm4401 = vcmp.gt.f32.partialorder %v4363, 0.0
        %vm4402 = vcmp.gt.f32.partialorder %v4366, 0.0
        %vm4403 = vcmp.gt.f32.partialorder %v4371, 0.0
        %vm4404 = vcmp.gt.f32.partialorder %v4374, 0.0
        %vm4405 = vcmp.gt.f32.partialorder %v4379, 0.0
        %vm4406 = vcmp.gt.f32.partialorder %v4382, 0.0
        %vm4407 = vcmp.gt.f32.partialorder %v4387, 0.0
        %vm4408 = vcmp.gt.f32.partialorder %v4390, 0.0
        %v4409 = vmul.f32 %v4331, 0.01
        %v4410 = vmul.f32 %v4334, 0.01
        %v4411 = vmul.f32 %v4339, 0.01
        %v4412 = vmul.f32 %v4342, 0.01
        %v4413 = vmul.f32 %v4347, 0.01
        %v4414 = vmul.f32 %v4350, 0.01
        %v4415 = vmul.f32 %v4355, 0.01
        %v4416 = vmul.f32 %v4358, 0.01
        %v4417 = vmul.f32 %v4363, 0.01
        %v4418 = vmul.f32 %v4366, 0.01
        %v4419 = vmul.f32 %v4371, 0.01
        %v4420 = vmul.f32 %v4374, 0.01
        %v4421 = vmul.f32 %v4379, 0.01
        %v4422 = vmul.f32 %v4382, 0.01
        %v4423 = vmul.f32 %v4387, 0.01
        %v4424 = vmul.f32 %v4390, 0.01
        %v4425 = vsel %vm4393, %v4331, %v4409
        %v4426 = vsel %vm4394, %v4334, %v4410
        %v4427 = vsel %vm4395, %v4339, %v4411
        %v4428 = vsel %vm4396, %v4342, %v4412
        %v4429 = vsel %vm4397, %v4347, %v4413
        %v4430 = vsel %vm4398, %v4350, %v4414
        %v4431 = vsel %vm4399, %v4355, %v4415
        %v4432 = vsel %vm4400, %v4358, %v4416
        %v4433 = vsel %vm4401, %v4363, %v4417
        %v4434 = vsel %vm4402, %v4366, %v4418
        %v4435 = vsel %vm4403, %v4371, %v4419
        %v4436 = vsel %vm4404, %v4374, %v4420
        %v4437 = vsel %vm4405, %v4379, %v4421
        %v4438 = vsel %vm4406, %v4382, %v4422
        %v4439 = vsel %vm4407, %v4387, %v4423
        %v4440 = vsel %vm4408, %v4390, %v4424
        %vm4441 = vcmask 130048
        %v4442 = vsel %vm4441, %v4425, -inf
        %4443 = vmax.xlane.f32.xlu0 %v4442
        %v4444 = vpop.xlane.xlu0 %4443
        %v4445 = vsel %vm4441, %v4426, -inf
        %4446 = vmax.xlane.f32.xlu0 %v4445
        %v4447 = vpop.xlane.xlu0 %4446
        %v4448 = vsel %vm4441, %v4427, -inf
        %4449 = vmax.xlane.f32.xlu0 %v4448
        %v4450 = vpop.xlane.xlu0 %4449
        %v4451 = vsel %vm4441, %v4428, -inf
        %4452 = vmax.xlane.f32.xlu0 %v4451
        %v4453 = vpop.xlane.xlu0 %4452
        %v4454 = vsel %vm4441, %v4429, -inf
        %4455 = vmax.xlane.f32.xlu0 %v4454
        %v4456 = vpop.xlane.xlu0 %4455
        %v4457 = vsel %vm4441, %v4430, -inf
        %4458 = vmax.xlane.f32.xlu0 %v4457
        %v4459 = vpop.xlane.xlu0 %4458
        %v4460 = vsel %vm4441, %v4431, -inf
        %4461 = vmax.xlane.f32.xlu0 %v4460
        %v4462 = vpop.xlane.xlu0 %4461
        %v4463 = vsel %vm4441, %v4432, -inf
        %4464 = vmax.xlane.f32.xlu0 %v4463
        %v4465 = vpop.xlane.xlu0 %4464
        %v4466 = vsel %vm4441, %v4433, -inf
        %4467 = vmax.xlane.f32.xlu0 %v4466
        %v4468 = vpop.xlane.xlu0 %4467
        %v4469 = vsel %vm4441, %v4434, -inf
        %4470 = vmax.xlane.f32.xlu0 %v4469
        %v4471 = vpop.xlane.xlu0 %4470
        %v4472 = vsel %vm4441, %v4435, -inf
        %4473 = vmax.xlane.f32.xlu0 %v4472
        %v4474 = vpop.xlane.xlu0 %4473
        %v4475 = vsel %vm4441, %v4436, -inf
        %4476 = vmax.xlane.f32.xlu0 %v4475
        %v4477 = vpop.xlane.xlu0 %4476
        %v4478 = vsel %vm4441, %v4437, -inf
        %4479 = vmax.xlane.f32.xlu0 %v4478
        %v4480 = vpop.xlane.xlu0 %4479
        %v4481 = vsel %vm4441, %v4438, -inf
        %4482 = vmax.xlane.f32.xlu0 %v4481
        %v4483 = vpop.xlane.xlu0 %4482
        %v4484 = vsel %vm4441, %v4439, -inf
        %4485 = vmax.xlane.f32.xlu0 %v4484
        %v4486 = vpop.xlane.xlu0 %4485
        %v4487 = vsel %vm4441, %v4440, -inf
        %4488 = vmax.xlane.f32.xlu0 %v4487
        %v4489 = vpop.xlane.xlu0 %4488
        %v4490 = vsub.f32 %v4425, %v4444
        %v4491 = vsub.f32 %v4426, %v4447
        %v4492 = vsub.f32 %v4427, %v4450
        %v4493 = vsub.f32 %v4428, %v4453
        %v4494 = vsub.f32 %v4429, %v4456
        %v4495 = vsub.f32 %v4430, %v4459
        %v4496 = vsub.f32 %v4431, %v4462
        %v4497 = vsub.f32 %v4432, %v4465
        %v4498 = vsub.f32 %v4433, %v4468
        %v4499 = vsub.f32 %v4434, %v4471
        %v4500 = vsub.f32 %v4435, %v4474
        %v4501 = vsub.f32 %v4436, %v4477
        %v4502 = vsub.f32 %v4437, %v4480
        %v4503 = vsub.f32 %v4438, %v4483
        %v4504 = vsub.f32 %v4439, %v4486
        %v4505 = vsub.f32 %v4440, %v4489
        %v4506 = vmul.f32 %v4490, 1.442695
        %v4507 = vpow.pop %v4506
        %v4508 = vmul.f32 %v4491, 1.442695
        %v4509 = vpow.pop %v4508
        %v4510 = vmul.f32 %v4492, 1.442695
        %v4511 = vpow.pop %v4510
        %v4512 = vmul.f32 %v4493, 1.442695
        %v4513 = vpow.pop %v4512
        %v4514 = vmul.f32 %v4494, 1.442695
        %v4515 = vpow.pop %v4514
        %v4516 = vmul.f32 %v4495, 1.442695
        %v4517 = vpow.pop %v4516
        %v4518 = vmul.f32 %v4496, 1.442695
        %v4519 = vpow.pop %v4518
        %v4520 = vmul.f32 %v4497, 1.442695
        %v4521 = vpow.pop %v4520
        %v4522 = vmul.f32 %v4498, 1.442695
        %v4523 = vpow.pop %v4522
        %v4524 = vmul.f32 %v4499, 1.442695
        %v4525 = vpow.pop %v4524
        %v4526 = vmul.f32 %v4500, 1.442695
        %v4527 = vpow.pop %v4526
        %v4528 = vmul.f32 %v4501, 1.442695
        %v4529 = vpow.pop %v4528
        %v4530 = vmul.f32 %v4502, 1.442695
        %v4531 = vpow.pop %v4530
        %v4532 = vmul.f32 %v4503, 1.442695
        %v4533 = vpow.pop %v4532
        %v4534 = vmul.f32 %v4504, 1.442695
        %v4535 = vpow.pop %v4534
        %v4536 = vmul.f32 %v4505, 1.442695
        %v4537 = vpow.pop %v4536
        %v4538 = vsel %vm4441, %v4507, 0.0
        %4539 = vadd.xlane.f32.xlu0 %v4538
        %v4540 = vpop.xlane.xlu0 %4539
        %v4541 = vsel %vm4441, %v4509, 0.0
        %4542 = vadd.xlane.f32.xlu0 %v4541
        %v4543 = vpop.xlane.xlu0 %4542
        %v4544 = vsel %vm4441, %v4511, 0.0
        %4545 = vadd.xlane.f32.xlu0 %v4544
        %v4546 = vpop.xlane.xlu0 %4545
        %v4547 = vsel %vm4441, %v4513, 0.0
        %4548 = vadd.xlane.f32.xlu0 %v4547
        %v4549 = vpop.xlane.xlu0 %4548
        %v4550 = vsel %vm4441, %v4515, 0.0
        %4551 = vadd.xlane.f32.xlu0 %v4550
        %v4552 = vpop.xlane.xlu0 %4551
        %v4553 = vsel %vm4441, %v4517, 0.0
        %4554 = vadd.xlane.f32.xlu0 %v4553
        %v4555 = vpop.xlane.xlu0 %4554
        %v4556 = vsel %vm4441, %v4519, 0.0
        %4557 = vadd.xlane.f32.xlu0 %v4556
        %v4558 = vpop.xlane.xlu0 %4557
        %v4559 = vsel %vm4441, %v4521, 0.0
        %4560 = vadd.xlane.f32.xlu0 %v4559
        %v4561 = vpop.xlane.xlu0 %4560
        %v4562 = vsel %vm4441, %v4523, 0.0
        %4563 = vadd.xlane.f32.xlu0 %v4562
        %v4564 = vpop.xlane.xlu0 %4563
        %v4565 = vsel %vm4441, %v4525, 0.0
        %4566 = vadd.xlane.f32.xlu0 %v4565
        %v4567 = vpop.xlane.xlu0 %4566
        %v4568 = vsel %vm4441, %v4527, 0.0
        %4569 = vadd.xlane.f32.xlu0 %v4568
        %v4570 = vpop.xlane.xlu0 %4569
        %v4571 = vsel %vm4441, %v4529, 0.0
        %4572 = vadd.xlane.f32.xlu0 %v4571
        %v4573 = vpop.xlane.xlu0 %4572
        %v4574 = vsel %vm4441, %v4531, 0.0
        %4575 = vadd.xlane.f32.xlu0 %v4574
        %v4576 = vpop.xlane.xlu0 %4575
        %v4577 = vsel %vm4441, %v4533, 0.0
        %4578 = vadd.xlane.f32.xlu0 %v4577
        %v4579 = vpop.xlane.xlu0 %4578
        %v4580 = vsel %vm4441, %v4535, 0.0
        %4581 = vadd.xlane.f32.xlu0 %v4580
        %v4582 = vpop.xlane.xlu0 %4581
        %v4583 = vsel %vm4441, %v4537, 0.0
        %4584 = vadd.xlane.f32.xlu0 %v4583
        %v4585 = vpop.xlane.xlu0 %4584
        %v4586 = vrcp.pop %v4540
        %v4587 = vmul.f32 %v4507, %v4586
        %v4588 = vrcp.pop %v4543
        %v4589 = vmul.f32 %v4509, %v4588
        %v4590 = vrcp.pop %v4546
        %v4591 = vmul.f32 %v4511, %v4590
        %v4592 = vrcp.pop %v4549
        %v4593 = vmul.f32 %v4513, %v4592
        %v4594 = vrcp.pop %v4552
        %v4595 = vmul.f32 %v4515, %v4594
        %v4596 = vrcp.pop %v4555
        %v4597 = vmul.f32 %v4517, %v4596
        %v4598 = vrcp.pop %v4558
        %v4599 = vmul.f32 %v4519, %v4598
        %v4600 = vrcp.pop %v4561
        %v4601 = vmul.f32 %v4521, %v4600
        %v4602 = vrcp.pop %v4564
        %v4603 = vmul.f32 %v4523, %v4602
        %v4604 = vrcp.pop %v4567
        %v4605 = vmul.f32 %v4525, %v4604
        %v4606 = vrcp.pop %v4570
        %v4607 = vmul.f32 %v4527, %v4606
        %v4608 = vrcp.pop %v4573
        %v4609 = vmul.f32 %v4529, %v4608
        %v4610 = vrcp.pop %v4576
        %v4611 = vmul.f32 %v4531, %v4610
        %v4612 = vrcp.pop %v4579
        %v4613 = vmul.f32 %v4533, %v4612
        %v4614 = vrcp.pop %v4582
        %v4615 = vmul.f32 %v4535, %v4614
        %v4616 = vrcp.pop %v4585
        %v4617 = vmul.f32 %v4537, %v4616
        %v4618 = vmul.f32 %v4587, 0.999999
        %v4619 = vmul.f32 %v4589, 0.999999
        %v4620 = vmul.f32 %v4591, 0.999999
        %v4621 = vmul.f32 %v4593, 0.999999
        %v4622 = vmul.f32 %v4595, 0.999999
        %v4623 = vmul.f32 %v4597, 0.999999
        %v4624 = vmul.f32 %v4599, 0.999999
        %v4625 = vmul.f32 %v4601, 0.999999
        %v4626 = vmul.f32 %v4603, 0.999999
        %v4627 = vmul.f32 %v4605, 0.999999
        %v4628 = vmul.f32 %v4607, 0.999999
        %v4629 = vmul.f32 %v4609, 0.999999
        %v4630 = vmul.f32 %v4611, 0.999999
        %v4631 = vmul.f32 %v4613, 0.999999
        %v4632 = vmul.f32 %v4615, 0.999999
        %v4633 = vmul.f32 %v4617, 0.999999
        %v4634 = vadd.f32 %v4618, 6.25e-08
        %v4635 = vadd.f32 %v4619, 6.25e-08
        %v4636 = vadd.f32 %v4620, 6.25e-08
        %v4637 = vadd.f32 %v4621, 6.25e-08
        %v4638 = vadd.f32 %v4622, 6.25e-08
        %v4639 = vadd.f32 %v4623, 6.25e-08
        %v4640 = vadd.f32 %v4624, 6.25e-08
        %v4641 = vadd.f32 %v4625, 6.25e-08
        %v4642 = vadd.f32 %v4626, 6.25e-08
        %v4643 = vadd.f32 %v4627, 6.25e-08
        %v4644 = vadd.f32 %v4628, 6.25e-08
        %v4645 = vadd.f32 %v4629, 6.25e-08
        %v4646 = vadd.f32 %v4630, 6.25e-08
        %v4647 = vadd.f32 %v4631, 6.25e-08
        %v4648 = vadd.f32 %v4632, 6.25e-08
        %v4649 = vadd.f32 %v4633, 6.25e-08
        %v4650 = vpack.c.bf16 %v4635, %v4634
        %v4651 = vpack.c.bf16 %v4637, %v4636
        %v4652 = vpack.c.bf16 %v4639, %v4638
        %v4653 = vpack.c.bf16 %v4641, %v4640
        %v4654 = vpack.c.bf16 %v4643, %v4642
        %v4655 = vpack.c.bf16 %v4645, %v4644
        %v4656 = vpack.c.bf16 %v4647, %v4646
        %v4657 = vpack.c.bf16 %v4649, %v4648
        %v4658 = vld [vmem:[%s18] sm:$0xff]
        %v4659 = vld [vmem:[%s18 + $0x8] sm:$0xff]
        %v4660 = vld [vmem:[%s19] sm:$0x3]
        %v4662 = vlaneseq
        %v4663 = vshrl.u32 %v4662, 7
        %v4664 = vsub.s32 0, %v4663
        %v4665 = vrot.slane %v4660, %v4664
        %v4666 = vlaneseq
        %v4667 = vshrl.u32 %v4666, 7
        %v4668 = vsub.s32 1, %v4667
        %v4669 = vrot.slane %v4660, %v4668
        %v4674 = vunpack.c.l.b16 %v4658
        %v4675 = vunpack.c.h.b16 %v4658
        %v4676 = vunpack.c.l.b16 %v4659
        %v4677 = vunpack.c.h.b16 %v4659
        %v4678 = vpack.c.b16 %v4676, %v4674
        %v4679 = vpack.c.b16 %v4677, %v4675
        %v4683 = vsel %vm4441, %v4650, 0
        %v4686 = vsel %vm4441, %v4651, 0
        %v4689 = vsel %vm4441, %v4652, 0
        %v4692 = vsel %vm4441, %v4653, 0
        %v4695 = vsel %vm4441, %v4654, 0
        %v4698 = vsel %vm4441, %v4655, 0
        %v4701 = vsel %vm4441, %v4656, 0
        %v4704 = vsel %vm4441, %v4657, 0
        %4706 = vmatprep.subr.bf16.mxu0 %v4679
        %4707 = vmatpush1.bf16.msra.mxu0 %v4678
        %4708 = vmatprep.subr.bf16.mxu0 0
        %4709 = vmatpush1.bf16.msra.mxu0 0
        %4710 = vmatprep.subr.bf16.mxu0 0
        %4711 = vmatpush1.bf16.msra.mxu0 0
        %4712 = vmatprep.subr.bf16.mxu0 0
        %4713 = vmatpush1.bf16.msra.mxu0 0
        %4714 = vmatprep.subr.bf16.mxu0 0
        %4715 = vmatpush1.bf16.msra.mxu0 0
        %4716 = vmatprep.subr.bf16.mxu0 0
        %4717 = vmatpush1.bf16.msra.mxu0 0
        %4718 = vmatprep.subr.bf16.mxu0 0
        %4719 = vmatpush1.bf16.msra.mxu0 0
        %4720 = vmatprep.subr.bf16.mxu0 0
        %4721 = vmatpush1.bf16.msra.mxu0 0
        %4722 = vmatprep.subr.bf16.mxu0 0
        %4723 = vmatpush1.bf16.msra.mxu0 0
        %4724 = vmatprep.subr.bf16.mxu0 0
        %4725 = vmatpush1.bf16.msra.mxu0 0
        %4726 = vmatprep.subr.bf16.mxu0 0
        %4727 = vmatpush1.bf16.msra.mxu0 0
        %4728 = vmatprep.subr.bf16.mxu0 0
        %4729 = vmatpush1.bf16.msra.mxu0 0
        %4730 = vmatprep.subr.bf16.mxu0 0
        %4731 = vmatpush1.bf16.msra.mxu0 0
        %4732 = vmatprep.subr.bf16.mxu0 0
        %4733 = vmatpush1.bf16.msra.mxu0 0
        %4734 = vmatprep.subr.bf16.mxu0 0
        %4735 = vmatpush1.bf16.msra.mxu0 0
        %4736 = vmatprep.subr.bf16.mxu0 0
        %4737 = vmatpush1.bf16.msra.mxu0 0
        %4738 = vmatprep.mubr.bf16.mxu0 0
        %4739 = vmatmul.mubr.bf16.gmra.mrb[0].mxu0 %v4683
        %v4740 = vpop.f32.mrb[0].mxu0
        %v4741 = vadd.f32 %v4665, %v4740
        %v4742 = vpop.f32.mrb[0].mxu0
        %v4743 = vadd.f32 %v4669, %v4742
        %v4744 = vpop.f32.mrb[0].mxu0
        %v4745 = vadd.f32 %v4665, %v4744
        %v4746 = vpop.f32.mrb[0].mxu0
        %v4747 = vadd.f32 %v4669, %v4746
        %4748 = vmatprep.mubr.bf16.mxu0 0
        %4749 = vmatmul.mubr.bf16.gmra.mrb[0].mxu0 %v4686
        %v4750 = vpop.f32.mrb[0].mxu0
        %v4751 = vadd.f32 %v4665, %v4750
        %v4752 = vpop.f32.mrb[0].mxu0
        %v4753 = vadd.f32 %v4669, %v4752
        %v4754 = vpop.f32.mrb[0].mxu0
        %v4755 = vadd.f32 %v4665, %v4754
        %v4756 = vpop.f32.mrb[0].mxu0
        %v4757 = vadd.f32 %v4669, %v4756
        %4758 = vmatprep.mubr.bf16.mxu0 0
        %4759 = vmatmul.mubr.bf16.gmra.mrb[0].mxu0 %v4689
        %v4760 = vpop.f32.mrb[0].mxu0
        %v4761 = vadd.f32 %v4665, %v4760
        %v4762 = vpop.f32.mrb[0].mxu0
        %v4763 = vadd.f32 %v4669, %v4762
        %v4764 = vpop.f32.mrb[0].mxu0
        %v4765 = vadd.f32 %v4665, %v4764
        %v4766 = vpop.f32.mrb[0].mxu0
        %v4767 = vadd.f32 %v4669, %v4766
        %4768 = vmatprep.mubr.bf16.mxu0 0
        %4769 = vmatmul.mubr.bf16.gmra.mrb[0].mxu0 %v4692
        %v4770 = vpop.f32.mrb[0].mxu0
        %v4771 = vadd.f32 %v4665, %v4770
        %v4772 = vpop.f32.mrb[0].mxu0
        %v4773 = vadd.f32 %v4669, %v4772
        %v4774 = vpop.f32.mrb[0].mxu0
        %v4775 = vadd.f32 %v4665, %v4774
        %v4776 = vpop.f32.mrb[0].mxu0
        %v4777 = vadd.f32 %v4669, %v4776
        %4778 = vmatprep.mubr.bf16.mxu0 0
        %4779 = vmatmul.mubr.bf16.gmra.mrb[0].mxu0 %v4695
        %v4780 = vpop.f32.mrb[0].mxu0
        %v4781 = vadd.f32 %v4665, %v4780
        %v4782 = vpop.f32.mrb[0].mxu0
        %v4783 = vadd.f32 %v4669, %v4782
        %v4784 = vpop.f32.mrb[0].mxu0
        %v4785 = vadd.f32 %v4665, %v4784
        %v4786 = vpop.f32.mrb[0].mxu0
        %v4787 = vadd.f32 %v4669, %v4786
        %4788 = vmatprep.mubr.bf16.mxu0 0
        %4789 = vmatmul.mubr.bf16.gmra.mrb[0].mxu0 %v4698
        %v4790 = vpop.f32.mrb[0].mxu0
        %v4791 = vadd.f32 %v4665, %v4790
        %v4792 = vpop.f32.mrb[0].mxu0
        %v4793 = vadd.f32 %v4669, %v4792
        %v4794 = vpop.f32.mrb[0].mxu0
        %v4795 = vadd.f32 %v4665, %v4794
        %v4796 = vpop.f32.mrb[0].mxu0
        %v4797 = vadd.f32 %v4669, %v4796
        %4798 = vmatprep.mubr.bf16.mxu0 0
        %4799 = vmatmul.mubr.bf16.gmra.mrb[0].mxu0 %v4701
        %v4800 = vpop.f32.mrb[0].mxu0
        %v4801 = vadd.f32 %v4665, %v4800
        %v4802 = vpop.f32.mrb[0].mxu0
        %v4803 = vadd.f32 %v4669, %v4802
        %v4804 = vpop.f32.mrb[0].mxu0
        %v4805 = vadd.f32 %v4665, %v4804
        %v4806 = vpop.f32.mrb[0].mxu0
        %v4807 = vadd.f32 %v4669, %v4806
        %4808 = vmatprep.mubr.bf16.mxu0 0
        %4809 = vmatmul.mubr.bf16.gmra.mrb[0].mxu0 %v4704
        %v4810 = vpop.f32.mrb[0].mxu0
        %v4811 = vadd.f32 %v4665, %v4810
        %v4812 = vpop.f32.mrb[0].mxu0
        %v4813 = vadd.f32 %v4669, %v4812
        %v4814 = vpop.f32.mrb[0].mxu0
        %v4815 = vadd.f32 %v4665, %v4814
        %v4816 = vpop.f32.mrb[0].mxu0
        %v4817 = vadd.f32 %v4669, %v4816
        %4818 = vdwg.mxu0
        %vm4819 = vcmp.gt.f32.partialorder %v4741, 0.0
        %vm4820 = vcmp.gt.f32.partialorder %v4743, 0.0
        %vm4821 = vcmp.gt.f32.partialorder %v4745, 0.0
        %vm4822 = vcmp.gt.f32.partialorder %v4747, 0.0
        %vm4823 = vcmp.gt.f32.partialorder %v4751, 0.0
        %vm4824 = vcmp.gt.f32.partialorder %v4753, 0.0
        %vm4825 = vcmp.gt.f32.partialorder %v4755, 0.0
        %vm4826 = vcmp.gt.f32.partialorder %v4757, 0.0
        %vm4827 = vcmp.gt.f32.partialorder %v4761, 0.0
        %vm4828 = vcmp.gt.f32.partialorder %v4763, 0.0
        %vm4829 = vcmp.gt.f32.partialorder %v4765, 0.0
        %vm4830 = vcmp.gt.f32.partialorder %v4767, 0.0
        %vm4831 = vcmp.gt.f32.partialorder %v4771, 0.0
        %vm4832 = vcmp.gt.f32.partialorder %v4773, 0.0
        %vm4833 = vcmp.gt.f32.partialorder %v4775, 0.0
        %vm4834 = vcmp.gt.f32.partialorder %v4777, 0.0
        %vm4835 = vcmp.gt.f32.partialorder %v4781, 0.0
        %vm4836 = vcmp.gt.f32.partialorder %v4783, 0.0
        %vm4837 = vcmp.gt.f32.partialorder %v4785, 0.0
        %vm4838 = vcmp.gt.f32.partialorder %v4787, 0.0
        %vm4839 = vcmp.gt.f32.partialorder %v4791, 0.0
        %vm4840 = vcmp.gt.f32.partialorder %v4793, 0.0
        %vm4841 = vcmp.gt.f32.partialorder %v4795, 0.0
        %vm4842 = vcmp.gt.f32.partialorder %v4797, 0.0
        %vm4843 = vcmp.gt.f32.partialorder %v4801, 0.0
        %vm4844 = vcmp.gt.f32.partialorder %v4803, 0.0
        %vm4845 = vcmp.gt.f32.partialorder %v4805, 0.0
        %vm4846 = vcmp.gt.f32.partialorder %v4807, 0.0
        %vm4847 = vcmp.gt.f32.partialorder %v4811, 0.0
        %vm4848 = vcmp.gt.f32.partialorder %v4813, 0.0
        %vm4849 = vcmp.gt.f32.partialorder %v4815, 0.0
        %vm4850 = vcmp.gt.f32.partialorder %v4817, 0.0
        %v4851 = vmul.f32 %v4741, 0.01
        %v4852 = vmul.f32 %v4743, 0.01
        %v4853 = vmul.f32 %v4745, 0.01
        %v4854 = vmul.f32 %v4747, 0.01
        %v4855 = vmul.f32 %v4751, 0.01
        %v4856 = vmul.f32 %v4753, 0.01
        %v4857 = vmul.f32 %v4755, 0.01
        %v4858 = vmul.f32 %v4757, 0.01
        %v4859 = vmul.f32 %v4761, 0.01
        %v4860 = vmul.f32 %v4763, 0.01
        %v4861 = vmul.f32 %v4765, 0.01
        %v4862 = vmul.f32 %v4767, 0.01
        %v4863 = vmul.f32 %v4771, 0.01
        %v4864 = vmul.f32 %v4773, 0.01
        %v4865 = vmul.f32 %v4775, 0.01
        %v4866 = vmul.f32 %v4777, 0.01
        %v4867 = vmul.f32 %v4781, 0.01
        %v4868 = vmul.f32 %v4783, 0.01
        %v4869 = vmul.f32 %v4785, 0.01
        %v4870 = vmul.f32 %v4787, 0.01
        %v4871 = vmul.f32 %v4791, 0.01
        %v4872 = vmul.f32 %v4793, 0.01
        %v4873 = vmul.f32 %v4795, 0.01
        %v4874 = vmul.f32 %v4797, 0.01
        %v4875 = vmul.f32 %v4801, 0.01
        %v4876 = vmul.f32 %v4803, 0.01
        %v4877 = vmul.f32 %v4805, 0.01
        %v4878 = vmul.f32 %v4807, 0.01
        %v4879 = vmul.f32 %v4811, 0.01
        %v4880 = vmul.f32 %v4813, 0.01
        %v4881 = vmul.f32 %v4815, 0.01
        %v4882 = vmul.f32 %v4817, 0.01
        %v4883 = vsel %vm4819, %v4741, %v4851
        %v4884 = vsel %vm4820, %v4743, %v4852
        %v4885 = vsel %vm4821, %v4745, %v4853
        %v4886 = vsel %vm4822, %v4747, %v4854
        %v4887 = vsel %vm4823, %v4751, %v4855
        %v4888 = vsel %vm4824, %v4753, %v4856
        %v4889 = vsel %vm4825, %v4755, %v4857
        %v4890 = vsel %vm4826, %v4757, %v4858
        %v4891 = vsel %vm4827, %v4761, %v4859
        %v4892 = vsel %vm4828, %v4763, %v4860
        %v4893 = vsel %vm4829, %v4765, %v4861
        %v4894 = vsel %vm4830, %v4767, %v4862
        %v4895 = vsel %vm4831, %v4771, %v4863
        %v4896 = vsel %vm4832, %v4773, %v4864
        %v4897 = vsel %vm4833, %v4775, %v4865
        %v4898 = vsel %vm4834, %v4777, %v4866
        %v4899 = vsel %vm4835, %v4781, %v4867
        %v4900 = vsel %vm4836, %v4783, %v4868
        %v4901 = vsel %vm4837, %v4785, %v4869
        %v4902 = vsel %vm4838, %v4787, %v4870
        %v4903 = vsel %vm4839, %v4791, %v4871
        %v4904 = vsel %vm4840, %v4793, %v4872
        %v4905 = vsel %vm4841, %v4795, %v4873
        %v4906 = vsel %vm4842, %v4797, %v4874
        %v4907 = vsel %vm4843, %v4801, %v4875
        %v4908 = vsel %vm4844, %v4803, %v4876
        %v4909 = vsel %vm4845, %v4805, %v4877
        %v4910 = vsel %vm4846, %v4807, %v4878
        %v4911 = vsel %vm4847, %v4811, %v4879
        %v4912 = vsel %vm4848, %v4813, %v4880
        %v4913 = vsel %vm4849, %v4815, %v4881
        %v4914 = vsel %vm4850, %v4817, %v4882
        %v4915 = vpack.c.bf16 %v4885, %v4883
        %v4916 = vpack.c.bf16 %v4886, %v4884
        %v4917 = vpack.c.bf16 %v4889, %v4887
        %v4918 = vpack.c.bf16 %v4890, %v4888
        %v4919 = vpack.c.bf16 %v4893, %v4891
        %v4920 = vpack.c.bf16 %v4894, %v4892
        %v4921 = vpack.c.bf16 %v4897, %v4895
        %v4922 = vpack.c.bf16 %v4898, %v4896
        %v4923 = vpack.c.bf16 %v4901, %v4899
        %v4924 = vpack.c.bf16 %v4902, %v4900
        %v4925 = vpack.c.bf16 %v4905, %v4903
        %v4926 = vpack.c.bf16 %v4906, %v4904
        %v4927 = vpack.c.bf16 %v4909, %v4907
        %v4928 = vpack.c.bf16 %v4910, %v4908
        %v4929 = vpack.c.bf16 %v4913, %v4911
        %v4930 = vpack.c.bf16 %v4914, %v4912
        %v4931 = vld [vmem:[#allocation8] sm:$0xf]
        %v4932 = vld [vmem:[#allocation8 + $0x4] sm:$0xf]
        %v4933 = vld [vmem:[#allocation8 + $0x8] sm:$0xf]
        %v4934 = vld [vmem:[#allocation8 + $0xc] sm:$0xf]
        %v4935 = vld [vmem:[#allocation8 + $0x10] sm:$0xf]
        %v4936 = vld [vmem:[#allocation8 + $0x14] sm:$0xf]
        %v4937 = vld [vmem:[#allocation8 + $0x18] sm:$0xf]
        %v4938 = vld [vmem:[#allocation8 + $0x1c] sm:$0xf]
        %v4939 = vld [vmem:[#allocation8 + $0x20] sm:$0xf]
        %v4940 = vld [vmem:[#allocation8 + $0x24] sm:$0xf]
        %v4941 = vld [vmem:[#allocation8 + $0x28] sm:$0xf]
        %v4942 = vld [vmem:[#allocation8 + $0x2c] sm:$0xf]
        %v4943 = vld [vmem:[#allocation8 + $0x30] sm:$0xf]
        %v4944 = vld [vmem:[#allocation8 + $0x34] sm:$0xf]
        %v4945 = vld [vmem:[#allocation8 + $0x38] sm:$0xf]
        %v4946 = vld [vmem:[#allocation8 + $0x3c] sm:$0xf]
        %v4947 = vld [vmem:[#allocation8 + $0x40] sm:$0xf]
        %v4948 = vld [vmem:[#allocation8 + $0x44] sm:$0xf]
        %v4949 = vld [vmem:[#allocation8 + $0x48] sm:$0xf]
        %v4950 = vld [vmem:[#allocation8 + $0x4c] sm:$0xf]
        %v4951 = vld [vmem:[#allocation8 + $0x50] sm:$0xf]
        %v4952 = vld [vmem:[#allocation8 + $0x54] sm:$0xf]
        %v4953 = vld [vmem:[#allocation8 + $0x58] sm:$0xf]
        %v4954 = vld [vmem:[#allocation8 + $0x5c] sm:$0xf]
        %v4955 = vld [vmem:[#allocation8 + $0x60] sm:$0xf]
        %v4956 = vld [vmem:[#allocation8 + $0x64] sm:$0xf]
        %v4957 = vld [vmem:[#allocation8 + $0x68] sm:$0xf]
        %v4958 = vld [vmem:[#allocation8 + $0x6c] sm:$0xf]
        %v4959 = vld [vmem:[#allocation8 + $0x70] sm:$0xf]
        %v4960 = vld [vmem:[#allocation8 + $0x74] sm:$0xf]
        %v4961 = vld [vmem:[#allocation8 + $0x78] sm:$0xf]
        %v4962 = vld [vmem:[#allocation8 + $0x7c] sm:$0xf]
        %v4963 = vld [vmem:[%s21] sm:$0x1]
        %v4965 = vlaneseq
        %v4966 = vshrl.u32 %v4965, 7
        %v4967 = vsub.s32 0, %v4966
        %v4968 = vrot.slane %v4963, %v4967
        %v5002 = vunpack.c.l.b16 %v4931
        %v5003 = vunpack.c.l.b16 %v4932
        %v5004 = vunpack.c.l.b16 %v4933
        %v5005 = vunpack.c.l.b16 %v4934
        %v5006 = vunpack.c.l.b16 %v4935
        %v5007 = vunpack.c.l.b16 %v4936
        %v5008 = vunpack.c.l.b16 %v4937
        %v5009 = vunpack.c.l.b16 %v4938
        %v5010 = vunpack.c.l.b16 %v4939
        %v5011 = vunpack.c.l.b16 %v4940
        %v5012 = vunpack.c.l.b16 %v4941
        %v5013 = vunpack.c.l.b16 %v4942
        %v5014 = vunpack.c.l.b16 %v4943
        %v5015 = vunpack.c.l.b16 %v4944
        %v5016 = vunpack.c.l.b16 %v4945
        %v5017 = vunpack.c.l.b16 %v4946
        %v5018 = vunpack.c.l.b16 %v4947
        %v5019 = vunpack.c.l.b16 %v4948
        %v5020 = vunpack.c.l.b16 %v4949
        %v5021 = vunpack.c.l.b16 %v4950
        %v5022 = vunpack.c.l.b16 %v4951
        %v5023 = vunpack.c.l.b16 %v4952
        %v5024 = vunpack.c.l.b16 %v4953
        %v5025 = vunpack.c.l.b16 %v4954
        %v5026 = vunpack.c.l.b16 %v4955
        %v5027 = vunpack.c.l.b16 %v4956
        %v5028 = vunpack.c.l.b16 %v4957
        %v5029 = vunpack.c.l.b16 %v4958
        %v5030 = vunpack.c.l.b16 %v4959
        %v5031 = vunpack.c.l.b16 %v4960
        %v5032 = vunpack.c.l.b16 %v4961
        %v5033 = vunpack.c.l.b16 %v4962
        %v5034 = vpack.c.b16 %v5003, %v5002
        %v5035 = vpack.c.b16 %v5005, %v5004
        %v5036 = vpack.c.b16 %v5007, %v5006
        %v5037 = vpack.c.b16 %v5009, %v5008
        %v5038 = vpack.c.b16 %v5011, %v5010
        %v5039 = vpack.c.b16 %v5013, %v5012
        %v5040 = vpack.c.b16 %v5015, %v5014
        %v5041 = vpack.c.b16 %v5017, %v5016
        %v5042 = vpack.c.b16 %v5019, %v5018
        %v5043 = vpack.c.b16 %v5021, %v5020
        %v5044 = vpack.c.b16 %v5023, %v5022
        %v5045 = vpack.c.b16 %v5025, %v5024
        %v5046 = vpack.c.b16 %v5027, %v5026
        %v5047 = vpack.c.b16 %v5029, %v5028
        %v5048 = vpack.c.b16 %v5031, %v5030
        %v5049 = vpack.c.b16 %v5033, %v5032
        %5066 = vmatprep.subr.bf16.mxu0 0
        %5067 = vmatpush1.bf16.msra.mxu0 %v5034
        %5068 = vmatprep.subr.bf16.mxu0 0
        %5069 = vmatpush1.bf16.msra.mxu0 %v5035
        %5070 = vmatprep.subr.bf16.mxu0 0
        %5071 = vmatpush1.bf16.msra.mxu0 %v5036
        %5072 = vmatprep.subr.bf16.mxu0 0
        %5073 = vmatpush1.bf16.msra.mxu0 %v5037
        %5074 = vmatprep.subr.bf16.mxu0 0
        %5075 = vmatpush1.bf16.msra.mxu0 %v5038
        %5076 = vmatprep.subr.bf16.mxu0 0
        %5077 = vmatpush1.bf16.msra.mxu0 %v5039
        %5078 = vmatprep.subr.bf16.mxu0 0
        %5079 = vmatpush1.bf16.msra.mxu0 %v5040
        %5080 = vmatprep.subr.bf16.mxu0 0
        %5081 = vmatpush1.bf16.msra.mxu0 %v5041
        %5082 = vmatprep.subr.bf16.mxu0 0
        %5083 = vmatpush1.bf16.msra.mxu0 %v5042
        %5084 = vmatprep.subr.bf16.mxu0 0
        %5085 = vmatpush1.bf16.msra.mxu0 %v5043
        %5086 = vmatprep.subr.bf16.mxu0 0
        %5087 = vmatpush1.bf16.msra.mxu0 %v5044
        %5088 = vmatprep.subr.bf16.mxu0 0
        %5089 = vmatpush1.bf16.msra.mxu0 %v5045
        %5090 = vmatprep.subr.bf16.mxu0 0
        %5091 = vmatpush1.bf16.msra.mxu0 %v5046
        %5092 = vmatprep.subr.bf16.mxu0 0
        %5093 = vmatpush1.bf16.msra.mxu0 %v5047
        %5094 = vmatprep.subr.bf16.mxu0 0
        %5095 = vmatpush1.bf16.msra.mxu0 %v5048
        %5096 = vmatprep.subr.bf16.mxu0 0
        %5097 = vmatpush1.bf16.msra.mxu0 %v5049
        %5098 = vmatprep.mubr.bf16.mxu0 %v4916
        %5099 = vmatmul.mubr.bf16.gmra.mrb[0].mxu0 %v4915
        %v5100 = vpop.f32.mrb[0].mxu0
        %v5101 = vadd.f32 %v4968, %v5100
        %v5102 = vpop.f32.mrb[0].mxu0
        %v5103 = vpop.f32.mrb[0].mxu0
        %v5104 = vadd.f32 %v4968, %v5103
        %v5105 = vpop.f32.mrb[0].mxu0
        %5106 = vmatprep.mubr.bf16.mxu0 %v4918
        %5107 = vmatmul.mubr.bf16.gmra.mrb[0].mxu0 %v4917
        %v5108 = vpop.f32.mrb[0].mxu0
        %v5109 = vadd.f32 %v4968, %v5108
        %v5110 = vpop.f32.mrb[0].mxu0
        %v5111 = vpop.f32.mrb[0].mxu0
        %v5112 = vadd.f32 %v4968, %v5111
        %v5113 = vpop.f32.mrb[0].mxu0
        %5114 = vmatprep.mubr.bf16.mxu0 %v4920
        %5115 = vmatmul.mubr.bf16.gmra.mrb[0].mxu0 %v4919
        %v5116 = vpop.f32.mrb[0].mxu0
        %v5117 = vadd.f32 %v4968, %v5116
        %v5118 = vpop.f32.mrb[0].mxu0
        %v5119 = vpop.f32.mrb[0].mxu0
        %v5120 = vadd.f32 %v4968, %v5119
        %v5121 = vpop.f32.mrb[0].mxu0
        %5122 = vmatprep.mubr.bf16.mxu0 %v4922
        %5123 = vmatmul.mubr.bf16.gmra.mrb[0].mxu0 %v4921
        %v5124 = vpop.f32.mrb[0].mxu0
        %v5125 = vadd.f32 %v4968, %v5124
        %v5126 = vpop.f32.mrb[0].mxu0
        %v5127 = vpop.f32.mrb[0].mxu0
        %v5128 = vadd.f32 %v4968, %v5127
        %v5129 = vpop.f32.mrb[0].mxu0
        %5130 = vmatprep.mubr.bf16.mxu0 %v4924
        %5131 = vmatmul.mubr.bf16.gmra.mrb[0].mxu0 %v4923
        %v5132 = vpop.f32.mrb[0].mxu0
        %v5133 = vadd.f32 %v4968, %v5132
        %v5134 = vpop.f32.mrb[0].mxu0
        %v5135 = vpop.f32.mrb[0].mxu0
        %v5136 = vadd.f32 %v4968, %v5135
        %v5137 = vpop.f32.mrb[0].mxu0
        %5138 = vmatprep.mubr.bf16.mxu0 %v4926
        %5139 = vmatmul.mubr.bf16.gmra.mrb[0].mxu0 %v4925
        %v5140 = vpop.f32.mrb[0].mxu0
        %v5141 = vadd.f32 %v4968, %v5140
        %v5142 = vpop.f32.mrb[0].mxu0
        %v5143 = vpop.f32.mrb[0].mxu0
        %v5144 = vadd.f32 %v4968, %v5143
        %v5145 = vpop.f32.mrb[0].mxu0
        %5146 = vmatprep.mubr.bf16.mxu0 %v4928
        %5147 = vmatmul.mubr.bf16.gmra.mrb[0].mxu0 %v4927
        %v5148 = vpop.f32.mrb[0].mxu0
        %v5149 = vadd.f32 %v4968, %v5148
        %v5150 = vpop.f32.mrb[0].mxu0
        %v5151 = vpop.f32.mrb[0].mxu0
        %v5152 = vadd.f32 %v4968, %v5151
        %v5153 = vpop.f32.mrb[0].mxu0
        %5154 = vmatprep.mubr.bf16.mxu0 %v4930
        %5155 = vmatmul.mubr.bf16.gmra.mrb[0].mxu0 %v4929
        %v5156 = vpop.f32.mrb[0].mxu0
        %v5157 = vadd.f32 %v4968, %v5156
        %v5158 = vpop.f32.mrb[0].mxu0
        %v5159 = vpop.f32.mrb[0].mxu0
        %v5160 = vadd.f32 %v4968, %v5159
        %v5161 = vpop.f32.mrb[0].mxu0
        %5162 = vdwg.mxu0
        %vm5163 = vcmp.gt.f32.partialorder %v5101, 0.0
        %vm5164 = vcmp.gt.f32.partialorder %v5104, 0.0
        %vm5165 = vcmp.gt.f32.partialorder %v5109, 0.0
        %vm5166 = vcmp.gt.f32.partialorder %v5112, 0.0
        %vm5167 = vcmp.gt.f32.partialorder %v5117, 0.0
        %vm5168 = vcmp.gt.f32.partialorder %v5120, 0.0
        %vm5169 = vcmp.gt.f32.partialorder %v5125, 0.0
        %vm5170 = vcmp.gt.f32.partialorder %v5128, 0.0
        %vm5171 = vcmp.gt.f32.partialorder %v5133, 0.0
        %vm5172 = vcmp.gt.f32.partialorder %v5136, 0.0
        %vm5173 = vcmp.gt.f32.partialorder %v5141, 0.0
        %vm5174 = vcmp.gt.f32.partialorder %v5144, 0.0
        %vm5175 = vcmp.gt.f32.partialorder %v5149, 0.0
        %vm5176 = vcmp.gt.f32.partialorder %v5152, 0.0
        %vm5177 = vcmp.gt.f32.partialorder %v5157, 0.0
        %vm5178 = vcmp.gt.f32.partialorder %v5160, 0.0
        %v5179 = vmul.f32 %v5101, 0.01
        %v5180 = vmul.f32 %v5104, 0.01
        %v5181 = vmul.f32 %v5109, 0.01
        %v5182 = vmul.f32 %v5112, 0.01
        %v5183 = vmul.f32 %v5117, 0.01
        %v5184 = vmul.f32 %v5120, 0.01
        %v5185 = vmul.f32 %v5125, 0.01
        %v5186 = vmul.f32 %v5128, 0.01
        %v5187 = vmul.f32 %v5133, 0.01
        %v5188 = vmul.f32 %v5136, 0.01
        %v5189 = vmul.f32 %v5141, 0.01
        %v5190 = vmul.f32 %v5144, 0.01
        %v5191 = vmul.f32 %v5149, 0.01
        %v5192 = vmul.f32 %v5152, 0.01
        %v5193 = vmul.f32 %v5157, 0.01
        %v5194 = vmul.f32 %v5160, 0.01
        %v5195 = vsel %vm5163, %v5101, %v5179
        %v5196 = vsel %vm5164, %v5104, %v5180
        %v5197 = vsel %vm5165, %v5109, %v5181
        %v5198 = vsel %vm5166, %v5112, %v5182
        %v5199 = vsel %vm5167, %v5117, %v5183
        %v5200 = vsel %vm5168, %v5120, %v5184
        %v5201 = vsel %vm5169, %v5125, %v5185
        %v5202 = vsel %vm5170, %v5128, %v5186
        %v5203 = vsel %vm5171, %v5133, %v5187
        %v5204 = vsel %vm5172, %v5136, %v5188
        %v5205 = vsel %vm5173, %v5141, %v5189
        %v5206 = vsel %vm5174, %v5144, %v5190
        %v5207 = vsel %vm5175, %v5149, %v5191
        %v5208 = vsel %vm5176, %v5152, %v5192
        %v5209 = vsel %vm5177, %v5157, %v5193
        %v5210 = vsel %vm5178, %v5160, %v5194
        %5211 = vst [vmem:[%s877] sm:$0xff] %v2517
        %5212 = vst [vmem:[%s877 + $0x8] sm:$0xff] %v2518
        %5213 = vst [vmem:[%s877 + $0x10] sm:$0xff] %v2519
        %5214 = vst [vmem:[%s877 + $0x18] sm:$0xff] %v2520
        %5215 = vst [vmem:[%s877 + $0x20] sm:$0xff] %v2521
        %5216 = vst [vmem:[%s877 + $0x28] sm:$0xff] %v2522
        %5217 = vst [vmem:[%s877 + $0x30] sm:$0xff] %v2523
        %5218 = vst [vmem:[%s877 + $0x38] sm:$0xff] %v2524
        %5219 = vst [vmem:[%s877 + $0x40] sm:$0xff] %v2525
        %5220 = vst [vmem:[%s877 + $0x48] sm:$0xff] %v2526
        %5221 = vst [vmem:[%s877 + $0x50] sm:$0xff] %v2527
        %5222 = vst [vmem:[%s877 + $0x58] sm:$0xff] %v2528
        %5223 = vst [vmem:[%s877 + $0x60] sm:$0xff] %v2529
        %5224 = vst [vmem:[%s877 + $0x68] sm:$0xff] %v2530
        %5225 = vst [vmem:[%s877 + $0x70] sm:$0xff] %v2531
        %5226 = vst [vmem:[%s877 + $0x78] sm:$0xff] %v2532
        %5227 = vst [vmem:[%s884] sm:$0xff] %v3684
        %5228 = vst [vmem:[%s884 + $0x8] sm:$0xff] %v3685
        %5229 = vst [vmem:[%s884 + $0x10] sm:$0xff] %v3686
        %5230 = vst [vmem:[%s884 + $0x18] sm:$0xff] %v3687
        %5231 = vst [vmem:[%s884 + $0x20] sm:$0xff] %v3688
        %5232 = vst [vmem:[%s884 + $0x28] sm:$0xff] %v3689
        %5233 = vst [vmem:[%s884 + $0x30] sm:$0xff] %v3690
        %5234 = vst [vmem:[%s884 + $0x38] sm:$0xff] %v3691
        %5235 = vst [vmem:[%s884 + $0x40] sm:$0xff] %v3692
        %5236 = vst [vmem:[%s884 + $0x48] sm:$0xff] %v3693
        %5237 = vst [vmem:[%s884 + $0x50] sm:$0xff] %v3694
        %5238 = vst [vmem:[%s884 + $0x58] sm:$0xff] %v3695
        %5239 = vst [vmem:[%s884 + $0x60] sm:$0xff] %v3696
        %5240 = vst [vmem:[%s884 + $0x68] sm:$0xff] %v3697
        %5241 = vst [vmem:[%s884 + $0x70] sm:$0xff] %v3698
        %5242 = vst [vmem:[%s884 + $0x78] sm:$0xff] %v3699
        %5243 = vst [vmem:[%s884 + $0x80] sm:$0xff] %v3700
        %5244 = vst [vmem:[%s884 + $0x88] sm:$0xff] %v3701
        %5245 = vst [vmem:[%s884 + $0x90] sm:$0xff] %v3702
        %5246 = vst [vmem:[%s884 + $0x98] sm:$0xff] %v3703
        %5247 = vst [vmem:[%s884 + $0xa0] sm:$0xff] %v3704
        %5248 = vst [vmem:[%s884 + $0xa8] sm:$0xff] %v3705
        %5249 = vst [vmem:[%s884 + $0xb0] sm:$0xff] %v3706
        %5250 = vst [vmem:[%s884 + $0xb8] sm:$0xff] %v3707
        %5251 = vst [vmem:[%s884 + $0xc0] sm:$0xff] %v3708
        %5252 = vst [vmem:[%s884 + $0xc8] sm:$0xff] %v3709
        %5253 = vst [vmem:[%s884 + $0xd0] sm:$0xff] %v3710
        %5254 = vst [vmem:[%s884 + $0xd8] sm:$0xff] %v3711
        %5255 = vst [vmem:[%s884 + $0xe0] sm:$0xff] %v3712
        %5256 = vst [vmem:[%s884 + $0xe8] sm:$0xff] %v3713
        %5257 = vst [vmem:[%s884 + $0xf0] sm:$0xff] %v3714
        %5258 = vst [vmem:[%s884 + $0xf8] sm:$0xff] %v3715
        %5259 = vst.msk [vmem:[%s924] sm:$0xff] %vm4441, %v4634
        %5260 = vst.msk [vmem:[%s924 + $0x8] sm:$0xff] %vm4441, %v4635
        %5261 = vst.msk [vmem:[%s924 + $0x10] sm:$0xff] %vm4441, %v4636
        %5262 = vst.msk [vmem:[%s924 + $0x18] sm:$0xff] %vm4441, %v4637
        %5263 = vst.msk [vmem:[%s924 + $0x20] sm:$0xff] %vm4441, %v4638
        %5264 = vst.msk [vmem:[%s924 + $0x28] sm:$0xff] %vm4441, %v4639
        %5265 = vst.msk [vmem:[%s924 + $0x30] sm:$0xff] %vm4441, %v4640
        %5266 = vst.msk [vmem:[%s924 + $0x38] sm:$0xff] %vm4441, %v4641
        %5267 = vst.msk [vmem:[%s924 + $0x40] sm:$0xff] %vm4441, %v4642
        %5268 = vst.msk [vmem:[%s924 + $0x48] sm:$0xff] %vm4441, %v4643
        %5269 = vst.msk [vmem:[%s924 + $0x50] sm:$0xff] %vm4441, %v4644
        %5270 = vst.msk [vmem:[%s924 + $0x58] sm:$0xff] %vm4441, %v4645
        %5271 = vst.msk [vmem:[%s924 + $0x60] sm:$0xff] %vm4441, %v4646
        %5272 = vst.msk [vmem:[%s924 + $0x68] sm:$0xff] %vm4441, %v4647
        %5273 = vst.msk [vmem:[%s924 + $0x70] sm:$0xff] %vm4441, %v4648
        %5274 = vst.msk [vmem:[%s924 + $0x78] sm:$0xff] %vm4441, %v4649
        %5275 = vst [vmem:[%s898] sm:$0xff] %v5195
        %5276 = vst [vmem:[%s898 + $0x8] sm:$0xff] %v5196
        %5277 = vst [vmem:[%s898 + $0x10] sm:$0xff] %v5197
        %5278 = vst [vmem:[%s898 + $0x18] sm:$0xff] %v5198
        %5279 = vst [vmem:[%s898 + $0x20] sm:$0xff] %v5199
        %5280 = vst [vmem:[%s898 + $0x28] sm:$0xff] %v5200
        %5281 = vst [vmem:[%s898 + $0x30] sm:$0xff] %v5201
        %5282 = vst [vmem:[%s898 + $0x38] sm:$0xff] %v5202
        %5283 = vst [vmem:[%s898 + $0x40] sm:$0xff] %v5203
        %5284 = vst [vmem:[%s898 + $0x48] sm:$0xff] %v5204
        %5285 = vst [vmem:[%s898 + $0x50] sm:$0xff] %v5205
        %5286 = vst [vmem:[%s898 + $0x58] sm:$0xff] %v5206
        %5287 = vst [vmem:[%s898 + $0x60] sm:$0xff] %v5207
        %5288 = vst [vmem:[%s898 + $0x68] sm:$0xff] %v5208
        %5289 = vst [vmem:[%s898 + $0x70] sm:$0xff] %v5209
        %5290 = vst [vmem:[%s898 + $0x78] sm:$0xff] %v5210
        %v5291 = vsub.f32 %v936, %v3684
        %v5292 = vsub.f32 %v937, %v3685
        %v5293 = vsub.f32 %v938, %v3686
        %v5294 = vsub.f32 %v939, %v3687
        %v5295 = vsub.f32 %v940, %v3688
        %v5296 = vsub.f32 %v941, %v3689
        %v5297 = vsub.f32 %v942, %v3690
        %v5298 = vsub.f32 %v943, %v3691
        %v5299 = vsub.f32 %v944, %v3692
        %v5300 = vsub.f32 %v945, %v3693
        %v5301 = vsub.f32 %v946, %v3694
        %v5302 = vsub.f32 %v947, %v3695
        %v5303 = vsub.f32 %v948, %v3696
        %v5304 = vsub.f32 %v949, %v3697
        %v5305 = vsub.f32 %v950, %v3698
        %v5306 = vsub.f32 %v951, %v3699
        %v5307 = vsub.f32 %v952, %v3700
        %v5308 = vsub.f32 %v953, %v3701
        %v5309 = vsub.f32 %v954, %v3702
        %v5310 = vsub.f32 %v955, %v3703
        %v5311 = vsub.f32 %v956, %v3704
        %v5312 = vsub.f32 %v957, %v3705
        %v5313 = vsub.f32 %v958, %v3706
        %v5314 = vsub.f32 %v959, %v3707
        %v5315 = vsub.f32 %v960, %v3708
        %v5316 = vsub.f32 %v961, %v3709
        %v5317 = vsub.f32 %v962, %v3710
        %v5318 = vsub.f32 %v963, %v3711
        %v5319 = vsub.f32 %v964, %v3712
        %v5320 = vsub.f32 %v965, %v3713
        %v5321 = vsub.f32 %v966, %v3714
        %v5322 = vsub.f32 %v967, %v3715
        %v5323 = vmul.f32 %v5291, 0.5
        %v5324 = vmul.f32 %v5292, 0.5
        %v5325 = vmul.f32 %v5293, 0.5
        %v5326 = vmul.f32 %v5294, 0.5
        %v5327 = vmul.f32 %v5295, 0.5
        %v5328 = vmul.f32 %v5296, 0.5
        %v5329 = vmul.f32 %v5297, 0.5
        %v5330 = vmul.f32 %v5298, 0.5
        %v5331 = vmul.f32 %v5299, 0.5
        %v5332 = vmul.f32 %v5300, 0.5
        %v5333 = vmul.f32 %v5301, 0.5
        %v5334 = vmul.f32 %v5302, 0.5
        %v5335 = vmul.f32 %v5303, 0.5
        %v5336 = vmul.f32 %v5304, 0.5
        %v5337 = vmul.f32 %v5305, 0.5
        %v5338 = vmul.f32 %v5306, 0.5
        %v5339 = vmul.f32 %v5307, 0.5
        %v5340 = vmul.f32 %v5308, 0.5
        %v5341 = vmul.f32 %v5309, 0.5
        %v5342 = vmul.f32 %v5310, 0.5
        %v5343 = vmul.f32 %v5311, 0.5
        %v5344 = vmul.f32 %v5312, 0.5
        %v5345 = vmul.f32 %v5313, 0.5
        %v5346 = vmul.f32 %v5314, 0.5
        %v5347 = vmul.f32 %v5315, 0.5
        %v5348 = vmul.f32 %v5316, 0.5
        %v5349 = vmul.f32 %v5317, 0.5
        %v5350 = vmul.f32 %v5318, 0.5
        %v5351 = vmul.f32 %v5319, 0.5
        %v5352 = vmul.f32 %v5320, 0.5
        %v5353 = vmul.f32 %v5321, 0.5
        %v5354 = vmul.f32 %v5322, 0.5
        %v5355 = vmul.f32 %v5323, %v5291
        %v5356 = vmul.f32 %v5324, %v5292
        %v5357 = vmul.f32 %v5325, %v5293
        %v5358 = vmul.f32 %v5326, %v5294
        %v5359 = vmul.f32 %v5327, %v5295
        %v5360 = vmul.f32 %v5328, %v5296
        %v5361 = vmul.f32 %v5329, %v5297
        %v5362 = vmul.f32 %v5330, %v5298
        %v5363 = vmul.f32 %v5331, %v5299
        %v5364 = vmul.f32 %v5332, %v5300
        %v5365 = vmul.f32 %v5333, %v5301
        %v5366 = vmul.f32 %v5334, %v5302
        %v5367 = vmul.f32 %v5335, %v5303
        %v5368 = vmul.f32 %v5336, %v5304
        %v5369 = vmul.f32 %v5337, %v5305
        %v5370 = vmul.f32 %v5338, %v5306
        %v5371 = vmul.f32 %v5339, %v5307
        %v5372 = vmul.f32 %v5340, %v5308
        %v5373 = vmul.f32 %v5341, %v5309
        %v5374 = vmul.f32 %v5342, %v5310
        %v5375 = vmul.f32 %v5343, %v5311
        %v5376 = vmul.f32 %v5344, %v5312
        %v5377 = vmul.f32 %v5345, %v5313
        %v5378 = vmul.f32 %v5346, %v5314
        %v5379 = vmul.f32 %v5347, %v5315
        %v5380 = vmul.f32 %v5348, %v5316
        %v5381 = vmul.f32 %v5349, %v5317
        %v5382 = vmul.f32 %v5350, %v5318
        %v5383 = vmul.f32 %v5351, %v5319
        %v5384 = vmul.f32 %v5352, %v5320
        %v5385 = vmul.f32 %v5353, %v5321
        %v5386 = vmul.f32 %v5354, %v5322
        %v5387 = vld [vmem:[%s1] sm:$0x3]
        %v5389 = vlaneseq
        %v5390 = vshrl.u32 %v5389, 7
        %v5391 = vsub.s32 0, %v5390
        %v5392 = vrot.slane %v5387, %v5391
        %v5393 = vlaneseq
        %v5394 = vshrl.u32 %v5393, 7
        %v5395 = vsub.s32 1, %v5394
        %v5396 = vrot.slane %v5387, %v5395
        %v5399 = vmul.f32 %v5355, %v5392
        %v5400 = vmul.f32 %v5356, %v5396
        %v5401 = vmul.f32 %v5357, %v5392
        %v5402 = vmul.f32 %v5358, %v5396
        %v5403 = vmul.f32 %v5359, %v5392
        %v5404 = vmul.f32 %v5360, %v5396
        %v5405 = vmul.f32 %v5361, %v5392
        %v5406 = vmul.f32 %v5362, %v5396
        %v5407 = vmul.f32 %v5363, %v5392
        %v5408 = vmul.f32 %v5364, %v5396
        %v5409 = vmul.f32 %v5365, %v5392
        %v5410 = vmul.f32 %v5366, %v5396
        %v5411 = vmul.f32 %v5367, %v5392
        %v5412 = vmul.f32 %v5368, %v5396
        %v5413 = vmul.f32 %v5369, %v5392
        %v5414 = vmul.f32 %v5370, %v5396
        %v5415 = vmul.f32 %v5371, %v5392
        %v5416 = vmul.f32 %v5372, %v5396
        %v5417 = vmul.f32 %v5373, %v5392
        %v5418 = vmul.f32 %v5374, %v5396
        %v5419 = vmul.f32 %v5375, %v5392
        %v5420 = vmul.f32 %v5376, %v5396
        %v5421 = vmul.f32 %v5377, %v5392
        %v5422 = vmul.f32 %v5378, %v5396
        %v5423 = vmul.f32 %v5379, %v5392
        %v5424 = vmul.f32 %v5380, %v5396
        %v5425 = vmul.f32 %v5381, %v5392
        %v5426 = vmul.f32 %v5382, %v5396
        %v5427 = vmul.f32 %v5383, %v5392
        %v5428 = vmul.f32 %v5384, %v5396
        %v5429 = vmul.f32 %v5385, %v5392
        %v5430 = vmul.f32 %v5386, %v5396
        %v5431 = vadd.f32 %v5399, %v5400
        %5432 = vadd.xlane.f32.xlu0 %v5431
        %v5433 = vpop.xlane.xlu0 %5432
        %v5434 = vadd.f32 %v5401, %v5402
        %5435 = vadd.xlane.f32.xlu0 %v5434
        %v5436 = vpop.xlane.xlu0 %5435
        %v5437 = vadd.f32 %v5403, %v5404
        %5438 = vadd.xlane.f32.xlu0 %v5437
        %v5439 = vpop.xlane.xlu0 %5438
        %v5440 = vadd.f32 %v5405, %v5406
        %5441 = vadd.xlane.f32.xlu0 %v5440
        %v5442 = vpop.xlane.xlu0 %5441
        %v5443 = vadd.f32 %v5407, %v5408
        %5444 = vadd.xlane.f32.xlu0 %v5443
        %v5445 = vpop.xlane.xlu0 %5444
        %v5446 = vadd.f32 %v5409, %v5410
        %5447 = vadd.xlane.f32.xlu0 %v5446
        %v5448 = vpop.xlane.xlu0 %5447
        %v5449 = vadd.f32 %v5411, %v5412
        %5450 = vadd.xlane.f32.xlu0 %v5449
        %v5451 = vpop.xlane.xlu0 %5450
        %v5452 = vadd.f32 %v5413, %v5414
        %5453 = vadd.xlane.f32.xlu0 %v5452
        %v5454 = vpop.xlane.xlu0 %5453
        %v5455 = vadd.f32 %v5415, %v5416
        %5456 = vadd.xlane.f32.xlu0 %v5455
        %v5457 = vpop.xlane.xlu0 %5456
        %v5458 = vadd.f32 %v5417, %v5418
        %5459 = vadd.xlane.f32.xlu0 %v5458
        %v5460 = vpop.xlane.xlu0 %5459
        %v5461 = vadd.f32 %v5419, %v5420
        %5462 = vadd.xlane.f32.xlu0 %v5461
        %v5463 = vpop.xlane.xlu0 %5462
        %v5464 = vadd.f32 %v5421, %v5422
        %5465 = vadd.xlane.f32.xlu0 %v5464
        %v5466 = vpop.xlane.xlu0 %5465
        %v5467 = vadd.f32 %v5423, %v5424
        %5468 = vadd.xlane.f32.xlu0 %v5467
        %v5469 = vpop.xlane.xlu0 %5468
        %v5470 = vadd.f32 %v5425, %v5426
        %5471 = vadd.xlane.f32.xlu0 %v5470
        %v5472 = vpop.xlane.xlu0 %5471
        %v5473 = vadd.f32 %v5427, %v5428
        %5474 = vadd.xlane.f32.xlu0 %v5473
        %v5475 = vpop.xlane.xlu0 %5474
        %v5476 = vadd.f32 %v5429, %v5430
        %5477 = vadd.xlane.f32.xlu0 %v5476
        %v5478 = vpop.xlane.xlu0 %5477
        %v5479 = vadd.f32 %v5433, %v5436
        %v5480 = vadd.f32 %v5479, %v5439
        %v5481 = vadd.f32 %v5480, %v5442
        %v5482 = vadd.f32 %v5481, %v5445
        %v5483 = vadd.f32 %v5482, %v5448
        %v5484 = vadd.f32 %v5483, %v5451
        %v5485 = vadd.f32 %v5484, %v5454
        %v5486 = vadd.f32 %v5485, %v5457
        %v5487 = vadd.f32 %v5486, %v5460
        %v5488 = vadd.f32 %v5487, %v5463
        %v5489 = vadd.f32 %v5488, %v5466
        %v5490 = vadd.f32 %v5489, %v5469
        %v5491 = vadd.f32 %v5490, %v5472
        %v5492 = vadd.f32 %v5491, %v5475
        %v5493 = vadd.f32 %v5492, %v5478
        %v5494 = vrot.slane %v5493, 4
        %v5495 = vadd.f32 %v5493, %v5494
        %v5496 = vrot.slane %v5495, 2
        %v5497 = vadd.f32 %v5495, %v5496
        %v5498 = vrot.slane %v5497, 1
        %v5499 = vadd.f32 %v5497, %v5498
        %v5500 = vsel %vm4441, %v4634, -inf
        %5501 = vmax.xlane.f32.xlu0 %v5500
        %v5502 = vpop.xlane.xlu0 %5501
        %v5503 = vsel %vm4441, %v4635, -inf
        %5504 = vmax.xlane.f32.xlu0 %v5503
        %v5505 = vpop.xlane.xlu0 %5504
        %v5506 = vsel %vm4441, %v4636, -inf
        %5507 = vmax.xlane.f32.xlu0 %v5506
        %v5508 = vpop.xlane.xlu0 %5507
        %v5509 = vsel %vm4441, %v4637, -inf
        %5510 = vmax.xlane.f32.xlu0 %v5509
        %v5511 = vpop.xlane.xlu0 %5510
        %v5512 = vsel %vm4441, %v4638, -inf
        %5513 = vmax.xlane.f32.xlu0 %v5512
        %v5514 = vpop.xlane.xlu0 %5513
        %v5515 = vsel %vm4441, %v4639, -inf
        %5516 = vmax.xlane.f32.xlu0 %v5515
        %v5517 = vpop.xlane.xlu0 %5516
        %v5518 = vsel %vm4441, %v4640, -inf
        %5519 = vmax.xlane.f32.xlu0 %v5518
        %v5520 = vpop.xlane.xlu0 %5519
        %v5521 = vsel %vm4441, %v4641, -inf
        %5522 = vmax.xlane.f32.xlu0 %v5521
        %v5523 = vpop.xlane.xlu0 %5522
        %v5524 = vsel %vm4441, %v4642, -inf
        %5525 = vmax.xlane.f32.xlu0 %v5524
        %v5526 = vpop.xlane.xlu0 %5525
        %v5527 = vsel %vm4441, %v4643, -inf
        %5528 = vmax.xlane.f32.xlu0 %v5527
        %v5529 = vpop.xlane.xlu0 %5528
        %v5530 = vsel %vm4441, %v4644, -inf
        %5531 = vmax.xlane.f32.xlu0 %v5530
        %v5532 = vpop.xlane.xlu0 %5531
        %v5533 = vsel %vm4441, %v4645, -inf
        %5534 = vmax.xlane.f32.xlu0 %v5533
        %v5535 = vpop.xlane.xlu0 %5534
        %v5536 = vsel %vm4441, %v4646, -inf
        %5537 = vmax.xlane.f32.xlu0 %v5536
        %v5538 = vpop.xlane.xlu0 %5537
        %v5539 = vsel %vm4441, %v4647, -inf
        %5540 = vmax.xlane.f32.xlu0 %v5539
        %v5541 = vpop.xlane.xlu0 %5540
        %v5542 = vsel %vm4441, %v4648, -inf
        %5543 = vmax.xlane.f32.xlu0 %v5542
        %v5544 = vpop.xlane.xlu0 %5543
        %v5545 = vsel %vm4441, %v4649, -inf
        %5546 = vmax.xlane.f32.xlu0 %v5545
        %v5547 = vpop.xlane.xlu0 %5546
        %v5548 = vadd.f32 %v5502, %v5505
        %v5549 = vadd.f32 %v5548, %v5508
        %v5550 = vadd.f32 %v5549, %v5511
        %v5551 = vadd.f32 %v5550, %v5514
        %v5552 = vadd.f32 %v5551, %v5517
        %v5553 = vadd.f32 %v5552, %v5520
        %v5554 = vadd.f32 %v5553, %v5523
        %v5555 = vadd.f32 %v5554, %v5526
        %v5556 = vadd.f32 %v5555, %v5529
        %v5557 = vadd.f32 %v5556, %v5532
        %v5558 = vadd.f32 %v5557, %v5535
        %v5559 = vadd.f32 %v5558, %v5538
        %v5560 = vadd.f32 %v5559, %v5541
        %v5561 = vadd.f32 %v5560, %v5544
        %v5562 = vadd.f32 %v5561, %v5547
        %v5563 = vrot.slane %v5562, 4
        %v5564 = vadd.f32 %v5562, %v5563
        %v5565 = vrot.slane %v5564, 2
        %v5566 = vadd.f32 %v5564, %v5565
        %v5567 = vrot.slane %v5566, 1
        %v5568 = vadd.f32 %v5566, %v5567
        %v5569 = vsub.f32 %v5195, %v2517
        %v5570 = vsub.f32 %v5196, %v2518
        %v5571 = vsub.f32 %v5197, %v2519
        %v5572 = vsub.f32 %v5198, %v2520
        %v5573 = vsub.f32 %v5199, %v2521
        %v5574 = vsub.f32 %v5200, %v2522
        %v5575 = vsub.f32 %v5201, %v2523
        %v5576 = vsub.f32 %v5202, %v2524
        %v5577 = vsub.f32 %v5203, %v2525
        %v5578 = vsub.f32 %v5204, %v2526
        %v5579 = vsub.f32 %v5205, %v2527
        %v5580 = vsub.f32 %v5206, %v2528
        %v5581 = vsub.f32 %v5207, %v2529
        %v5582 = vsub.f32 %v5208, %v2530
        %v5583 = vsub.f32 %v5209, %v2531
        %v5584 = vsub.f32 %v5210, %v2532
        %v5585 = vmul.f32 %v5569, %v5569
        %v5586 = vmul.f32 %v5570, %v5570
        %v5587 = vmul.f32 %v5571, %v5571
        %v5588 = vmul.f32 %v5572, %v5572
        %v5589 = vmul.f32 %v5573, %v5573
        %v5590 = vmul.f32 %v5574, %v5574
        %v5591 = vmul.f32 %v5575, %v5575
        %v5592 = vmul.f32 %v5576, %v5576
        %v5593 = vmul.f32 %v5577, %v5577
        %v5594 = vmul.f32 %v5578, %v5578
        %v5595 = vmul.f32 %v5579, %v5579
        %v5596 = vmul.f32 %v5580, %v5580
        %v5597 = vmul.f32 %v5581, %v5581
        %v5598 = vmul.f32 %v5582, %v5582
        %v5599 = vmul.f32 %v5583, %v5583
        %v5600 = vmul.f32 %v5584, %v5584
        %5601 = vadd.xlane.f32.xlu0 %v5585
        %v5602 = vpop.xlane.xlu0 %5601
        %5603 = vadd.xlane.f32.xlu0 %v5586
        %v5604 = vpop.xlane.xlu0 %5603
        %5605 = vadd.xlane.f32.xlu0 %v5587
        %v5606 = vpop.xlane.xlu0 %5605
        %5607 = vadd.xlane.f32.xlu0 %v5588
        %v5608 = vpop.xlane.xlu0 %5607
        %5609 = vadd.xlane.f32.xlu0 %v5589
        %v5610 = vpop.xlane.xlu0 %5609
        %5611 = vadd.xlane.f32.xlu0 %v5590
        %v5612 = vpop.xlane.xlu0 %5611
        %5613 = vadd.xlane.f32.xlu0 %v5591
        %v5614 = vpop.xlane.xlu0 %5613
        %5615 = vadd.xlane.f32.xlu0 %v5592
        %v5616 = vpop.xlane.xlu0 %5615
        %5617 = vadd.xlane.f32.xlu0 %v5593
        %v5618 = vpop.xlane.xlu0 %5617
        %5619 = vadd.xlane.f32.xlu0 %v5594
        %v5620 = vpop.xlane.xlu0 %5619
        %5621 = vadd.xlane.f32.xlu0 %v5595
        %v5622 = vpop.xlane.xlu0 %5621
        %5623 = vadd.xlane.f32.xlu0 %v5596
        %v5624 = vpop.xlane.xlu0 %5623
        %5625 = vadd.xlane.f32.xlu0 %v5597
        %v5626 = vpop.xlane.xlu0 %5625
        %5627 = vadd.xlane.f32.xlu0 %v5598
        %v5628 = vpop.xlane.xlu0 %5627
        %5629 = vadd.xlane.f32.xlu0 %v5599
        %v5630 = vpop.xlane.xlu0 %5629
        %5631 = vadd.xlane.f32.xlu0 %v5600
        %v5632 = vpop.xlane.xlu0 %5631
        %v5633 = vadd.f32 %v5602, %v5604
        %v5634 = vadd.f32 %v5633, %v5606
        %v5635 = vadd.f32 %v5634, %v5608
        %v5636 = vadd.f32 %v5635, %v5610
        %v5637 = vadd.f32 %v5636, %v5612
        %v5638 = vadd.f32 %v5637, %v5614
        %v5639 = vadd.f32 %v5638, %v5616
        %v5640 = vadd.f32 %v5639, %v5618
        %v5641 = vadd.f32 %v5640, %v5620
        %v5642 = vadd.f32 %v5641, %v5622
        %v5643 = vadd.f32 %v5642, %v5624
        %v5644 = vadd.f32 %v5643, %v5626
        %v5645 = vadd.f32 %v5644, %v5628
        %v5646 = vadd.f32 %v5645, %v5630
        %v5647 = vadd.f32 %v5646, %v5632
        %v5648 = vrot.slane %v5647, 4
        %v5649 = vadd.f32 %v5647, %v5648
        %v5650 = vrot.slane %v5649, 2
        %v5651 = vadd.f32 %v5649, %v5650
        %v5652 = vrot.slane %v5651, 1
        %v5653 = vadd.f32 %v5651, %v5652
        %v5654 = vlaneseq
        %v5655 = vshrl.u32 %v5654, 7
        %v5656 = vlaneseq
        %v5657 = vand.u32 %v5656, 127
        %vm5658 = vcmp.eq.s32.totalorder %v5655, 0
        %vm5659 = vcmp.eq.s32.totalorder %v5657, 0
        %vm5660 = vmand %vm5658, %vm5659
        %v5661 = vsel %vm5660, %v5499, 0.0
        %vm5662 = vcmp.eq.s32.totalorder %v5657, 1
        %vm5663 = vmand %vm5658, %vm5662
        %v5664 = vsel %vm5663, %v5568, 0.0
        %v5665 = vadd.f32 %v5661, %v5664
        %vm5666 = vcmp.eq.s32.totalorder %v5657, 2
        %vm5667 = vmand %vm5658, %vm5666
        %v5668 = vsel %vm5667, %v5653, 0.0
        %v5669 = vadd.f32 %v5665, %v5668
        %5670 = vst [vmem:[%s930] sm:$0xff] %v5669
        %v5671 = vsel %vm4441, %v4634, 0.0
        %v5672 = vsel %vm4441, %v4635, 0.0
        %v5673 = vadd.f32 %v5671, %v5672
        %v5674 = vsel %vm4441, %v4636, 0.0
        %v5675 = vadd.f32 %v5673, %v5674
        %v5676 = vsel %vm4441, %v4637, 0.0
        %v5677 = vadd.f32 %v5675, %v5676
        %v5678 = vsel %vm4441, %v4638, 0.0
        %v5679 = vadd.f32 %v5677, %v5678
        %v5680 = vsel %vm4441, %v4639, 0.0
        %v5681 = vadd.f32 %v5679, %v5680
        %v5682 = vsel %vm4441, %v4640, 0.0
        %v5683 = vadd.f32 %v5681, %v5682
        %v5684 = vsel %vm4441, %v4641, 0.0
        %v5685 = vadd.f32 %v5683, %v5684
        %v5686 = vsel %vm4441, %v4642, 0.0
        %v5687 = vadd.f32 %v5685, %v5686
        %v5688 = vsel %vm4441, %v4643, 0.0
        %v5689 = vadd.f32 %v5687, %v5688
        %v5690 = vsel %vm4441, %v4644, 0.0
        %v5691 = vadd.f32 %v5689, %v5690
        %v5692 = vsel %vm4441, %v4645, 0.0
        %v5693 = vadd.f32 %v5691, %v5692
        %v5694 = vsel %vm4441, %v4646, 0.0
        %v5695 = vadd.f32 %v5693, %v5694
        %v5696 = vsel %vm4441, %v4647, 0.0
        %v5697 = vadd.f32 %v5695, %v5696
        %v5698 = vsel %vm4441, %v4648, 0.0
        %v5699 = vadd.f32 %v5697, %v5698
        %v5700 = vsel %vm4441, %v4649, 0.0
        %v5701 = vadd.f32 %v5699, %v5700
        %v5702 = vrot.slane %v5701, 4
        %v5703 = vadd.f32 %v5701, %v5702
        %v5704 = vrot.slane %v5703, 2
        %v5705 = vadd.f32 %v5703, %v5704
        %v5706 = vrot.slane %v5705, 1
        %v5707 = vadd.f32 %v5705, %v5706
        %v5708 = vsel %vm5658, %v5707, 0.0
        %5709 = vst.msk [vmem:[%s934] sm:$0xff] %vm4441, %v5708
        %s5710 = sand.u32 %s523, 1
        %s5711 = scalar_lea.sflag [#allocation4], %s5710
        %s5712 = sand.u32 %s523, 1
        %s5713 = smul.addr %s5712, 128
        %s5714 = scalar_lea.vmem [#allocation10], %s5713
        %s5715 = sand.u32 %s48, 1
        %s5716 = scalar_lea.sflag [#allocation12], %s5715
        %s5717 = sand.u32 %s549, 1
        %s5718 = smul.addr %s5717, 256
        %s5719 = scalar_lea.vmem [#allocation11], %s5718
        %s5720 = smul.u32 16, %s48
        %p5721 = scmp.lt.s32.totalorder %s5720, 31
        %s5722 = scalar_select %p5721, %s5720, 31
        %s5723 = smul.addr %s5722, 8
        %s5724 = scalar_lea.vmem %s24, %s5723
        %s5725 = sand.u32 %s48, 1
        %s5726 = scalar_lea.sflag [#allocation12], %s5725
        %s5727 = sand.u32 %s601, 1
        %s5728 = smul.addr %s5727, 128
        %s5729 = scalar_lea.vmem [#allocation13], %s5728
        %p5730 = scmp.lt.s32.totalorder %s48, 1
        %s5731 = scalar_select %p5730, %s48, 1
        %s5732 = smul.addr %s5731, 8
        %s5733 = scalar_lea.vmem %s26, %s5732
        %p5734 = scmp.lt.s32.totalorder %s48, 1
        %s5735 = scalar_select %p5734, %s48, 1
        %s5736 = smul.addr %s5735, 8
        %s5737 = scalar_lea.vmem %s27, %s5736
        // Predicated region
        $region125: #{ae_type02_forward.1} parent=107 // pred_check
          %p5738 = pneg %p533
        $region126: #{ae_type02_forward.1} parent=107 // pred_check_branch
          %5740 = sbr.rel (%p5738) target = $region128
        $region127: #{ae_type02_forward.1} parent=107 // pred_region
          %s5741 = smul.u32 16, %s48
          %s5743 = ssub.s32 2048, 2048
          %5744 = vsyncadd %s5711, %s5743
          %s5745 = smul.addr %s5741, 128
          %s5746 = scalar_lea.hbm %s22, %s5745
          %s5747 = sshll.u32 %s5714, 4
          %s5748 = int_to_ptr.vmem [resolvable:$true] %s5747
          %5753 = dma.vmem_to_hbm [thread:$0]  %s5748, 2048, %s5746, %s5711, 128, 128, 8
        $region128: #{ae_type02_forward.1} parent=107 // pred_fallthru
          _
        // Predicated region
        $region129: #{ae_type02_forward.1} parent=107 // pred_check
          %p5754 = pneg %p559
        $region130: #{ae_type02_forward.1} parent=107 // pred_check_branch
          %5756 = sbr.rel (%p5754) target = $region132
        $region131: #{ae_type02_forward.1} parent=107 // pred_region
          %s5757 = smul.u32 16, %s48
          %s5759 = ssub.s32 4096, 4096
          %5760 = vsyncadd %s5716, %s5759
          %s5761 = smul.addr %s5757, 2
          %s5762 = smul.addr %s5761, 128
          %s5763 = scalar_lea.hbm %s23, %s5762
          %s5764 = sshll.u32 %s5719, 4
          %s5765 = int_to_ptr.vmem [resolvable:$true] %s5764
          %5770 = dma.vmem_to_hbm [thread:$0]  %s5765, 4096, %s5763, %s5716, 256, 256, 16
        $region132: #{ae_type02_forward.1} parent=107 // pred_fallthru
          _
        // Predicated region
        $region133: #{ae_type02_forward.1} parent=107 // pred_check
          %p5771 = pneg %p585
        $region134: #{ae_type02_forward.1} parent=107 // pred_check_branch
          %5773 = sbr.rel (%p5771) target = $region136
        $region135: #{ae_type02_forward.1} parent=107 // pred_region
          %s5774 = smul.u32 16, %s48
        $region136: #{ae_type02_forward.1} parent=107 // pred_fallthru
          _
        // Predicated region
        $region137: #{ae_type02_forward.1} parent=107 // pred_check
          %p5775 = pneg %p611
        $region138: #{ae_type02_forward.1} parent=107 // pred_check_branch
          %5777 = sbr.rel (%p5775) target = $region140
        $region139: #{ae_type02_forward.1} parent=107 // pred_region
          %s5778 = smul.u32 16, %s48
          %s5780 = ssub.s32 2048, 2048
          %5781 = vsyncadd %s5726, %s5780
          %s5782 = smul.addr %s5778, 128
          %s5783 = scalar_lea.hbm %s25, %s5782
          %s5784 = sshll.u32 %s5729, 4
          %s5785 = int_to_ptr.vmem [resolvable:$true] %s5784
          %5790 = dma.vmem_to_hbm [thread:$0]  %s5785, 2048, %s5783, %s5726, 128, 128, 8
        $region140: #{ae_type02_forward.1} parent=107 // pred_fallthru
          _
        // Predicated region
        $region141: #{ae_type02_forward.1} parent=107 // pred_check
          %p5791 = pneg %p637
        $region142: #{ae_type02_forward.1} parent=107 // pred_check_branch
          %5793 = sbr.rel (%p5791) target = $region144
        $region143: #{ae_type02_forward.1} parent=107 // pred_region
          _
        $region144: #{ae_type02_forward.1} parent=107 // pred_fallthru
          _
        // Predicated region
        $region145: #{ae_type02_forward.1} parent=107 // pred_check
          %p5794 = pneg %p663
        $region146: #{ae_type02_forward.1} parent=107 // pred_check_branch
          %5796 = sbr.rel (%p5794) target = $region148
        $region147: #{ae_type02_forward.1} parent=107 // pred_region
          _
        $region148: #{ae_type02_forward.1} parent=107 // pred_fallthru
          _
      $region108: #{ae_type02_forward.1} parent=5 // pred_fallthru
        _
      %p5797 = scmp.le.s32.totalorder 2, %s43
      // Predicated region
      $region149: #{ae_type02_forward.1} parent=5 // pred_check
        %p5798 = pneg %p5797
      $region150: #{ae_type02_forward.1} parent=5 // pred_check_branch
        %5800 = sbr.rel (%p5798) target = $region152
      $region151: #{ae_type02_forward.1} parent=5 // pred_region
        %s5801 = ssub.s32 %s43, 2
        // Predicated region
        $region153: #{ae_type02_forward.1} parent=151 // pred_check
          %p5802 = pneg %p539
        $region154: #{ae_type02_forward.1} parent=151 // pred_check_branch
          %5804 = sbr.rel (%p5802) target = $region156
        $region155: #{ae_type02_forward.1} parent=151 // pred_region
          %s5805 = sand.u32 %s524, 1
          %s5806 = scalar_lea.sflag [#allocation4], %s5805
          %s5807 = sand.u32 %s524, 1
          %s5808 = smul.addr %s5807, 128
          %s5809 = scalar_lea.vmem [#allocation10], %s5808
          %5810 = dma.done %s5806, 2048
        $region156: #{ae_type02_forward.1} parent=151 // pred_fallthru
          _
        // Predicated region
        $region157: #{ae_type02_forward.1} parent=151 // pred_check
          %p5811 = pneg %p565
        $region158: #{ae_type02_forward.1} parent=151 // pred_check_branch
          %5813 = sbr.rel (%p5811) target = $region160
        $region159: #{ae_type02_forward.1} parent=151 // pred_region
          %s5814 = sand.u32 %s49, 1
          %s5815 = scalar_lea.sflag [#allocation12], %s5814
          %s5816 = sand.u32 %s550, 1
          %s5817 = smul.addr %s5816, 256
          %s5818 = scalar_lea.vmem [#allocation11], %s5817
          %5819 = dma.done %s5815, 4096
        $region160: #{ae_type02_forward.1} parent=151 // pred_fallthru
          _
        // Predicated region
        $region161: #{ae_type02_forward.1} parent=151 // pred_check
          %p5820 = pneg %p591
        $region162: #{ae_type02_forward.1} parent=151 // pred_check_branch
          %5822 = sbr.rel (%p5820) target = $region164
        $region163: #{ae_type02_forward.1} parent=151 // pred_region
          %s5823 = smul.u32 16, %s49
          %p5824 = scmp.lt.s32.totalorder %s5823, 31
          %s5825 = scalar_select %p5824, %s5823, 31
          %s5826 = smul.addr %s5825, 8
          %s5827 = scalar_lea.vmem %s24, %s5826
        $region164: #{ae_type02_forward.1} parent=151 // pred_fallthru
          _
        // Predicated region
        $region165: #{ae_type02_forward.1} parent=151 // pred_check
          %p5828 = pneg %p617
        $region166: #{ae_type02_forward.1} parent=151 // pred_check_branch
          %5830 = sbr.rel (%p5828) target = $region168
        $region167: #{ae_type02_forward.1} parent=151 // pred_region
          %s5831 = sand.u32 %s49, 1
          %s5832 = scalar_lea.sflag [#allocation12], %s5831
          %s5833 = sand.u32 %s602, 1
          %s5834 = smul.addr %s5833, 128
          %s5835 = scalar_lea.vmem [#allocation13], %s5834
          %5836 = dma.done %s5832, 2048
        $region168: #{ae_type02_forward.1} parent=151 // pred_fallthru
          _
        // Predicated region
        $region169: #{ae_type02_forward.1} parent=151 // pred_check
          %p5837 = pneg %p643
        $region170: #{ae_type02_forward.1} parent=151 // pred_check_branch
          %5839 = sbr.rel (%p5837) target = $region172
        $region171: #{ae_type02_forward.1} parent=151 // pred_region
          %p5840 = scmp.lt.s32.totalorder %s49, 1
          %s5841 = scalar_select %p5840, %s49, 1
          %s5842 = smul.addr %s5841, 8
          %s5843 = scalar_lea.vmem %s26, %s5842
        $region172: #{ae_type02_forward.1} parent=151 // pred_fallthru
          _
        // Predicated region
        $region173: #{ae_type02_forward.1} parent=151 // pred_check
          %p5844 = pneg %p669
        $region174: #{ae_type02_forward.1} parent=151 // pred_check_branch
          %5846 = sbr.rel (%p5844) target = $region176
        $region175: #{ae_type02_forward.1} parent=151 // pred_region
          %p5847 = scmp.lt.s32.totalorder %s49, 1
          %s5848 = scalar_select %p5847, %s49, 1
          %s5849 = smul.addr %s5848, 8
          %s5850 = scalar_lea.vmem %s27, %s5849
        $region176: #{ae_type02_forward.1} parent=151 // pred_fallthru
          _
      $region152: #{ae_type02_forward.1} parent=5 // pred_fallthru
        _
    $region6: #{ae_type02_forward.1} parent=1 // loop_footer
      %s47 = sadd.s32 1, %s43
    $region7: #{ae_type02_forward.1} parent=1 // loop_footer_branch
      %42 = sbr.rel target = $region3
    $region8: #{ae_type02_forward.1} parent=1 // loop_exit
      _
    %5851 = vsyncpa [#allocation3], 1
    %s5852 = scalar_lea.sflag [#allocation3], 1
    %5853 = vsyncpa %s5852, 1
    %5854 = vsyncpa [#allocation6], 1
    %5855 = vsyncpa [#allocation9], 1
    %5856 = vsyncpa [#allocation4], 1
    %s5857 = scalar_lea.sflag [#allocation4], 1
    %5858 = vsyncpa %s5857, 1
    %5859 = vsyncpa [#allocation12], 1
    %s5860 = scalar_lea.sflag [#allocation12], 1
    %5861 = vsyncpa %s5860, 1

</llo_original>
